<compile_context>
chip_gen: v7x
topology: tpu7x:2x2x1
jax: 0.10.0
libtpu: 0.0.40
codegen_flags: <defaults>
</compile_context>

<pallas_src>
import functools

import jax
import jax.numpy as jnp
from jax import lax
from jax.experimental import pallas as pl
from jax.experimental.pallas import tpu as pltpu


def _round_up(x, m):
    return ((x + m - 1) // m) * m


def _sigmoid_via_tanh(x):
    # sigmoid(x) = 0.5 * (1 + tanh(x / 2)); single EUP tanh + cheap VPU ops,
    # shorter dependent-op chain than exp + reciprocal on the serial path.
    return 0.5 * jnp.tanh(0.5 * x) + 0.5


# ---------------------------------------------------------------------------
# Fused kernel: all LSTM layers + final FC in one gridless pallas_call.
# Gate order matches PyTorch nn.LSTM: i, f, g, o.
# ---------------------------------------------------------------------------
def make_fused_lstm_kernel(num_layers, seq_len, batch_padded):
    S, BP = seq_len, batch_padded

    def kernel(*refs):
        x_ref = refs[0]                                 # (S*BP, D), time-major rows
        wrefs = refs[1:1 + 3 * num_layers]              # (w_ih_t, w_hh_t, bias) / layer
        wfc_ref, bfc_ref, out_ref, pre_ref, hseq_ref = refs[1 + 3 * num_layers:]

        HP = hseq_ref.shape[1]                          # padded hidden (mult. of 128)

        def recurrence(whh_ref, store_seq):
            # Hoist W_hh out of the time loop: one logical load per layer.
            whh = whh_ref[...]

            def step(t, carry):
                h, c = carry
                row0 = pl.multiple_of(t * BP, BP)
                gates = pre_ref[pl.ds(row0, BP), :] + jnp.dot(
                    h, whh, preferred_element_type=jnp.float32)
                # 128-lane-aligned gate slices (HP is a multiple of 128).
                i_g = _sigmoid_via_tanh(gates[:, 0 * HP:1 * HP])
                f_g = _sigmoid_via_tanh(gates[:, 1 * HP:2 * HP])
                g_g = jnp.tanh(gates[:, 2 * HP:3 * HP])
                o_g = _sigmoid_via_tanh(gates[:, 3 * HP:4 * HP])
                c_new = f_g * c + i_g * g_g
                h_new = o_g * jnp.tanh(c_new)
                if store_seq:
                    # s-major contiguous rows, full-tile (8,128) store.
                    hseq_ref[pl.ds(row0, BP), :] = h_new
                return h_new, c_new

            init = (jnp.zeros((BP, HP), jnp.float32),
                    jnp.zeros((BP, HP), jnp.float32))
            return lax.fori_loop(0, S, step, init, unroll=True)

        # ---- Layer 0: hoisted input projection, one (S*BP, D) @ (D, 4*HP) matmul.
        wih0_ref, whh0_ref, b0_ref = wrefs[0], wrefs[1], wrefs[2]
        pre_ref[...] = (
            jnp.dot(x_ref[...], wih0_ref[...], preferred_element_type=jnp.float32)
            + b0_ref[...])
        h, _ = recurrence(whh0_ref, store_seq=(num_layers > 1))

        # ---- Layers 1..L-1: input is the previous layer's hidden sequence kept
        # in VMEM scratch; its projection is hoisted the same way.
        for l in range(1, num_layers):
            wih_ref = wrefs[3 * l]
            whh_ref = wrefs[3 * l + 1]
            b_ref = wrefs[3 * l + 2]
            pre_ref[...] = (
                jnp.dot(hseq_ref[...], wih_ref[...],
                        preferred_element_type=jnp.float32)
                + b_ref[...])
            h, _ = recurrence(whh_ref, store_seq=(l < num_layers - 1))

        # ---- Final FC on the last timestep's hidden state (lane-dense store).
        out_ref[...] = (
            jnp.dot(h, wfc_ref[...], preferred_element_type=jnp.float32)
            + bfc_ref[...])

    return kernel


# ---------------------------------------------------------------------------
# Wrapper: layout prep (time-major + batch pad) outside the kernel, specs,
# per-generation VMEM limit, and the single pallas_call.
# ---------------------------------------------------------------------------
def _derive_vmem_limit_bytes():
    mib = 1024 * 1024
    try:
        cap = int(getattr(pltpu.get_tpu_info(), "vmem_capacity_bytes", 0))
    except Exception:
        cap = 0
    if cap <= 0:
        return 32 * mib                       # safe fallback
    # Leave 16 MiB headroom; v5e/v6e (128 MiB) -> 100 MiB, v7x (64 MiB) -> 48 MiB.
    return int(min(max(cap - 16 * mib, 16 * mib), 100 * mib))


@functools.partial(jax.jit, static_argnames=("output_dim",))
def simple_lstm_forward(x, params, *, output_dim):
    """x: (B, S, D) batch-first float32. params: output of pack_kernel_params."""
    B, S, D = x.shape
    layers = params["layers"]
    wfc_t = params["wfc_t"]
    bfc = params["bfc"]
    num_layers = len(layers)
    HP = wfc_t.shape[0]
    OP = wfc_t.shape[1]
    G = 4 * HP

    # Time-major + batch pad to a multiple of 8 sublanes (cheap XLA ops).
    BP = _round_up(max(B, 8), 8)
    x_tm = jnp.transpose(x, (1, 0, 2))                   # (S, B, D)
    if BP != B:
        x_tm = jnp.pad(x_tm, ((0, 0), (0, BP - B), (0, 0)))
    x2 = x_tm.reshape(S * BP, D)                         # row = t*BP + b

    flat_args = [x2]
    in_specs = [pl.BlockSpec((S * BP, D), lambda: (0, 0))]
    for (wih_t, whh_t, bias) in layers:
        flat_args += [wih_t, whh_t, bias]
        in_specs += [
            pl.BlockSpec(wih_t.shape, lambda: (0, 0)),
            pl.BlockSpec(whh_t.shape, lambda: (0, 0)),
            pl.BlockSpec(bias.shape, lambda: (0, 0)),
        ]
    flat_args += [wfc_t, bfc]
    in_specs += [pl.BlockSpec(wfc_t.shape, lambda: (0, 0)),
                 pl.BlockSpec(bfc.shape, lambda: (0, 0))]

    out_p = pl.pallas_call(
        make_fused_lstm_kernel(num_layers, S, BP),
        out_shape=jax.ShapeDtypeStruct((BP, OP), jnp.float32),
        in_specs=in_specs,
        out_specs=pl.BlockSpec((BP, OP), lambda: (0, 0)),
        scratch_shapes=[
            pltpu.VMEM((S * BP, G), jnp.float32),   # pre-gate buffer (reused per layer)
            pltpu.VMEM((S * BP, HP), jnp.float32),  # inter-layer hidden sequence
        ],
        compiler_params=pltpu.CompilerParams(
            vmem_limit_bytes=_derive_vmem_limit_bytes()),
    )(*flat_args)

    return out_p[:B, :output_dim]


# ---------------------------------------------------------------------------
# Parameters: PyTorch-style raw init + packing into the padded kernel layout.
# ---------------------------------------------------------------------------
def init_params(key, input_dim, hidden_dim, num_layers, output_dim):
    """Raw PyTorch-layout params, U(-1/sqrt(H), 1/sqrt(H)) like nn.LSTM/nn.Linear."""
    bound = 1.0 / (hidden_dim ** 0.5)
    raw = {"layers": []}
    for layer in range(num_layers):
        in_dim = input_dim if layer == 0 else hidden_dim
        key, k1, k2, k3, k4 = jax.random.split(key, 5)
        raw["layers"].append({
            "w_ih": jax.random.uniform(k1, (4 * hidden_dim, in_dim),
                                       jnp.float32, -bound, bound),
            "w_hh": jax.random.uniform(k2, (4 * hidden_dim, hidden_dim),
                                       jnp.float32, -bound, bound),
            "b_ih": jax.random.uniform(k3, (4 * hidden_dim,),
                                       jnp.float32, -bound, bound),
            "b_hh": jax.random.uniform(k4, (4 * hidden_dim,),
                                       jnp.float32, -bound, bound),
        })
    key, k5, k6 = jax.random.split(key, 3)
    raw["w_fc"] = jax.random.uniform(k5, (output_dim, hidden_dim),
                                     jnp.float32, -bound, bound)
    raw["b_fc"] = jax.random.uniform(k6, (output_dim,),
                                     jnp.float32, -bound, bound)
    return raw


def pack_kernel_params(raw, input_dim, hidden_dim, output_dim,
                       weight_dtype=jnp.float32):
    """Transpose + pad PyTorch-layout params into the kernel layout.

    Each gate gets a 128-lane-aligned column block of width HP = round_up(H, 128);
    the FC output is padded to OP = round_up(O, 128) lanes.

    Padded-lane invariant (relied on by the kernel): every padded weight
    row/column and bias lane is EXACTLY ZERO and (h0, c0) are zero, so the
    padded lanes of the g-gate are tanh(0) = 0 and the padded lanes of c and h
    stay exactly zero for all timesteps.  Do NOT initialize (h0, c0) nonzero or
    write nonzero values into padded bias lanes without revisiting this.

    weight_dtype: keep float32 here (tiny model, exact parity with reference).
    # TODO(synk): pass jnp.bfloat16 on v7x before scaling H (halves VMEM/DMA
    # bytes; keep f32 h/c and preferred_element_type=jnp.float32).
    """
    H = hidden_dim
    HP = _round_up(H, 128)
    OP = _round_up(output_dim, 128)
    layers = []
    for l, lp in enumerate(raw["layers"]):
        in_dim = input_dim if l == 0 else H
        in_dim_p = input_dim if l == 0 else HP
        wih_t = jnp.zeros((in_dim_p, 4 * HP), jnp.float32)
        whh_t = jnp.zeros((HP, 4 * HP), jnp.float32)
        bias = jnp.zeros((1, 4 * HP), jnp.float32)
        for g in range(4):
            wih_t = wih_t.at[:in_dim, g * HP:g * HP + H].set(
                lp["w_ih"][g * H:(g + 1) * H, :].T)
            whh_t = whh_t.at[:H, g * HP:g * HP + H].set(
                lp["w_hh"][g * H:(g + 1) * H, :].T)
            bias = bias.at[0, g * HP:g * HP + H].set(
                lp["b_ih"][g * H:(g + 1) * H] + lp["b_hh"][g * H:(g + 1) * H])
        layers.append((wih_t.astype(weight_dtype),
                       whh_t.astype(weight_dtype),
                       bias))
    wfc_t = jnp.zeros((HP, OP), jnp.float32).at[:H, :output_dim].set(raw["w_fc"].T)
    bfc = jnp.zeros((1, OP), jnp.float32).at[0, :output_dim].set(raw["b_fc"])
    return {"layers": layers, "wfc_t": wfc_t.astype(weight_dtype), "bfc": bfc}


# ---------------------------------------------------------------------------
# Pure-JAX reference (PyTorch semantics) for the correctness check.
# ---------------------------------------------------------------------------
def reference_forward(x, raw):
    B, S, _ = x.shape
    layer_in = x
    for lp in raw["layers"]:
        H = lp["w_hh"].shape[1]
        h = jnp.zeros((B, H), jnp.float32)
        c = jnp.zeros((B, H), jnp.float32)
        outs = []
        for t in range(S):
            gates = (layer_in[:, t, :] @ lp["w_ih"].T + h @ lp["w_hh"].T
                     + lp["b_ih"] + lp["b_hh"])
            i = jax.nn.sigmoid(gates[:, 0 * H:1 * H])
            f = jax.nn.sigmoid(gates[:, 1 * H:2 * H])
            g = jnp.tanh(gates[:, 2 * H:3 * H])
            o = jax.nn.sigmoid(gates[:, 3 * H:4 * H])
            c = f * c + i * g
            h = o * jnp.tanh(c)
            outs.append(h)
        layer_in = jnp.stack(outs, axis=1)
    return layer_in[:, -1, :] @ raw["w_fc"].T + raw["b_fc"]


if __name__ == "__main__":
    # Small shapes: batch=2, seq=8, input_dim=4, hidden=32, layers=2, out=1
    B, S, D, H, L, O = 2, 8, 4, 32, 2, 1

    key = jax.random.PRNGKey(0)
    key, kx = jax.random.split(key)
    x = jax.random.normal(kx, (B, S, D), jnp.float32)

    raw = init_params(key, D, H, L, O)
    params = pack_kernel_params(raw, D, H, O)

    y = simple_lstm_forward(x, params, output_dim=O)
    y = jax.block_until_ready(y)

    y_ref = reference_forward(x, raw)
    assert y.shape == (B, O)
    assert jnp.allclose(y, y_ref, atol=1e-4, rtol=1e-4), (
        "mismatch vs reference, max abs diff = "
        + str(float(jnp.max(jnp.abs(y - y_ref)))))
    print("KERNEL_OK")
</pallas_src>

<mosaic_0001>
module attributes {stable_mosaic.version = 11 : i64} {
  func.func @kernel(%arg0: memref<64x4xf32, #tpu.memory_space<vmem>>, %arg1: memref<4x512xf32, #tpu.memory_space<vmem>>, %arg2: memref<128x512xf32, #tpu.memory_space<vmem>>, %arg3: memref<1x512xf32, #tpu.memory_space<vmem>>, %arg4: memref<128x512xf32, #tpu.memory_space<vmem>>, %arg5: memref<128x512xf32, #tpu.memory_space<vmem>>, %arg6: memref<1x512xf32, #tpu.memory_space<vmem>>, %arg7: memref<128x128xf32, #tpu.memory_space<vmem>>, %arg8: memref<1x128xf32, #tpu.memory_space<vmem>>, %arg9: memref<8x128xf32, #tpu.memory_space<vmem>>, %arg10: memref<64x512xf32, #tpu.memory_space<vmem>>, %arg11: memref<64x128xf32, #tpu.memory_space<vmem>>) attributes {dimension_semantics = [], scalar_prefetch = 0 : i64, scratch_operands = 2 : i64, tpu.core_type = #tpu.core_type<tc>} {
    %c0 = arith.constant 0 : index
    %c0_0 = arith.constant 0 : index
    %0 = vector.load %arg0[%c0, %c0_0] : memref<64x4xf32, #tpu.memory_space<vmem>>, vector<64x4xf32>
    %c0_1 = arith.constant 0 : index
    %c0_2 = arith.constant 0 : index
    %1 = vector.load %arg1[%c0_1, %c0_2] : memref<4x512xf32, #tpu.memory_space<vmem>>, vector<4x512xf32>
    %cst = arith.constant dense<0.000000e+00> : vector<64x512xf32>
    %2 = tpu.matmul %0, %1, %cst {dimension_numbers = #tpu.dot_dimension_numbers<[1], [0], [0], [1], [0, 0, 1, 1], [], []>} : vector<64x4xf32>, vector<4x512xf32>, vector<64x512xf32> -> vector<64x512xf32>
    %c0_3 = arith.constant 0 : index
    %c0_4 = arith.constant 0 : index
    %3 = vector.load %arg3[%c0_3, %c0_4] : memref<1x512xf32, #tpu.memory_space<vmem>>, vector<1x512xf32>
    %4 = vector.broadcast %3 : vector<1x512xf32> to vector<64x512xf32>
    %5 = arith.addf %2, %4 : vector<64x512xf32>
    %c0_5 = arith.constant 0 : index
    %c0_6 = arith.constant 0 : index
    %6 = vector.load %arg10[%c0_5, %c0_6] : memref<64x512xf32, #tpu.memory_space<vmem>>, vector<64x512xf32>
    tpu.vector_store %arg10[%c0_5, %c0_6], %5 {strides = array<i32>} : memref<64x512xf32, #tpu.memory_space<vmem>>, vector<64x512xf32>,
    %c0_7 = arith.constant 0 : index
    %c0_8 = arith.constant 0 : index
    %7 = vector.load %arg2[%c0_7, %c0_8] : memref<128x512xf32, #tpu.memory_space<vmem>>, vector<128x512xf32>
    %cst_9 = arith.constant 0.000000e+00 : f32
    %8 = vector.broadcast %cst_9 : f32 to vector<8x128xf32>
    %cst_10 = arith.constant 0.000000e+00 : f32
    %9 = vector.broadcast %cst_10 : f32 to vector<8x128xf32>
    %c0_i32 = arith.constant 0 : i32
    %c8_i32 = arith.constant 8 : i32
    %10 = arith.muli %c0_i32, %c8_i32 : i32
    %11 = tpu.assume_multiple %10, 8 : i32
    %12 = arith.index_cast %11 : i32 to index
    %c0_11 = arith.constant 0 : index
    %13 = vector.load %arg10[%12, %c0_11] : memref<64x512xf32, #tpu.memory_space<vmem>>, vector<8x512xf32>
    %cst_12 = arith.constant dense<0.000000e+00> : vector<8x512xf32>
    %14 = tpu.matmul %8, %7, %cst_12 {dimension_numbers = #tpu.dot_dimension_numbers<[1], [0], [0], [1], [0, 0, 1, 1], [], []>} : vector<8x128xf32>, vector<128x512xf32>, vector<8x512xf32> -> vector<8x512xf32>
    %15 = arith.addf %13, %14 : vector<8x512xf32>
    %16 = vector.extract_strided_slice %15 {offsets = [0, 0], sizes = [8, 128], strides = [1, 1]} : vector<8x512xf32> to vector<8x128xf32>
    %cst_13 = arith.constant 5.000000e-01 : f32
    %17 = vector.broadcast %cst_13 : f32 to vector<8x128xf32>
    %18 = arith.mulf %17, %16 : vector<8x128xf32>
    %19 = math.tanh %18 : vector<8x128xf32>
    %cst_14 = arith.constant 5.000000e-01 : f32
    %20 = vector.broadcast %cst_14 : f32 to vector<8x128xf32>
    %21 = arith.mulf %20, %19 : vector<8x128xf32>
    %cst_15 = arith.constant 5.000000e-01 : f32
    %22 = vector.broadcast %cst_15 : f32 to vector<8x128xf32>
    %23 = arith.addf %21, %22 : vector<8x128xf32>
    %24 = vector.extract_strided_slice %15 {offsets = [0, 128], sizes = [8, 128], strides = [1, 1]} : vector<8x512xf32> to vector<8x128xf32>
    %cst_16 = arith.constant 5.000000e-01 : f32
    %25 = vector.broadcast %cst_16 : f32 to vector<8x128xf32>
    %26 = arith.mulf %25, %24 : vector<8x128xf32>
    %27 = math.tanh %26 : vector<8x128xf32>
    %cst_17 = arith.constant 5.000000e-01 : f32
    %28 = vector.broadcast %cst_17 : f32 to vector<8x128xf32>
    %29 = arith.mulf %28, %27 : vector<8x128xf32>
    %cst_18 = arith.constant 5.000000e-01 : f32
    %30 = vector.broadcast %cst_18 : f32 to vector<8x128xf32>
    %31 = arith.addf %29, %30 : vector<8x128xf32>
    %32 = vector.extract_strided_slice %15 {offsets = [0, 256], sizes = [8, 128], strides = [1, 1]} : vector<8x512xf32> to vector<8x128xf32>
    %33 = math.tanh %32 : vector<8x128xf32>
    %34 = vector.extract_strided_slice %15 {offsets = [0, 384], sizes = [8, 128], strides = [1, 1]} : vector<8x512xf32> to vector<8x128xf32>
    %cst_19 = arith.constant 5.000000e-01 : f32
    %35 = vector.broadcast %cst_19 : f32 to vector<8x128xf32>
    %36 = arith.mulf %35, %34 : vector<8x128xf32>
    %37 = math.tanh %36 : vector<8x128xf32>
    %cst_20 = arith.constant 5.000000e-01 : f32
    %38 = vector.broadcast %cst_20 : f32 to vector<8x128xf32>
    %39 = arith.mulf %38, %37 : vector<8x128xf32>
    %cst_21 = arith.constant 5.000000e-01 : f32
    %40 = vector.broadcast %cst_21 : f32 to vector<8x128xf32>
    %41 = arith.addf %39, %40 : vector<8x128xf32>
    %42 = arith.mulf %31, %9 : vector<8x128xf32>
    %43 = arith.mulf %23, %33 : vector<8x128xf32>
    %44 = arith.addf %42, %43 : vector<8x128xf32>
    %45 = math.tanh %44 : vector<8x128xf32>
    %46 = arith.mulf %41, %45 : vector<8x128xf32>
    %47 = arith.index_cast %11 : i32 to index
    %c0_22 = arith.constant 0 : index
    %48 = vector.load %arg11[%47, %c0_22] : memref<64x128xf32, #tpu.memory_space<vmem>>, vector<8x128xf32>
    tpu.vector_store %arg11[%47, %c0_22], %46 {strides = array<i32>} : memref<64x128xf32, #tpu.memory_space<vmem>>, vector<8x128xf32>,
    %c1_i32 = arith.constant 1 : i32
    %c8_i32_23 = arith.constant 8 : i32
    %49 = arith.muli %c1_i32, %c8_i32_23 : i32
    %50 = tpu.assume_multiple %49, 8 : i32
    %51 = arith.index_cast %50 : i32 to index
    %c0_24 = arith.constant 0 : index
    %52 = vector.load %arg10[%51, %c0_24] : memref<64x512xf32, #tpu.memory_space<vmem>>, vector<8x512xf32>
    %cst_25 = arith.constant dense<0.000000e+00> : vector<8x512xf32>
    %53 = tpu.matmul %46, %7, %cst_25 {dimension_numbers = #tpu.dot_dimension_numbers<[1], [0], [0], [1], [0, 0, 1, 1], [], []>} : vector<8x128xf32>, vector<128x512xf32>, vector<8x512xf32> -> vector<8x512xf32>
    %54 = arith.addf %52, %53 : vector<8x512xf32>
    %55 = vector.extract_strided_slice %54 {offsets = [0, 0], sizes = [8, 128], strides = [1, 1]} : vector<8x512xf32> to vector<8x128xf32>
    %cst_26 = arith.constant 5.000000e-01 : f32
    %56 = vector.broadcast %cst_26 : f32 to vector<8x128xf32>
    %57 = arith.mulf %56, %55 : vector<8x128xf32>
    %58 = math.tanh %57 : vector<8x128xf32>
    %cst_27 = arith.constant 5.000000e-01 : f32
    %59 = vector.broadcast %cst_27 : f32 to vector<8x128xf32>
    %60 = arith.mulf %59, %58 : vector<8x128xf32>
    %cst_28 = arith.constant 5.000000e-01 : f32
    %61 = vector.broadcast %cst_28 : f32 to vector<8x128xf32>
    %62 = arith.addf %60, %61 : vector<8x128xf32>
    %63 = vector.extract_strided_slice %54 {offsets = [0, 128], sizes = [8, 128], strides = [1, 1]} : vector<8x512xf32> to vector<8x128xf32>
    %cst_29 = arith.constant 5.000000e-01 : f32
    %64 = vector.broadcast %cst_29 : f32 to vector<8x128xf32>
    %65 = arith.mulf %64, %63 : vector<8x128xf32>
    %66 = math.tanh %65 : vector<8x128xf32>
    %cst_30 = arith.constant 5.000000e-01 : f32
    %67 = vector.broadcast %cst_30 : f32 to vector<8x128xf32>
    %68 = arith.mulf %67, %66 : vector<8x128xf32>
    %cst_31 = arith.constant 5.000000e-01 : f32
    %69 = vector.broadcast %cst_31 : f32 to vector<8x128xf32>
    %70 = arith.addf %68, %69 : vector<8x128xf32>
    %71 = vector.extract_strided_slice %54 {offsets = [0, 256], sizes = [8, 128], strides = [1, 1]} : vector<8x512xf32> to vector<8x128xf32>
    %72 = math.tanh %71 : vector<8x128xf32>
    %73 = vector.extract_strided_slice %54 {offsets = [0, 384], sizes = [8, 128], strides = [1, 1]} : vector<8x512xf32> to vector<8x128xf32>
    %cst_32 = arith.constant 5.000000e-01 : f32
    %74 = vector.broadcast %cst_32 : f32 to vector<8x128xf32>
    %75 = arith.mulf %74, %73 : vector<8x128xf32>
    %76 = math.tanh %75 : vector<8x128xf32>
    %cst_33 = arith.constant 5.000000e-01 : f32
    %77 = vector.broadcast %cst_33 : f32 to vector<8x128xf32>
    %78 = arith.mulf %77, %76 : vector<8x128xf32>
    %cst_34 = arith.constant 5.000000e-01 : f32
    %79 = vector.broadcast %cst_34 : f32 to vector<8x128xf32>
    %80 = arith.addf %78, %79 : vector<8x128xf32>
    %81 = arith.mulf %70, %44 : vector<8x128xf32>
    %82 = arith.mulf %62, %72 : vector<8x128xf32>
    %83 = arith.addf %81, %82 : vector<8x128xf32>
    %84 = math.tanh %83 : vector<8x128xf32>
    %85 = arith.mulf %80, %84 : vector<8x128xf32>
    %86 = arith.index_cast %50 : i32 to index
    %c0_35 = arith.constant 0 : index
    %87 = vector.load %arg11[%86, %c0_35] : memref<64x128xf32, #tpu.memory_space<vmem>>, vector<8x128xf32>
    tpu.vector_store %arg11[%86, %c0_35], %85 {strides = array<i32>} : memref<64x128xf32, #tpu.memory_space<vmem>>, vector<8x128xf32>,
    %c2_i32 = arith.constant 2 : i32
    %c8_i32_36 = arith.constant 8 : i32
    %88 = arith.muli %c2_i32, %c8_i32_36 : i32
    %89 = tpu.assume_multiple %88, 8 : i32
    %90 = arith.index_cast %89 : i32 to index
    %c0_37 = arith.constant 0 : index
    %91 = vector.load %arg10[%90, %c0_37] : memref<64x512xf32, #tpu.memory_space<vmem>>, vector<8x512xf32>
    %cst_38 = arith.constant dense<0.000000e+00> : vector<8x512xf32>
    %92 = tpu.matmul %85, %7, %cst_38 {dimension_numbers = #tpu.dot_dimension_numbers<[1], [0], [0], [1], [0, 0, 1, 1], [], []>} : vector<8x128xf32>, vector<128x512xf32>, vector<8x512xf32> -> vector<8x512xf32>
    %93 = arith.addf %91, %92 : vector<8x512xf32>
    %94 = vector.extract_strided_slice %93 {offsets = [0, 0], sizes = [8, 128], strides = [1, 1]} : vector<8x512xf32> to vector<8x128xf32>
    %cst_39 = arith.constant 5.000000e-01 : f32
    %95 = vector.broadcast %cst_39 : f32 to vector<8x128xf32>
    %96 = arith.mulf %95, %94 : vector<8x128xf32>
    %97 = math.tanh %96 : vector<8x128xf32>
    %cst_40 = arith.constant 5.000000e-01 : f32
    %98 = vector.broadcast %cst_40 : f32 to vector<8x128xf32>
    %99 = arith.mulf %98, %97 : vector<8x128xf32>
    %cst_41 = arith.constant 5.000000e-01 : f32
    %100 = vector.broadcast %cst_41 : f32 to vector<8x128xf32>
    %101 = arith.addf %99, %100 : vector<8x128xf32>
    %102 = vector.extract_strided_slice %93 {offsets = [0, 128], sizes = [8, 128], strides = [1, 1]} : vector<8x512xf32> to vector<8x128xf32>
    %cst_42 = arith.constant 5.000000e-01 : f32
    %103 = vector.broadcast %cst_42 : f32 to vector<8x128xf32>
    %104 = arith.mulf %103, %102 : vector<8x128xf32>
    %105 = math.tanh %104 : vector<8x128xf32>
    %cst_43 = arith.constant 5.000000e-01 : f32
    %106 = vector.broadcast %cst_43 : f32 to vector<8x128xf32>
    %107 = arith.mulf %106, %105 : vector<8x128xf32>
    %cst_44 = arith.constant 5.000000e-01 : f32
    %108 = vector.broadcast %cst_44 : f32 to vector<8x128xf32>
    %109 = arith.addf %107, %108 : vector<8x128xf32>
    %110 = vector.extract_strided_slice %93 {offsets = [0, 256], sizes = [8, 128], strides = [1, 1]} : vector<8x512xf32> to vector<8x128xf32>
    %111 = math.tanh %110 : vector<8x128xf32>
    %112 = vector.extract_strided_slice %93 {offsets = [0, 384], sizes = [8, 128], strides = [1, 1]} : vector<8x512xf32> to vector<8x128xf32>
    %cst_45 = arith.constant 5.000000e-01 : f32
    %113 = vector.broadcast %cst_45 : f32 to vector<8x128xf32>
    %114 = arith.mulf %113, %112 : vector<8x128xf32>
    %115 = math.tanh %114 : vector<8x128xf32>
    %cst_46 = arith.constant 5.000000e-01 : f32
    %116 = vector.broadcast %cst_46 : f32 to vector<8x128xf32>
    %117 = arith.mulf %116, %115 : vector<8x128xf32>
    %cst_47 = arith.constant 5.000000e-01 : f32
    %118 = vector.broadcast %cst_47 : f32 to vector<8x128xf32>
    %119 = arith.addf %117, %118 : vector<8x128xf32>
    %120 = arith.mulf %109, %83 : vector<8x128xf32>
    %121 = arith.mulf %101, %111 : vector<8x128xf32>
    %122 = arith.addf %120, %121 : vector<8x128xf32>
    %123 = math.tanh %122 : vector<8x128xf32>
    %124 = arith.mulf %119, %123 : vector<8x128xf32>
    %125 = arith.index_cast %89 : i32 to index
    %c0_48 = arith.constant 0 : index
    %126 = vector.load %arg11[%125, %c0_48] : memref<64x128xf32, #tpu.memory_space<vmem>>, vector<8x128xf32>
    tpu.vector_store %arg11[%125, %c0_48], %124 {strides = array<i32>} : memref<64x128xf32, #tpu.memory_space<vmem>>, vector<8x128xf32>,
    %c3_i32 = arith.constant 3 : i32
    %c8_i32_49 = arith.constant 8 : i32
    %127 = arith.muli %c3_i32, %c8_i32_49 : i32
    %128 = tpu.assume_multiple %127, 8 : i32
    %129 = arith.index_cast %128 : i32 to index
    %c0_50 = arith.constant 0 : index
    %130 = vector.load %arg10[%129, %c0_50] : memref<64x512xf32, #tpu.memory_space<vmem>>, vector<8x512xf32>
    %cst_51 = arith.constant dense<0.000000e+00> : vector<8x512xf32>
    %131 = tpu.matmul %124, %7, %cst_51 {dimension_numbers = #tpu.dot_dimension_numbers<[1], [0], [0], [1], [0, 0, 1, 1], [], []>} : vector<8x128xf32>, vector<128x512xf32>, vector<8x512xf32> -> vector<8x512xf32>
    %132 = arith.addf %130, %131 : vector<8x512xf32>
    %133 = vector.extract_strided_slice %132 {offsets = [0, 0], sizes = [8, 128], strides = [1, 1]} : vector<8x512xf32> to vector<8x128xf32>
    %cst_52 = arith.constant 5.000000e-01 : f32
    %134 = vector.broadcast %cst_52 : f32 to vector<8x128xf32>
    %135 = arith.mulf %134, %133 : vector<8x128xf32>
    %136 = math.tanh %135 : vector<8x128xf32>
    %cst_53 = arith.constant 5.000000e-01 : f32
    %137 = vector.broadcast %cst_53 : f32 to vector<8x128xf32>
    %138 = arith.mulf %137, %136 : vector<8x128xf32>
    %cst_54 = arith.constant 5.000000e-01 : f32
    %139 = vector.broadcast %cst_54 : f32 to vector<8x128xf32>
    %140 = arith.addf %138, %139 : vector<8x128xf32>
    %141 = vector.extract_strided_slice %132 {offsets = [0, 128], sizes = [8, 128], strides = [1, 1]} : vector<8x512xf32> to vector<8x128xf32>
    %cst_55 = arith.constant 5.000000e-01 : f32
    %142 = vector.broadcast %cst_55 : f32 to vector<8x128xf32>
    %143 = arith.mulf %142, %141 : vector<8x128xf32>
    %144 = math.tanh %143 : vector<8x128xf32>
    %cst_56 = arith.constant 5.000000e-01 : f32
    %145 = vector.broadcast %cst_56 : f32 to vector<8x128xf32>
    %146 = arith.mulf %145, %144 : vector<8x128xf32>
    %cst_57 = arith.constant 5.000000e-01 : f32
    %147 = vector.broadcast %cst_57 : f32 to vector<8x128xf32>
    %148 = arith.addf %146, %147 : vector<8x128xf32>
    %149 = vector.extract_strided_slice %132 {offsets = [0, 256], sizes = [8, 128], strides = [1, 1]} : vector<8x512xf32> to vector<8x128xf32>
    %150 = math.tanh %149 : vector<8x128xf32>
    %151 = vector.extract_strided_slice %132 {offsets = [0, 384], sizes = [8, 128], strides = [1, 1]} : vector<8x512xf32> to vector<8x128xf32>
    %cst_58 = arith.constant 5.000000e-01 : f32
    %152 = vector.broadcast %cst_58 : f32 to vector<8x128xf32>
    %153 = arith.mulf %152, %151 : vector<8x128xf32>
    %154 = math.tanh %153 : vector<8x128xf32>
    %cst_59 = arith.constant 5.000000e-01 : f32
    %155 = vector.broadcast %cst_59 : f32 to vector<8x128xf32>
    %156 = arith.mulf %155, %154 : vector<8x128xf32>
    %cst_60 = arith.constant 5.000000e-01 : f32
    %157 = vector.broadcast %cst_60 : f32 to vector<8x128xf32>
    %158 = arith.addf %156, %157 : vector<8x128xf32>
    %159 = arith.mulf %148, %122 : vector<8x128xf32>
    %160 = arith.mulf %140, %150 : vector<8x128xf32>
    %161 = arith.addf %159, %160 : vector<8x128xf32>
    %162 = math.tanh %161 : vector<8x128xf32>
    %163 = arith.mulf %158, %162 : vector<8x128xf32>
    %164 = arith.index_cast %128 : i32 to index
    %c0_61 = arith.constant 0 : index
    %165 = vector.load %arg11[%164, %c0_61] : memref<64x128xf32, #tpu.memory_space<vmem>>, vector<8x128xf32>
    tpu.vector_store %arg11[%164, %c0_61], %163 {strides = array<i32>} : memref<64x128xf32, #tpu.memory_space<vmem>>, vector<8x128xf32>,
    %c4_i32 = arith.constant 4 : i32
    %c8_i32_62 = arith.constant 8 : i32
    %166 = arith.muli %c4_i32, %c8_i32_62 : i32
    %167 = tpu.assume_multiple %166, 8 : i32
    %168 = arith.index_cast %167 : i32 to index
    %c0_63 = arith.constant 0 : index
    %169 = vector.load %arg10[%168, %c0_63] : memref<64x512xf32, #tpu.memory_space<vmem>>, vector<8x512xf32>
    %cst_64 = arith.constant dense<0.000000e+00> : vector<8x512xf32>
    %170 = tpu.matmul %163, %7, %cst_64 {dimension_numbers = #tpu.dot_dimension_numbers<[1], [0], [0], [1], [0, 0, 1, 1], [], []>} : vector<8x128xf32>, vector<128x512xf32>, vector<8x512xf32> -> vector<8x512xf32>
    %171 = arith.addf %169, %170 : vector<8x512xf32>
    %172 = vector.extract_strided_slice %171 {offsets = [0, 0], sizes = [8, 128], strides = [1, 1]} : vector<8x512xf32> to vector<8x128xf32>
    %cst_65 = arith.constant 5.000000e-01 : f32
    %173 = vector.broadcast %cst_65 : f32 to vector<8x128xf32>
    %174 = arith.mulf %173, %172 : vector<8x128xf32>
    %175 = math.tanh %174 : vector<8x128xf32>
    %cst_66 = arith.constant 5.000000e-01 : f32
    %176 = vector.broadcast %cst_66 : f32 to vector<8x128xf32>
    %177 = arith.mulf %176, %175 : vector<8x128xf32>
    %cst_67 = arith.constant 5.000000e-01 : f32
    %178 = vector.broadcast %cst_67 : f32 to vector<8x128xf32>
    %179 = arith.addf %177, %178 : vector<8x128xf32>
    %180 = vector.extract_strided_slice %171 {offsets = [0, 128], sizes = [8, 128], strides = [1, 1]} : vector<8x512xf32> to vector<8x128xf32>
    %cst_68 = arith.constant 5.000000e-01 : f32
    %181 = vector.broadcast %cst_68 : f32 to vector<8x128xf32>
    %182 = arith.mulf %181, %180 : vector<8x128xf32>
    %183 = math.tanh %182 : vector<8x128xf32>
    %cst_69 = arith.constant 5.000000e-01 : f32
    %184 = vector.broadcast %cst_69 : f32 to vector<8x128xf32>
    %185 = arith.mulf %184, %183 : vector<8x128xf32>
    %cst_70 = arith.constant 5.000000e-01 : f32
    %186 = vector.broadcast %cst_70 : f32 to vector<8x128xf32>
    %187 = arith.addf %185, %186 : vector<8x128xf32>
    %188 = vector.extract_strided_slice %171 {offsets = [0, 256], sizes = [8, 128], strides = [1, 1]} : vector<8x512xf32> to vector<8x128xf32>
    %189 = math.tanh %188 : vector<8x128xf32>
    %190 = vector.extract_strided_slice %171 {offsets = [0, 384], sizes = [8, 128], strides = [1, 1]} : vector<8x512xf32> to vector<8x128xf32>
    %cst_71 = arith.constant 5.000000e-01 : f32
    %191 = vector.broadcast %cst_71 : f32 to vector<8x128xf32>
    %192 = arith.mulf %191, %190 : vector<8x128xf32>
    %193 = math.tanh %192 : vector<8x128xf32>
    %cst_72 = arith.constant 5.000000e-01 : f32
    %194 = vector.broadcast %cst_72 : f32 to vector<8x128xf32>
    %195 = arith.mulf %194, %193 : vector<8x128xf32>
    %cst_73 = arith.constant 5.000000e-01 : f32
    %196 = vector.broadcast %cst_73 : f32 to vector<8x128xf32>
    %197 = arith.addf %195, %196 : vector<8x128xf32>
    %198 = arith.mulf %187, %161 : vector<8x128xf32>
    %199 = arith.mulf %179, %189 : vector<8x128xf32>
    %200 = arith.addf %198, %199 : vector<8x128xf32>
    %201 = math.tanh %200 : vector<8x128xf32>
    %202 = arith.mulf %197, %201 : vector<8x128xf32>
    %203 = arith.index_cast %167 : i32 to index
    %c0_74 = arith.constant 0 : index
    %204 = vector.load %arg11[%203, %c0_74] : memref<64x128xf32, #tpu.memory_space<vmem>>, vector<8x128xf32>
    tpu.vector_store %arg11[%203, %c0_74], %202 {strides = array<i32>} : memref<64x128xf32, #tpu.memory_space<vmem>>, vector<8x128xf32>,
    %c5_i32 = arith.constant 5 : i32
    %c8_i32_75 = arith.constant 8 : i32
    %205 = arith.muli %c5_i32, %c8_i32_75 : i32
    %206 = tpu.assume_multiple %205, 8 : i32
    %207 = arith.index_cast %206 : i32 to index
    %c0_76 = arith.constant 0 : index
    %208 = vector.load %arg10[%207, %c0_76] : memref<64x512xf32, #tpu.memory_space<vmem>>, vector<8x512xf32>
    %cst_77 = arith.constant dense<0.000000e+00> : vector<8x512xf32>
    %209 = tpu.matmul %202, %7, %cst_77 {dimension_numbers = #tpu.dot_dimension_numbers<[1], [0], [0], [1], [0, 0, 1, 1], [], []>} : vector<8x128xf32>, vector<128x512xf32>, vector<8x512xf32> -> vector<8x512xf32>
    %210 = arith.addf %208, %209 : vector<8x512xf32>
    %211 = vector.extract_strided_slice %210 {offsets = [0, 0], sizes = [8, 128], strides = [1, 1]} : vector<8x512xf32> to vector<8x128xf32>
    %cst_78 = arith.constant 5.000000e-01 : f32
    %212 = vector.broadcast %cst_78 : f32 to vector<8x128xf32>
    %213 = arith.mulf %212, %211 : vector<8x128xf32>
    %214 = math.tanh %213 : vector<8x128xf32>
    %cst_79 = arith.constant 5.000000e-01 : f32
    %215 = vector.broadcast %cst_79 : f32 to vector<8x128xf32>
    %216 = arith.mulf %215, %214 : vector<8x128xf32>
    %cst_80 = arith.constant 5.000000e-01 : f32
    %217 = vector.broadcast %cst_80 : f32 to vector<8x128xf32>
    %218 = arith.addf %216, %217 : vector<8x128xf32>
    %219 = vector.extract_strided_slice %210 {offsets = [0, 128], sizes = [8, 128], strides = [1, 1]} : vector<8x512xf32> to vector<8x128xf32>
    %cst_81 = arith.constant 5.000000e-01 : f32
    %220 = vector.broadcast %cst_81 : f32 to vector<8x128xf32>
    %221 = arith.mulf %220, %219 : vector<8x128xf32>
    %222 = math.tanh %221 : vector<8x128xf32>
    %cst_82 = arith.constant 5.000000e-01 : f32
    %223 = vector.broadcast %cst_82 : f32 to vector<8x128xf32>
    %224 = arith.mulf %223, %222 : vector<8x128xf32>
    %cst_83 = arith.constant 5.000000e-01 : f32
    %225 = vector.broadcast %cst_83 : f32 to vector<8x128xf32>
    %226 = arith.addf %224, %225 : vector<8x128xf32>
    %227 = vector.extract_strided_slice %210 {offsets = [0, 256], sizes = [8, 128], strides = [1, 1]} : vector<8x512xf32> to vector<8x128xf32>
    %228 = math.tanh %227 : vector<8x128xf32>
    %229 = vector.extract_strided_slice %210 {offsets = [0, 384], sizes = [8, 128], strides = [1, 1]} : vector<8x512xf32> to vector<8x128xf32>
    %cst_84 = arith.constant 5.000000e-01 : f32
    %230 = vector.broadcast %cst_84 : f32 to vector<8x128xf32>
    %231 = arith.mulf %230, %229 : vector<8x128xf32>
    %232 = math.tanh %231 : vector<8x128xf32>
    %cst_85 = arith.constant 5.000000e-01 : f32
    %233 = vector.broadcast %cst_85 : f32 to vector<8x128xf32>
    %234 = arith.mulf %233, %232 : vector<8x128xf32>
    %cst_86 = arith.constant 5.000000e-01 : f32
    %235 = vector.broadcast %cst_86 : f32 to vector<8x128xf32>
    %236 = arith.addf %234, %235 : vector<8x128xf32>
    %237 = arith.mulf %226, %200 : vector<8x128xf32>
    %238 = arith.mulf %218, %228 : vector<8x128xf32>
    %239 = arith.addf %237, %238 : vector<8x128xf32>
    %240 = math.tanh %239 : vector<8x128xf32>
    %241 = arith.mulf %236, %240 : vector<8x128xf32>
    %242 = arith.index_cast %206 : i32 to index
    %c0_87 = arith.constant 0 : index
    %243 = vector.load %arg11[%242, %c0_87] : memref<64x128xf32, #tpu.memory_space<vmem>>, vector<8x128xf32>
    tpu.vector_store %arg11[%242, %c0_87], %241 {strides = array<i32>} : memref<64x128xf32, #tpu.memory_space<vmem>>, vector<8x128xf32>,
    %c6_i32 = arith.constant 6 : i32
    %c8_i32_88 = arith.constant 8 : i32
    %244 = arith.muli %c6_i32, %c8_i32_88 : i32
    %245 = tpu.assume_multiple %244, 8 : i32
    %246 = arith.index_cast %245 : i32 to index
    %c0_89 = arith.constant 0 : index
    %247 = vector.load %arg10[%246, %c0_89] : memref<64x512xf32, #tpu.memory_space<vmem>>, vector<8x512xf32>
    %cst_90 = arith.constant dense<0.000000e+00> : vector<8x512xf32>
    %248 = tpu.matmul %241, %7, %cst_90 {dimension_numbers = #tpu.dot_dimension_numbers<[1], [0], [0], [1], [0, 0, 1, 1], [], []>} : vector<8x128xf32>, vector<128x512xf32>, vector<8x512xf32> -> vector<8x512xf32>
    %249 = arith.addf %247, %248 : vector<8x512xf32>
    %250 = vector.extract_strided_slice %249 {offsets = [0, 0], sizes = [8, 128], strides = [1, 1]} : vector<8x512xf32> to vector<8x128xf32>
    %cst_91 = arith.constant 5.000000e-01 : f32
    %251 = vector.broadcast %cst_91 : f32 to vector<8x128xf32>
    %252 = arith.mulf %251, %250 : vector<8x128xf32>
    %253 = math.tanh %252 : vector<8x128xf32>
    %cst_92 = arith.constant 5.000000e-01 : f32
    %254 = vector.broadcast %cst_92 : f32 to vector<8x128xf32>
    %255 = arith.mulf %254, %253 : vector<8x128xf32>
    %cst_93 = arith.constant 5.000000e-01 : f32
    %256 = vector.broadcast %cst_93 : f32 to vector<8x128xf32>
    %257 = arith.addf %255, %256 : vector<8x128xf32>
    %258 = vector.extract_strided_slice %249 {offsets = [0, 128], sizes = [8, 128], strides = [1, 1]} : vector<8x512xf32> to vector<8x128xf32>
    %cst_94 = arith.constant 5.000000e-01 : f32
    %259 = vector.broadcast %cst_94 : f32 to vector<8x128xf32>
    %260 = arith.mulf %259, %258 : vector<8x128xf32>
    %261 = math.tanh %260 : vector<8x128xf32>
    %cst_95 = arith.constant 5.000000e-01 : f32
    %262 = vector.broadcast %cst_95 : f32 to vector<8x128xf32>
    %263 = arith.mulf %262, %261 : vector<8x128xf32>
    %cst_96 = arith.constant 5.000000e-01 : f32
    %264 = vector.broadcast %cst_96 : f32 to vector<8x128xf32>
    %265 = arith.addf %263, %264 : vector<8x128xf32>
    %266 = vector.extract_strided_slice %249 {offsets = [0, 256], sizes = [8, 128], strides = [1, 1]} : vector<8x512xf32> to vector<8x128xf32>
    %267 = math.tanh %266 : vector<8x128xf32>
    %268 = vector.extract_strided_slice %249 {offsets = [0, 384], sizes = [8, 128], strides = [1, 1]} : vector<8x512xf32> to vector<8x128xf32>
    %cst_97 = arith.constant 5.000000e-01 : f32
    %269 = vector.broadcast %cst_97 : f32 to vector<8x128xf32>
    %270 = arith.mulf %269, %268 : vector<8x128xf32>
    %271 = math.tanh %270 : vector<8x128xf32>
    %cst_98 = arith.constant 5.000000e-01 : f32
    %272 = vector.broadcast %cst_98 : f32 to vector<8x128xf32>
    %273 = arith.mulf %272, %271 : vector<8x128xf32>
    %cst_99 = arith.constant 5.000000e-01 : f32
    %274 = vector.broadcast %cst_99 : f32 to vector<8x128xf32>
    %275 = arith.addf %273, %274 : vector<8x128xf32>
    %276 = arith.mulf %265, %239 : vector<8x128xf32>
    %277 = arith.mulf %257, %267 : vector<8x128xf32>
    %278 = arith.addf %276, %277 : vector<8x128xf32>
    %279 = math.tanh %278 : vector<8x128xf32>
    %280 = arith.mulf %275, %279 : vector<8x128xf32>
    %281 = arith.index_cast %245 : i32 to index
    %c0_100 = arith.constant 0 : index
    %282 = vector.load %arg11[%281, %c0_100] : memref<64x128xf32, #tpu.memory_space<vmem>>, vector<8x128xf32>
    tpu.vector_store %arg11[%281, %c0_100], %280 {strides = array<i32>} : memref<64x128xf32, #tpu.memory_space<vmem>>, vector<8x128xf32>,
    %c7_i32 = arith.constant 7 : i32
    %c8_i32_101 = arith.constant 8 : i32
    %283 = arith.muli %c7_i32, %c8_i32_101 : i32
    %284 = tpu.assume_multiple %283, 8 : i32
    %285 = arith.index_cast %284 : i32 to index
    %c0_102 = arith.constant 0 : index
    %286 = vector.load %arg10[%285, %c0_102] : memref<64x512xf32, #tpu.memory_space<vmem>>, vector<8x512xf32>
    %cst_103 = arith.constant dense<0.000000e+00> : vector<8x512xf32>
    %287 = tpu.matmul %280, %7, %cst_103 {dimension_numbers = #tpu.dot_dimension_numbers<[1], [0], [0], [1], [0, 0, 1, 1], [], []>} : vector<8x128xf32>, vector<128x512xf32>, vector<8x512xf32> -> vector<8x512xf32>
    %288 = arith.addf %286, %287 : vector<8x512xf32>
    %289 = vector.extract_strided_slice %288 {offsets = [0, 0], sizes = [8, 128], strides = [1, 1]} : vector<8x512xf32> to vector<8x128xf32>
    %cst_104 = arith.constant 5.000000e-01 : f32
    %290 = vector.broadcast %cst_104 : f32 to vector<8x128xf32>
    %291 = arith.mulf %290, %289 : vector<8x128xf32>
    %292 = math.tanh %291 : vector<8x128xf32>
    %cst_105 = arith.constant 5.000000e-01 : f32
    %293 = vector.broadcast %cst_105 : f32 to vector<8x128xf32>
    %294 = arith.mulf %293, %292 : vector<8x128xf32>
    %cst_106 = arith.constant 5.000000e-01 : f32
    %295 = vector.broadcast %cst_106 : f32 to vector<8x128xf32>
    %296 = arith.addf %294, %295 : vector<8x128xf32>
    %297 = vector.extract_strided_slice %288 {offsets = [0, 128], sizes = [8, 128], strides = [1, 1]} : vector<8x512xf32> to vector<8x128xf32>
    %cst_107 = arith.constant 5.000000e-01 : f32
    %298 = vector.broadcast %cst_107 : f32 to vector<8x128xf32>
    %299 = arith.mulf %298, %297 : vector<8x128xf32>
    %300 = math.tanh %299 : vector<8x128xf32>
    %cst_108 = arith.constant 5.000000e-01 : f32
    %301 = vector.broadcast %cst_108 : f32 to vector<8x128xf32>
    %302 = arith.mulf %301, %300 : vector<8x128xf32>
    %cst_109 = arith.constant 5.000000e-01 : f32
    %303 = vector.broadcast %cst_109 : f32 to vector<8x128xf32>
    %304 = arith.addf %302, %303 : vector<8x128xf32>
    %305 = vector.extract_strided_slice %288 {offsets = [0, 256], sizes = [8, 128], strides = [1, 1]} : vector<8x512xf32> to vector<8x128xf32>
    %306 = math.tanh %305 : vector<8x128xf32>
    %307 = vector.extract_strided_slice %288 {offsets = [0, 384], sizes = [8, 128], strides = [1, 1]} : vector<8x512xf32> to vector<8x128xf32>
    %cst_110 = arith.constant 5.000000e-01 : f32
    %308 = vector.broadcast %cst_110 : f32 to vector<8x128xf32>
    %309 = arith.mulf %308, %307 : vector<8x128xf32>
    %310 = math.tanh %309 : vector<8x128xf32>
    %cst_111 = arith.constant 5.000000e-01 : f32
    %311 = vector.broadcast %cst_111 : f32 to vector<8x128xf32>
    %312 = arith.mulf %311, %310 : vector<8x128xf32>
    %cst_112 = arith.constant 5.000000e-01 : f32
    %313 = vector.broadcast %cst_112 : f32 to vector<8x128xf32>
    %314 = arith.addf %312, %313 : vector<8x128xf32>
    %315 = arith.mulf %304, %278 : vector<8x128xf32>
    %316 = arith.mulf %296, %306 : vector<8x128xf32>
    %317 = arith.addf %315, %316 : vector<8x128xf32>
    %318 = math.tanh %317 : vector<8x128xf32>
    %319 = arith.mulf %314, %318 : vector<8x128xf32>
    %320 = arith.index_cast %284 : i32 to index
    %c0_113 = arith.constant 0 : index
    %321 = vector.load %arg11[%320, %c0_113] : memref<64x128xf32, #tpu.memory_space<vmem>>, vector<8x128xf32>
    tpu.vector_store %arg11[%320, %c0_113], %319 {strides = array<i32>} : memref<64x128xf32, #tpu.memory_space<vmem>>, vector<8x128xf32>,
    %c8_i32_114 = arith.constant 8 : i32
    %c0_115 = arith.constant 0 : index
    %c0_116 = arith.constant 0 : index
    %322 = vector.load %arg11[%c0_115, %c0_116] : memref<64x128xf32, #tpu.memory_space<vmem>>, vector<64x128xf32>
    %c0_117 = arith.constant 0 : index
    %c0_118 = arith.constant 0 : index
    %323 = vector.load %arg4[%c0_117, %c0_118] : memref<128x512xf32, #tpu.memory_space<vmem>>, vector<128x512xf32>
    %cst_119 = arith.constant dense<0.000000e+00> : vector<64x512xf32>
    %324 = tpu.matmul %322, %323, %cst_119 {dimension_numbers = #tpu.dot_dimension_numbers<[1], [0], [0], [1], [0, 0, 1, 1], [], []>} : vector<64x128xf32>, vector<128x512xf32>, vector<64x512xf32> -> vector<64x512xf32>
    %c0_120 = arith.constant 0 : index
    %c0_121 = arith.constant 0 : index
    %325 = vector.load %arg6[%c0_120, %c0_121] : memref<1x512xf32, #tpu.memory_space<vmem>>, vector<1x512xf32>
    %326 = vector.broadcast %325 : vector<1x512xf32> to vector<64x512xf32>
    %327 = arith.addf %324, %326 : vector<64x512xf32>
    %c0_122 = arith.constant 0 : index
    %c0_123 = arith.constant 0 : index
    %328 = vector.load %arg10[%c0_122, %c0_123] : memref<64x512xf32, #tpu.memory_space<vmem>>, vector<64x512xf32>
    tpu.vector_store %arg10[%c0_122, %c0_123], %327 {strides = array<i32>} : memref<64x512xf32, #tpu.memory_space<vmem>>, vector<64x512xf32>,
    %c0_124 = arith.constant 0 : index
    %c0_125 = arith.constant 0 : index
    %329 = vector.load %arg5[%c0_124, %c0_125] : memref<128x512xf32, #tpu.memory_space<vmem>>, vector<128x512xf32>
    %cst_126 = arith.constant 0.000000e+00 : f32
    %330 = vector.broadcast %cst_126 : f32 to vector<8x128xf32>
    %cst_127 = arith.constant 0.000000e+00 : f32
    %331 = vector.broadcast %cst_127 : f32 to vector<8x128xf32>
    %c0_i32_128 = arith.constant 0 : i32
    %c8_i32_129 = arith.constant 8 : i32
    %332 = arith.muli %c0_i32_128, %c8_i32_129 : i32
    %333 = tpu.assume_multiple %332, 8 : i32
    %334 = arith.index_cast %333 : i32 to index
    %c0_130 = arith.constant 0 : index
    %335 = vector.load %arg10[%334, %c0_130] : memref<64x512xf32, #tpu.memory_space<vmem>>, vector<8x512xf32>
    %cst_131 = arith.constant dense<0.000000e+00> : vector<8x512xf32>
    %336 = tpu.matmul %330, %329, %cst_131 {dimension_numbers = #tpu.dot_dimension_numbers<[1], [0], [0], [1], [0, 0, 1, 1], [], []>} : vector<8x128xf32>, vector<128x512xf32>, vector<8x512xf32> -> vector<8x512xf32>
    %337 = arith.addf %335, %336 : vector<8x512xf32>
    %338 = vector.extract_strided_slice %337 {offsets = [0, 0], sizes = [8, 128], strides = [1, 1]} : vector<8x512xf32> to vector<8x128xf32>
    %cst_132 = arith.constant 5.000000e-01 : f32
    %339 = vector.broadcast %cst_132 : f32 to vector<8x128xf32>
    %340 = arith.mulf %339, %338 : vector<8x128xf32>
    %341 = math.tanh %340 : vector<8x128xf32>
    %cst_133 = arith.constant 5.000000e-01 : f32
    %342 = vector.broadcast %cst_133 : f32 to vector<8x128xf32>
    %343 = arith.mulf %342, %341 : vector<8x128xf32>
    %cst_134 = arith.constant 5.000000e-01 : f32
    %344 = vector.broadcast %cst_134 : f32 to vector<8x128xf32>
    %345 = arith.addf %343, %344 : vector<8x128xf32>
    %346 = vector.extract_strided_slice %337 {offsets = [0, 128], sizes = [8, 128], strides = [1, 1]} : vector<8x512xf32> to vector<8x128xf32>
    %cst_135 = arith.constant 5.000000e-01 : f32
    %347 = vector.broadcast %cst_135 : f32 to vector<8x128xf32>
    %348 = arith.mulf %347, %346 : vector<8x128xf32>
    %349 = math.tanh %348 : vector<8x128xf32>
    %cst_136 = arith.constant 5.000000e-01 : f32
    %350 = vector.broadcast %cst_136 : f32 to vector<8x128xf32>
    %351 = arith.mulf %350, %349 : vector<8x128xf32>
    %cst_137 = arith.constant 5.000000e-01 : f32
    %352 = vector.broadcast %cst_137 : f32 to vector<8x128xf32>
    %353 = arith.addf %351, %352 : vector<8x128xf32>
    %354 = vector.extract_strided_slice %337 {offsets = [0, 256], sizes = [8, 128], strides = [1, 1]} : vector<8x512xf32> to vector<8x128xf32>
    %355 = math.tanh %354 : vector<8x128xf32>
    %356 = vector.extract_strided_slice %337 {offsets = [0, 384], sizes = [8, 128], strides = [1, 1]} : vector<8x512xf32> to vector<8x128xf32>
    %cst_138 = arith.constant 5.000000e-01 : f32
    %357 = vector.broadcast %cst_138 : f32 to vector<8x128xf32>
    %358 = arith.mulf %357, %356 : vector<8x128xf32>
    %359 = math.tanh %358 : vector<8x128xf32>
    %cst_139 = arith.constant 5.000000e-01 : f32
    %360 = vector.broadcast %cst_139 : f32 to vector<8x128xf32>
    %361 = arith.mulf %360, %359 : vector<8x128xf32>
    %cst_140 = arith.constant 5.000000e-01 : f32
    %362 = vector.broadcast %cst_140 : f32 to vector<8x128xf32>
    %363 = arith.addf %361, %362 : vector<8x128xf32>
    %364 = arith.mulf %353, %331 : vector<8x128xf32>
    %365 = arith.mulf %345, %355 : vector<8x128xf32>
    %366 = arith.addf %364, %365 : vector<8x128xf32>
    %367 = math.tanh %366 : vector<8x128xf32>
    %368 = arith.mulf %363, %367 : vector<8x128xf32>
    %c1_i32_141 = arith.constant 1 : i32
    %c8_i32_142 = arith.constant 8 : i32
    %369 = arith.muli %c1_i32_141, %c8_i32_142 : i32
    %370 = tpu.assume_multiple %369, 8 : i32
    %371 = arith.index_cast %370 : i32 to index
    %c0_143 = arith.constant 0 : index
    %372 = vector.load %arg10[%371, %c0_143] : memref<64x512xf32, #tpu.memory_space<vmem>>, vector<8x512xf32>
    %cst_144 = arith.constant dense<0.000000e+00> : vector<8x512xf32>
    %373 = tpu.matmul %368, %329, %cst_144 {dimension_numbers = #tpu.dot_dimension_numbers<[1], [0], [0], [1], [0, 0, 1, 1], [], []>} : vector<8x128xf32>, vector<128x512xf32>, vector<8x512xf32> -> vector<8x512xf32>
    %374 = arith.addf %372, %373 : vector<8x512xf32>
    %375 = vector.extract_strided_slice %374 {offsets = [0, 0], sizes = [8, 128], strides = [1, 1]} : vector<8x512xf32> to vector<8x128xf32>
    %cst_145 = arith.constant 5.000000e-01 : f32
    %376 = vector.broadcast %cst_145 : f32 to vector<8x128xf32>
    %377 = arith.mulf %376, %375 : vector<8x128xf32>
    %378 = math.tanh %377 : vector<8x128xf32>
    %cst_146 = arith.constant 5.000000e-01 : f32
    %379 = vector.broadcast %cst_146 : f32 to vector<8x128xf32>
    %380 = arith.mulf %379, %378 : vector<8x128xf32>
    %cst_147 = arith.constant 5.000000e-01 : f32
    %381 = vector.broadcast %cst_147 : f32 to vector<8x128xf32>
    %382 = arith.addf %380, %381 : vector<8x128xf32>
    %383 = vector.extract_strided_slice %374 {offsets = [0, 128], sizes = [8, 128], strides = [1, 1]} : vector<8x512xf32> to vector<8x128xf32>
    %cst_148 = arith.constant 5.000000e-01 : f32
    %384 = vector.broadcast %cst_148 : f32 to vector<8x128xf32>
    %385 = arith.mulf %384, %383 : vector<8x128xf32>
    %386 = math.tanh %385 : vector<8x128xf32>
    %cst_149 = arith.constant 5.000000e-01 : f32
    %387 = vector.broadcast %cst_149 : f32 to vector<8x128xf32>
    %388 = arith.mulf %387, %386 : vector<8x128xf32>
    %cst_150 = arith.constant 5.000000e-01 : f32
    %389 = vector.broadcast %cst_150 : f32 to vector<8x128xf32>
    %390 = arith.addf %388, %389 : vector<8x128xf32>
    %391 = vector.extract_strided_slice %374 {offsets = [0, 256], sizes = [8, 128], strides = [1, 1]} : vector<8x512xf32> to vector<8x128xf32>
    %392 = math.tanh %391 : vector<8x128xf32>
    %393 = vector.extract_strided_slice %374 {offsets = [0, 384], sizes = [8, 128], strides = [1, 1]} : vector<8x512xf32> to vector<8x128xf32>
    %cst_151 = arith.constant 5.000000e-01 : f32
    %394 = vector.broadcast %cst_151 : f32 to vector<8x128xf32>
    %395 = arith.mulf %394, %393 : vector<8x128xf32>
    %396 = math.tanh %395 : vector<8x128xf32>
    %cst_152 = arith.constant 5.000000e-01 : f32
    %397 = vector.broadcast %cst_152 : f32 to vector<8x128xf32>
    %398 = arith.mulf %397, %396 : vector<8x128xf32>
    %cst_153 = arith.constant 5.000000e-01 : f32
    %399 = vector.broadcast %cst_153 : f32 to vector<8x128xf32>
    %400 = arith.addf %398, %399 : vector<8x128xf32>
    %401 = arith.mulf %390, %366 : vector<8x128xf32>
    %402 = arith.mulf %382, %392 : vector<8x128xf32>
    %403 = arith.addf %401, %402 : vector<8x128xf32>
    %404 = math.tanh %403 : vector<8x128xf32>
    %405 = arith.mulf %400, %404 : vector<8x128xf32>
    %c2_i32_154 = arith.constant 2 : i32
    %c8_i32_155 = arith.constant 8 : i32
    %406 = arith.muli %c2_i32_154, %c8_i32_155 : i32
    %407 = tpu.assume_multiple %406, 8 : i32
    %408 = arith.index_cast %407 : i32 to index
    %c0_156 = arith.constant 0 : index
    %409 = vector.load %arg10[%408, %c0_156] : memref<64x512xf32, #tpu.memory_space<vmem>>, vector<8x512xf32>
    %cst_157 = arith.constant dense<0.000000e+00> : vector<8x512xf32>
    %410 = tpu.matmul %405, %329, %cst_157 {dimension_numbers = #tpu.dot_dimension_numbers<[1], [0], [0], [1], [0, 0, 1, 1], [], []>} : vector<8x128xf32>, vector<128x512xf32>, vector<8x512xf32> -> vector<8x512xf32>
    %411 = arith.addf %409, %410 : vector<8x512xf32>
    %412 = vector.extract_strided_slice %411 {offsets = [0, 0], sizes = [8, 128], strides = [1, 1]} : vector<8x512xf32> to vector<8x128xf32>
    %cst_158 = arith.constant 5.000000e-01 : f32
    %413 = vector.broadcast %cst_158 : f32 to vector<8x128xf32>
    %414 = arith.mulf %413, %412 : vector<8x128xf32>
    %415 = math.tanh %414 : vector<8x128xf32>
    %cst_159 = arith.constant 5.000000e-01 : f32
    %416 = vector.broadcast %cst_159 : f32 to vector<8x128xf32>
    %417 = arith.mulf %416, %415 : vector<8x128xf32>
    %cst_160 = arith.constant 5.000000e-01 : f32
    %418 = vector.broadcast %cst_160 : f32 to vector<8x128xf32>
    %419 = arith.addf %417, %418 : vector<8x128xf32>
    %420 = vector.extract_strided_slice %411 {offsets = [0, 128], sizes = [8, 128], strides = [1, 1]} : vector<8x512xf32> to vector<8x128xf32>
    %cst_161 = arith.constant 5.000000e-01 : f32
    %421 = vector.broadcast %cst_161 : f32 to vector<8x128xf32>
    %422 = arith.mulf %421, %420 : vector<8x128xf32>
    %423 = math.tanh %422 : vector<8x128xf32>
    %cst_162 = arith.constant 5.000000e-01 : f32
    %424 = vector.broadcast %cst_162 : f32 to vector<8x128xf32>
    %425 = arith.mulf %424, %423 : vector<8x128xf32>
    %cst_163 = arith.constant 5.000000e-01 : f32
    %426 = vector.broadcast %cst_163 : f32 to vector<8x128xf32>
    %427 = arith.addf %425, %426 : vector<8x128xf32>
    %428 = vector.extract_strided_slice %411 {offsets = [0, 256], sizes = [8, 128], strides = [1, 1]} : vector<8x512xf32> to vector<8x128xf32>
    %429 = math.tanh %428 : vector<8x128xf32>
    %430 = vector.extract_strided_slice %411 {offsets = [0, 384], sizes = [8, 128], strides = [1, 1]} : vector<8x512xf32> to vector<8x128xf32>
    %cst_164 = arith.constant 5.000000e-01 : f32
    %431 = vector.broadcast %cst_164 : f32 to vector<8x128xf32>
    %432 = arith.mulf %431, %430 : vector<8x128xf32>
    %433 = math.tanh %432 : vector<8x128xf32>
    %cst_165 = arith.constant 5.000000e-01 : f32
    %434 = vector.broadcast %cst_165 : f32 to vector<8x128xf32>
    %435 = arith.mulf %434, %433 : vector<8x128xf32>
    %cst_166 = arith.constant 5.000000e-01 : f32
    %436 = vector.broadcast %cst_166 : f32 to vector<8x128xf32>
    %437 = arith.addf %435, %436 : vector<8x128xf32>
    %438 = arith.mulf %427, %403 : vector<8x128xf32>
    %439 = arith.mulf %419, %429 : vector<8x128xf32>
    %440 = arith.addf %438, %439 : vector<8x128xf32>
    %441 = math.tanh %440 : vector<8x128xf32>
    %442 = arith.mulf %437, %441 : vector<8x128xf32>
    %c3_i32_167 = arith.constant 3 : i32
    %c8_i32_168 = arith.constant 8 : i32
    %443 = arith.muli %c3_i32_167, %c8_i32_168 : i32
    %444 = tpu.assume_multiple %443, 8 : i32
    %445 = arith.index_cast %444 : i32 to index
    %c0_169 = arith.constant 0 : index
    %446 = vector.load %arg10[%445, %c0_169] : memref<64x512xf32, #tpu.memory_space<vmem>>, vector<8x512xf32>
    %cst_170 = arith.constant dense<0.000000e+00> : vector<8x512xf32>
    %447 = tpu.matmul %442, %329, %cst_170 {dimension_numbers = #tpu.dot_dimension_numbers<[1], [0], [0], [1], [0, 0, 1, 1], [], []>} : vector<8x128xf32>, vector<128x512xf32>, vector<8x512xf32> -> vector<8x512xf32>
    %448 = arith.addf %446, %447 : vector<8x512xf32>
    %449 = vector.extract_strided_slice %448 {offsets = [0, 0], sizes = [8, 128], strides = [1, 1]} : vector<8x512xf32> to vector<8x128xf32>
    %cst_171 = arith.constant 5.000000e-01 : f32
    %450 = vector.broadcast %cst_171 : f32 to vector<8x128xf32>
    %451 = arith.mulf %450, %449 : vector<8x128xf32>
    %452 = math.tanh %451 : vector<8x128xf32>
    %cst_172 = arith.constant 5.000000e-01 : f32
    %453 = vector.broadcast %cst_172 : f32 to vector<8x128xf32>
    %454 = arith.mulf %453, %452 : vector<8x128xf32>
    %cst_173 = arith.constant 5.000000e-01 : f32
    %455 = vector.broadcast %cst_173 : f32 to vector<8x128xf32>
    %456 = arith.addf %454, %455 : vector<8x128xf32>
    %457 = vector.extract_strided_slice %448 {offsets = [0, 128], sizes = [8, 128], strides = [1, 1]} : vector<8x512xf32> to vector<8x128xf32>
    %cst_174 = arith.constant 5.000000e-01 : f32
    %458 = vector.broadcast %cst_174 : f32 to vector<8x128xf32>
    %459 = arith.mulf %458, %457 : vector<8x128xf32>
    %460 = math.tanh %459 : vector<8x128xf32>
    %cst_175 = arith.constant 5.000000e-01 : f32
    %461 = vector.broadcast %cst_175 : f32 to vector<8x128xf32>
    %462 = arith.mulf %461, %460 : vector<8x128xf32>
    %cst_176 = arith.constant 5.000000e-01 : f32
    %463 = vector.broadcast %cst_176 : f32 to vector<8x128xf32>
    %464 = arith.addf %462, %463 : vector<8x128xf32>
    %465 = vector.extract_strided_slice %448 {offsets = [0, 256], sizes = [8, 128], strides = [1, 1]} : vector<8x512xf32> to vector<8x128xf32>
    %466 = math.tanh %465 : vector<8x128xf32>
    %467 = vector.extract_strided_slice %448 {offsets = [0, 384], sizes = [8, 128], strides = [1, 1]} : vector<8x512xf32> to vector<8x128xf32>
    %cst_177 = arith.constant 5.000000e-01 : f32
    %468 = vector.broadcast %cst_177 : f32 to vector<8x128xf32>
    %469 = arith.mulf %468, %467 : vector<8x128xf32>
    %470 = math.tanh %469 : vector<8x128xf32>
    %cst_178 = arith.constant 5.000000e-01 : f32
    %471 = vector.broadcast %cst_178 : f32 to vector<8x128xf32>
    %472 = arith.mulf %471, %470 : vector<8x128xf32>
    %cst_179 = arith.constant 5.000000e-01 : f32
    %473 = vector.broadcast %cst_179 : f32 to vector<8x128xf32>
    %474 = arith.addf %472, %473 : vector<8x128xf32>
    %475 = arith.mulf %464, %440 : vector<8x128xf32>
    %476 = arith.mulf %456, %466 : vector<8x128xf32>
    %477 = arith.addf %475, %476 : vector<8x128xf32>
    %478 = math.tanh %477 : vector<8x128xf32>
    %479 = arith.mulf %474, %478 : vector<8x128xf32>
    %c4_i32_180 = arith.constant 4 : i32
    %c8_i32_181 = arith.constant 8 : i32
    %480 = arith.muli %c4_i32_180, %c8_i32_181 : i32
    %481 = tpu.assume_multiple %480, 8 : i32
    %482 = arith.index_cast %481 : i32 to index
    %c0_182 = arith.constant 0 : index
    %483 = vector.load %arg10[%482, %c0_182] : memref<64x512xf32, #tpu.memory_space<vmem>>, vector<8x512xf32>
    %cst_183 = arith.constant dense<0.000000e+00> : vector<8x512xf32>
    %484 = tpu.matmul %479, %329, %cst_183 {dimension_numbers = #tpu.dot_dimension_numbers<[1], [0], [0], [1], [0, 0, 1, 1], [], []>} : vector<8x128xf32>, vector<128x512xf32>, vector<8x512xf32> -> vector<8x512xf32>
    %485 = arith.addf %483, %484 : vector<8x512xf32>
    %486 = vector.extract_strided_slice %485 {offsets = [0, 0], sizes = [8, 128], strides = [1, 1]} : vector<8x512xf32> to vector<8x128xf32>
    %cst_184 = arith.constant 5.000000e-01 : f32
    %487 = vector.broadcast %cst_184 : f32 to vector<8x128xf32>
    %488 = arith.mulf %487, %486 : vector<8x128xf32>
    %489 = math.tanh %488 : vector<8x128xf32>
    %cst_185 = arith.constant 5.000000e-01 : f32
    %490 = vector.broadcast %cst_185 : f32 to vector<8x128xf32>
    %491 = arith.mulf %490, %489 : vector<8x128xf32>
    %cst_186 = arith.constant 5.000000e-01 : f32
    %492 = vector.broadcast %cst_186 : f32 to vector<8x128xf32>
    %493 = arith.addf %491, %492 : vector<8x128xf32>
    %494 = vector.extract_strided_slice %485 {offsets = [0, 128], sizes = [8, 128], strides = [1, 1]} : vector<8x512xf32> to vector<8x128xf32>
    %cst_187 = arith.constant 5.000000e-01 : f32
    %495 = vector.broadcast %cst_187 : f32 to vector<8x128xf32>
    %496 = arith.mulf %495, %494 : vector<8x128xf32>
    %497 = math.tanh %496 : vector<8x128xf32>
    %cst_188 = arith.constant 5.000000e-01 : f32
    %498 = vector.broadcast %cst_188 : f32 to vector<8x128xf32>
    %499 = arith.mulf %498, %497 : vector<8x128xf32>
    %cst_189 = arith.constant 5.000000e-01 : f32
    %500 = vector.broadcast %cst_189 : f32 to vector<8x128xf32>
    %501 = arith.addf %499, %500 : vector<8x128xf32>
    %502 = vector.extract_strided_slice %485 {offsets = [0, 256], sizes = [8, 128], strides = [1, 1]} : vector<8x512xf32> to vector<8x128xf32>
    %503 = math.tanh %502 : vector<8x128xf32>
    %504 = vector.extract_strided_slice %485 {offsets = [0, 384], sizes = [8, 128], strides = [1, 1]} : vector<8x512xf32> to vector<8x128xf32>
    %cst_190 = arith.constant 5.000000e-01 : f32
    %505 = vector.broadcast %cst_190 : f32 to vector<8x128xf32>
    %506 = arith.mulf %505, %504 : vector<8x128xf32>
    %507 = math.tanh %506 : vector<8x128xf32>
    %cst_191 = arith.constant 5.000000e-01 : f32
    %508 = vector.broadcast %cst_191 : f32 to vector<8x128xf32>
    %509 = arith.mulf %508, %507 : vector<8x128xf32>
    %cst_192 = arith.constant 5.000000e-01 : f32
    %510 = vector.broadcast %cst_192 : f32 to vector<8x128xf32>
    %511 = arith.addf %509, %510 : vector<8x128xf32>
    %512 = arith.mulf %501, %477 : vector<8x128xf32>
    %513 = arith.mulf %493, %503 : vector<8x128xf32>
    %514 = arith.addf %512, %513 : vector<8x128xf32>
    %515 = math.tanh %514 : vector<8x128xf32>
    %516 = arith.mulf %511, %515 : vector<8x128xf32>
    %c5_i32_193 = arith.constant 5 : i32
    %c8_i32_194 = arith.constant 8 : i32
    %517 = arith.muli %c5_i32_193, %c8_i32_194 : i32
    %518 = tpu.assume_multiple %517, 8 : i32
    %519 = arith.index_cast %518 : i32 to index
    %c0_195 = arith.constant 0 : index
    %520 = vector.load %arg10[%519, %c0_195] : memref<64x512xf32, #tpu.memory_space<vmem>>, vector<8x512xf32>
    %cst_196 = arith.constant dense<0.000000e+00> : vector<8x512xf32>
    %521 = tpu.matmul %516, %329, %cst_196 {dimension_numbers = #tpu.dot_dimension_numbers<[1], [0], [0], [1], [0, 0, 1, 1], [], []>} : vector<8x128xf32>, vector<128x512xf32>, vector<8x512xf32> -> vector<8x512xf32>
    %522 = arith.addf %520, %521 : vector<8x512xf32>
    %523 = vector.extract_strided_slice %522 {offsets = [0, 0], sizes = [8, 128], strides = [1, 1]} : vector<8x512xf32> to vector<8x128xf32>
    %cst_197 = arith.constant 5.000000e-01 : f32
    %524 = vector.broadcast %cst_197 : f32 to vector<8x128xf32>
    %525 = arith.mulf %524, %523 : vector<8x128xf32>
    %526 = math.tanh %525 : vector<8x128xf32>
    %cst_198 = arith.constant 5.000000e-01 : f32
    %527 = vector.broadcast %cst_198 : f32 to vector<8x128xf32>
    %528 = arith.mulf %527, %526 : vector<8x128xf32>
    %cst_199 = arith.constant 5.000000e-01 : f32
    %529 = vector.broadcast %cst_199 : f32 to vector<8x128xf32>
    %530 = arith.addf %528, %529 : vector<8x128xf32>
    %531 = vector.extract_strided_slice %522 {offsets = [0, 128], sizes = [8, 128], strides = [1, 1]} : vector<8x512xf32> to vector<8x128xf32>
    %cst_200 = arith.constant 5.000000e-01 : f32
    %532 = vector.broadcast %cst_200 : f32 to vector<8x128xf32>
    %533 = arith.mulf %532, %531 : vector<8x128xf32>
    %534 = math.tanh %533 : vector<8x128xf32>
    %cst_201 = arith.constant 5.000000e-01 : f32
    %535 = vector.broadcast %cst_201 : f32 to vector<8x128xf32>
    %536 = arith.mulf %535, %534 : vector<8x128xf32>
    %cst_202 = arith.constant 5.000000e-01 : f32
    %537 = vector.broadcast %cst_202 : f32 to vector<8x128xf32>
    %538 = arith.addf %536, %537 : vector<8x128xf32>
    %539 = vector.extract_strided_slice %522 {offsets = [0, 256], sizes = [8, 128], strides = [1, 1]} : vector<8x512xf32> to vector<8x128xf32>
    %540 = math.tanh %539 : vector<8x128xf32>
    %541 = vector.extract_strided_slice %522 {offsets = [0, 384], sizes = [8, 128], strides = [1, 1]} : vector<8x512xf32> to vector<8x128xf32>
    %cst_203 = arith.constant 5.000000e-01 : f32
    %542 = vector.broadcast %cst_203 : f32 to vector<8x128xf32>
    %543 = arith.mulf %542, %541 : vector<8x128xf32>
    %544 = math.tanh %543 : vector<8x128xf32>
    %cst_204 = arith.constant 5.000000e-01 : f32
    %545 = vector.broadcast %cst_204 : f32 to vector<8x128xf32>
    %546 = arith.mulf %545, %544 : vector<8x128xf32>
    %cst_205 = arith.constant 5.000000e-01 : f32
    %547 = vector.broadcast %cst_205 : f32 to vector<8x128xf32>
    %548 = arith.addf %546, %547 : vector<8x128xf32>
    %549 = arith.mulf %538, %514 : vector<8x128xf32>
    %550 = arith.mulf %530, %540 : vector<8x128xf32>
    %551 = arith.addf %549, %550 : vector<8x128xf32>
    %552 = math.tanh %551 : vector<8x128xf32>
    %553 = arith.mulf %548, %552 : vector<8x128xf32>
    %c6_i32_206 = arith.constant 6 : i32
    %c8_i32_207 = arith.constant 8 : i32
    %554 = arith.muli %c6_i32_206, %c8_i32_207 : i32
    %555 = tpu.assume_multiple %554, 8 : i32
    %556 = arith.index_cast %555 : i32 to index
    %c0_208 = arith.constant 0 : index
    %557 = vector.load %arg10[%556, %c0_208] : memref<64x512xf32, #tpu.memory_space<vmem>>, vector<8x512xf32>
    %cst_209 = arith.constant dense<0.000000e+00> : vector<8x512xf32>
    %558 = tpu.matmul %553, %329, %cst_209 {dimension_numbers = #tpu.dot_dimension_numbers<[1], [0], [0], [1], [0, 0, 1, 1], [], []>} : vector<8x128xf32>, vector<128x512xf32>, vector<8x512xf32> -> vector<8x512xf32>
    %559 = arith.addf %557, %558 : vector<8x512xf32>
    %560 = vector.extract_strided_slice %559 {offsets = [0, 0], sizes = [8, 128], strides = [1, 1]} : vector<8x512xf32> to vector<8x128xf32>
    %cst_210 = arith.constant 5.000000e-01 : f32
    %561 = vector.broadcast %cst_210 : f32 to vector<8x128xf32>
    %562 = arith.mulf %561, %560 : vector<8x128xf32>
    %563 = math.tanh %562 : vector<8x128xf32>
    %cst_211 = arith.constant 5.000000e-01 : f32
    %564 = vector.broadcast %cst_211 : f32 to vector<8x128xf32>
    %565 = arith.mulf %564, %563 : vector<8x128xf32>
    %cst_212 = arith.constant 5.000000e-01 : f32
    %566 = vector.broadcast %cst_212 : f32 to vector<8x128xf32>
    %567 = arith.addf %565, %566 : vector<8x128xf32>
    %568 = vector.extract_strided_slice %559 {offsets = [0, 128], sizes = [8, 128], strides = [1, 1]} : vector<8x512xf32> to vector<8x128xf32>
    %cst_213 = arith.constant 5.000000e-01 : f32
    %569 = vector.broadcast %cst_213 : f32 to vector<8x128xf32>
    %570 = arith.mulf %569, %568 : vector<8x128xf32>
    %571 = math.tanh %570 : vector<8x128xf32>
    %cst_214 = arith.constant 5.000000e-01 : f32
    %572 = vector.broadcast %cst_214 : f32 to vector<8x128xf32>
    %573 = arith.mulf %572, %571 : vector<8x128xf32>
    %cst_215 = arith.constant 5.000000e-01 : f32
    %574 = vector.broadcast %cst_215 : f32 to vector<8x128xf32>
    %575 = arith.addf %573, %574 : vector<8x128xf32>
    %576 = vector.extract_strided_slice %559 {offsets = [0, 256], sizes = [8, 128], strides = [1, 1]} : vector<8x512xf32> to vector<8x128xf32>
    %577 = math.tanh %576 : vector<8x128xf32>
    %578 = vector.extract_strided_slice %559 {offsets = [0, 384], sizes = [8, 128], strides = [1, 1]} : vector<8x512xf32> to vector<8x128xf32>
    %cst_216 = arith.constant 5.000000e-01 : f32
    %579 = vector.broadcast %cst_216 : f32 to vector<8x128xf32>
    %580 = arith.mulf %579, %578 : vector<8x128xf32>
    %581 = math.tanh %580 : vector<8x128xf32>
    %cst_217 = arith.constant 5.000000e-01 : f32
    %582 = vector.broadcast %cst_217 : f32 to vector<8x128xf32>
    %583 = arith.mulf %582, %581 : vector<8x128xf32>
    %cst_218 = arith.constant 5.000000e-01 : f32
    %584 = vector.broadcast %cst_218 : f32 to vector<8x128xf32>
    %585 = arith.addf %583, %584 : vector<8x128xf32>
    %586 = arith.mulf %575, %551 : vector<8x128xf32>
    %587 = arith.mulf %567, %577 : vector<8x128xf32>
    %588 = arith.addf %586, %587 : vector<8x128xf32>
    %589 = math.tanh %588 : vector<8x128xf32>
    %590 = arith.mulf %585, %589 : vector<8x128xf32>
    %c7_i32_219 = arith.constant 7 : i32
    %c8_i32_220 = arith.constant 8 : i32
    %591 = arith.muli %c7_i32_219, %c8_i32_220 : i32
    %592 = tpu.assume_multiple %591, 8 : i32
    %593 = arith.index_cast %592 : i32 to index
    %c0_221 = arith.constant 0 : index
    %594 = vector.load %arg10[%593, %c0_221] : memref<64x512xf32, #tpu.memory_space<vmem>>, vector<8x512xf32>
    %cst_222 = arith.constant dense<0.000000e+00> : vector<8x512xf32>
    %595 = tpu.matmul %590, %329, %cst_222 {dimension_numbers = #tpu.dot_dimension_numbers<[1], [0], [0], [1], [0, 0, 1, 1], [], []>} : vector<8x128xf32>, vector<128x512xf32>, vector<8x512xf32> -> vector<8x512xf32>
    %596 = arith.addf %594, %595 : vector<8x512xf32>
    %597 = vector.extract_strided_slice %596 {offsets = [0, 0], sizes = [8, 128], strides = [1, 1]} : vector<8x512xf32> to vector<8x128xf32>
    %cst_223 = arith.constant 5.000000e-01 : f32
    %598 = vector.broadcast %cst_223 : f32 to vector<8x128xf32>
    %599 = arith.mulf %598, %597 : vector<8x128xf32>
    %600 = math.tanh %599 : vector<8x128xf32>
    %cst_224 = arith.constant 5.000000e-01 : f32
    %601 = vector.broadcast %cst_224 : f32 to vector<8x128xf32>
    %602 = arith.mulf %601, %600 : vector<8x128xf32>
    %cst_225 = arith.constant 5.000000e-01 : f32
    %603 = vector.broadcast %cst_225 : f32 to vector<8x128xf32>
    %604 = arith.addf %602, %603 : vector<8x128xf32>
    %605 = vector.extract_strided_slice %596 {offsets = [0, 128], sizes = [8, 128], strides = [1, 1]} : vector<8x512xf32> to vector<8x128xf32>
    %cst_226 = arith.constant 5.000000e-01 : f32
    %606 = vector.broadcast %cst_226 : f32 to vector<8x128xf32>
    %607 = arith.mulf %606, %605 : vector<8x128xf32>
    %608 = math.tanh %607 : vector<8x128xf32>
    %cst_227 = arith.constant 5.000000e-01 : f32
    %609 = vector.broadcast %cst_227 : f32 to vector<8x128xf32>
    %610 = arith.mulf %609, %608 : vector<8x128xf32>
    %cst_228 = arith.constant 5.000000e-01 : f32
    %611 = vector.broadcast %cst_228 : f32 to vector<8x128xf32>
    %612 = arith.addf %610, %611 : vector<8x128xf32>
    %613 = vector.extract_strided_slice %596 {offsets = [0, 256], sizes = [8, 128], strides = [1, 1]} : vector<8x512xf32> to vector<8x128xf32>
    %614 = math.tanh %613 : vector<8x128xf32>
    %615 = vector.extract_strided_slice %596 {offsets = [0, 384], sizes = [8, 128], strides = [1, 1]} : vector<8x512xf32> to vector<8x128xf32>
    %cst_229 = arith.constant 5.000000e-01 : f32
    %616 = vector.broadcast %cst_229 : f32 to vector<8x128xf32>
    %617 = arith.mulf %616, %615 : vector<8x128xf32>
    %618 = math.tanh %617 : vector<8x128xf32>
    %cst_230 = arith.constant 5.000000e-01 : f32
    %619 = vector.broadcast %cst_230 : f32 to vector<8x128xf32>
    %620 = arith.mulf %619, %618 : vector<8x128xf32>
    %cst_231 = arith.constant 5.000000e-01 : f32
    %621 = vector.broadcast %cst_231 : f32 to vector<8x128xf32>
    %622 = arith.addf %620, %621 : vector<8x128xf32>
    %623 = arith.mulf %612, %588 : vector<8x128xf32>
    %624 = arith.mulf %604, %614 : vector<8x128xf32>
    %625 = arith.addf %623, %624 : vector<8x128xf32>
    %626 = math.tanh %625 : vector<8x128xf32>
    %627 = arith.mulf %622, %626 : vector<8x128xf32>
    %c8_i32_232 = arith.constant 8 : i32
    %c0_233 = arith.constant 0 : index
    %c0_234 = arith.constant 0 : index
    %628 = vector.load %arg7[%c0_233, %c0_234] : memref<128x128xf32, #tpu.memory_space<vmem>>, vector<128x128xf32>
    %cst_235 = arith.constant dense<0.000000e+00> : vector<8x128xf32>
    %629 = tpu.matmul %627, %628, %cst_235 {dimension_numbers = #tpu.dot_dimension_numbers<[1], [0], [0], [1], [0, 0, 1, 1], [], []>} : vector<8x128xf32>, vector<128x128xf32>, vector<8x128xf32> -> vector<8x128xf32>
    %c0_236 = arith.constant 0 : index
    %c0_237 = arith.constant 0 : index
    %630 = vector.load %arg8[%c0_236, %c0_237] : memref<1x128xf32, #tpu.memory_space<vmem>>, vector<1x128xf32>
    %631 = vector.broadcast %630 : vector<1x128xf32> to vector<8x128xf32>
    %632 = arith.addf %629, %631 : vector<8x128xf32>
    %c0_238 = arith.constant 0 : index
    %c0_239 = arith.constant 0 : index
    %633 = vector.load %arg9[%c0_238, %c0_239] : memref<8x128xf32, #tpu.memory_space<vmem>>, vector<8x128xf32>
    tpu.vector_store %arg9[%c0_238, %c0_239], %632 {strides = array<i32>} : memref<8x128xf32, #tpu.memory_space<vmem>>, vector<8x128xf32>,
    return
  }
}

</mosaic_0001>

<llo_original>
// kernel: simple_lstm_forward.1
$region0: #{simple_lstm_forward.1}
  #allocation0 [shape = 'u32[]', space=smem, size = 0x4, offset = 0x4, fixed_abs, tag = 'smem constant byte address 0x4 - core index']
  #allocation1 [shape = 'u32[144,128]{1,0:T(1,128)}', space=vmem, size = 0x12000, scoped, tag = 'internal scratch']
  #allocation2 [shape = 'f32[64,512]{1,0:T(8,128)}', space=vmem, size = 0x20000, scoped, tag = 'scratch operand']
  #allocation3 [shape = 'f32[64,128]{1,0:T(8,128)}', space=vmem, size = 0x8000, scoped, tag = 'scratch operand']
  %s0 = inlined_call_operand.vmem [shape: f32[64,4], index: 0, kind: input, shape index: {}]
  %s1 = inlined_call_operand.hbm [shape: f32[4,512], index: 1, kind: input, shape index: {}]
  %s2 = inlined_call_operand.hbm [shape: f32[128,512], index: 2, kind: input, shape index: {}]
  %s3 = inlined_call_operand.vmem [shape: f32[1,512], index: 3, kind: input, shape index: {}]
  %s4 = inlined_call_operand.hbm [shape: f32[128,512], index: 4, kind: input, shape index: {}]
  %s5 = inlined_call_operand.hbm [shape: f32[128,512], index: 5, kind: input, shape index: {}]
  %s6 = inlined_call_operand.vmem [shape: f32[1,512], index: 6, kind: input, shape index: {}]
  %s7 = inlined_call_operand.vmem [shape: f32[128,128], index: 7, kind: input, shape index: {}]
  %s8 = inlined_call_operand.vmem [shape: f32[1,128], index: 8, kind: input, shape index: {}]
  %s9 = inlined_call_operand.vmem [shape: f32[8,128], index: 9, kind: output, shape index: {}]
  %s10 = sld [smem:[#allocation0]]
  $region62: #{simple_lstm_forward.1} parent=0
    _
  %s12 = ssub.s32 1, %s10
  %s13 = scalar_select 0, %s12, %s10
  $region1: #{simple_lstm_forward.1} parent=0
    #allocation4 [shape = 'u8[8192]{0}', space=vmem, size = 0x2000, scoped, tag = 'input window, operand 1, single buffered']
    #allocation5 [shape = 's32[1]{0}', space=sflag, size = 0x4, scoped, tag = 'scoped memory for simple_lstm_forward.1']
    #allocation6 [shape = 'u8[262144]{0}', space=vmem, size = 0x40000, scoped, tag = 'input window, operand 2, single buffered']
    #allocation7 [shape = 's32[1]{0}', space=sflag, size = 0x4, scoped, tag = 'scoped memory for simple_lstm_forward.1']
    #allocation8 [shape = 'u8[262144]{0}', space=vmem, size = 0x40000, scoped, tag = 'input window, operand 4, single buffered']
    #allocation9 [shape = 'u8[262144]{0}', space=vmem, size = 0x40000, scoped, tag = 'input window, operand 5, single buffered']
    #allocation10 [shape = 's32[1]{0}', space=sflag, size = 0x4, scoped, tag = 'scoped memory for simple_lstm_forward.1']
    %14 = vsyncpa [#allocation5], 0
    %15 = vsyncpa [#allocation7], 0
    %16 = vsyncpa [#allocation10], 0
    // Predicated region
    $region2: #{simple_lstm_forward.1} parent=1 // pred_check
      _
    $region3: #{simple_lstm_forward.1} parent=1 // pred_check_branch
      %18 = sbr.rel (0) target = $region5
    $region4: #{simple_lstm_forward.1} parent=1 // pred_region
      _
    $region5: #{simple_lstm_forward.1} parent=1 // pred_fallthru
      _
    // Predicated region
    $region6: #{simple_lstm_forward.1} parent=1 // pred_check
      _
    $region7: #{simple_lstm_forward.1} parent=1 // pred_check_branch
      %20 = sbr.rel (0) target = $region9
    $region8: #{simple_lstm_forward.1} parent=1 // pred_region
      %s22 = ssub.s32 256, 256
      %23 = vsyncadd [#allocation5], %s22
      %s25 = sshll.u32 [#allocation4], 4
      %s26 = int_to_ptr.vmem [resolvable:$true] %s25
      %28 = dma.hbm_to_vmem [thread:$0]  %s1, 256, %s26, [#allocation5]
    $region9: #{simple_lstm_forward.1} parent=1 // pred_fallthru
      _
    // Predicated region
    $region10: #{simple_lstm_forward.1} parent=1 // pred_check
      _
    $region11: #{simple_lstm_forward.1} parent=1 // pred_check_branch
      %30 = sbr.rel (0) target = $region13
    $region12: #{simple_lstm_forward.1} parent=1 // pred_region
      %s32 = ssub.s32 8192, 8192
      %33 = vsyncadd [#allocation7], %s32
      %s34 = sshll.u32 [#allocation6], 4
      %s35 = int_to_ptr.vmem [resolvable:$true] %s34
      %40 = dma.hbm_to_vmem [thread:$0]  %s2, 8192, %s35, [#allocation7], 512, 512, 32
    $region13: #{simple_lstm_forward.1} parent=1 // pred_fallthru
      _
    // Predicated region
    $region14: #{simple_lstm_forward.1} parent=1 // pred_check
      _
    $region15: #{simple_lstm_forward.1} parent=1 // pred_check_branch
      %42 = sbr.rel (0) target = $region17
    $region16: #{simple_lstm_forward.1} parent=1 // pred_region
      _
    $region17: #{simple_lstm_forward.1} parent=1 // pred_fallthru
      _
    // Predicated region
    $region18: #{simple_lstm_forward.1} parent=1 // pred_check
      _
    $region19: #{simple_lstm_forward.1} parent=1 // pred_check_branch
      %44 = sbr.rel (0) target = $region21
    $region20: #{simple_lstm_forward.1} parent=1 // pred_region
      %s46 = ssub.s32 8192, 8192
      %47 = vsyncadd [#allocation7], %s46
      %s48 = sshll.u32 [#allocation8], 4
      %s49 = int_to_ptr.vmem [resolvable:$true] %s48
      %54 = dma.hbm_to_vmem [thread:$0]  %s4, 8192, %s49, [#allocation7], 512, 512, 32
    $region21: #{simple_lstm_forward.1} parent=1 // pred_fallthru
      _
    // Predicated region
    $region22: #{simple_lstm_forward.1} parent=1 // pred_check
      _
    $region23: #{simple_lstm_forward.1} parent=1 // pred_check_branch
      %56 = sbr.rel (0) target = $region25
    $region24: #{simple_lstm_forward.1} parent=1 // pred_region
      %s58 = ssub.s32 8192, 8192
      %59 = vsyncadd [#allocation10], %s58
      %s60 = sshll.u32 [#allocation9], 4
      %s61 = int_to_ptr.vmem [resolvable:$true] %s60
      %66 = dma.hbm_to_vmem [thread:$0]  %s5, 8192, %s61, [#allocation10], 512, 512, 32
    $region25: #{simple_lstm_forward.1} parent=1 // pred_fallthru
      _
    // Predicated region
    $region26: #{simple_lstm_forward.1} parent=1 // pred_check
      _
    $region27: #{simple_lstm_forward.1} parent=1 // pred_check_branch
      %68 = sbr.rel (0) target = $region29
    $region28: #{simple_lstm_forward.1} parent=1 // pred_region
      _
    $region29: #{simple_lstm_forward.1} parent=1 // pred_fallthru
      _
    // Predicated region
    $region30: #{simple_lstm_forward.1} parent=1 // pred_check
      _
    $region31: #{simple_lstm_forward.1} parent=1 // pred_check_branch
      %70 = sbr.rel (0) target = $region33
    $region32: #{simple_lstm_forward.1} parent=1 // pred_region
      _
    $region33: #{simple_lstm_forward.1} parent=1 // pred_fallthru
      _
    // Predicated region
    $region34: #{simple_lstm_forward.1} parent=1 // pred_check
      _
    $region35: #{simple_lstm_forward.1} parent=1 // pred_check_branch
      %72 = sbr.rel (0) target = $region37
    $region36: #{simple_lstm_forward.1} parent=1 // pred_region
      _
    $region37: #{simple_lstm_forward.1} parent=1 // pred_fallthru
      _
    // Predicated region
    $region38: #{simple_lstm_forward.1} parent=1 // pred_check
      _
    $region39: #{simple_lstm_forward.1} parent=1 // pred_check_branch
      %74 = sbr.rel (0) target = $region41
    $region40: #{simple_lstm_forward.1} parent=1 // pred_region
      %75 = dma.done [#allocation5], 256
    $region41: #{simple_lstm_forward.1} parent=1 // pred_fallthru
      _
    // Predicated region
    $region42: #{simple_lstm_forward.1} parent=1 // pred_check
      _
    $region43: #{simple_lstm_forward.1} parent=1 // pred_check_branch
      %77 = sbr.rel (0) target = $region45
    $region44: #{simple_lstm_forward.1} parent=1 // pred_region
      %78 = dma.done [#allocation7], 8192
    $region45: #{simple_lstm_forward.1} parent=1 // pred_fallthru
      _
    // Predicated region
    $region46: #{simple_lstm_forward.1} parent=1 // pred_check
      _
    $region47: #{simple_lstm_forward.1} parent=1 // pred_check_branch
      %80 = sbr.rel (0) target = $region49
    $region48: #{simple_lstm_forward.1} parent=1 // pred_region
      %81 = dma.done [#allocation7], 8192
    $region49: #{simple_lstm_forward.1} parent=1 // pred_fallthru
      _
    // Predicated region
    $region50: #{simple_lstm_forward.1} parent=1 // pred_check
      _
    $region51: #{simple_lstm_forward.1} parent=1 // pred_check_branch
      %83 = sbr.rel (0) target = $region53
    $region52: #{simple_lstm_forward.1} parent=1 // pred_region
      %84 = dma.done [#allocation10], 8192
    $region53: #{simple_lstm_forward.1} parent=1 // pred_fallthru
      _
    %v85 = vld [vmem:[%s0] sm:$0xff]
    %v86 = vld [vmem:[%s0 + $0x8] sm:$0xff]
    %v87 = vld [vmem:[%s0 + $0x10] sm:$0xff]
    %v88 = vld [vmem:[%s0 + $0x18] sm:$0xff]
    %v89 = vld [vmem:[%s0 + $0x20] sm:$0xff]
    %v90 = vld [vmem:[%s0 + $0x28] sm:$0xff]
    %v91 = vld [vmem:[%s0 + $0x30] sm:$0xff]
    %v92 = vld [vmem:[%s0 + $0x38] sm:$0xff]
    %v93 = vld [vmem:[#allocation4] sm:$0xff]
    %v94 = vld [vmem:[#allocation4 + $0x8] sm:$0xff]
    %v95 = vld [vmem:[%s3] sm:$0xf]
    %v97 = vlaneseq
    %v98 = vshrl.u32 %v97, 7
    %v99 = vsub.s32 0, %v98
    %v100 = vrot.slane %v95, %v99
    %v101 = vlaneseq
    %v102 = vshrl.u32 %v101, 7
    %v103 = vsub.s32 1, %v102
    %v104 = vrot.slane %v95, %v103
    %v105 = vlaneseq
    %v106 = vshrl.u32 %v105, 7
    %v107 = vsub.s32 2, %v106
    %v108 = vrot.slane %v95, %v107
    %v109 = vlaneseq
    %v110 = vshrl.u32 %v109, 7
    %v111 = vsub.s32 3, %v110
    %v112 = vrot.slane %v95, %v111
    %v119 = vcombine.high %v93, %v93
    %v120 = vcombine.high %v94, %v94
    %vm121 = vcmask 31744
    %v123 = vsel %vm121, %v85, 0
    %v126 = vsel %vm121, %v86, 0
    %v129 = vsel %vm121, %v87, 0
    %v132 = vsel %vm121, %v88, 0
    %v135 = vsel %vm121, %v89, 0
    %v138 = vsel %vm121, %v90, 0
    %v141 = vsel %vm121, %v91, 0
    %v144 = vsel %vm121, %v92, 0
    %vm146 = vcmask 1043456
    %v147 = vsel %vm146, %v93, 0
    %v149 = vsel %vm146, %v119, 0
    %v151 = vsel %vm146, %v94, 0
    %v153 = vsel %vm146, %v120, 0
    %155 = vmatprep.subr.mxu0 %v149
    %156 = vmatpush1.msra.mxu0 %v147
    %157 = vmatprep.subr.mxu0 0.0
    %158 = vmatpush1.msra.mxu0 0.0
    %159 = vmatprep.subr.mxu0 0.0
    %160 = vmatpush1.msra.mxu0 0.0
    %161 = vmatprep.subr.mxu0 0.0
    %162 = vmatpush1.msra.mxu0 0.0
    %163 = vmatprep.subr.mxu0 0.0
    %164 = vmatpush1.msra.mxu0 0.0
    %165 = vmatprep.subr.mxu0 0.0
    %166 = vmatpush1.msra.mxu0 0.0
    %167 = vmatprep.subr.mxu0 0.0
    %168 = vmatpush1.msra.mxu0 0.0
    %169 = vmatprep.subr.mxu0 0.0
    %170 = vmatpush1.msra.mxu0 0.0
    %171 = vmatprep.subr.mxu0 0.0
    %172 = vmatpush1.msra.mxu0 0.0
    %173 = vmatprep.subr.mxu0 0.0
    %174 = vmatpush1.msra.mxu0 0.0
    %175 = vmatprep.subr.mxu0 0.0
    %176 = vmatpush1.msra.mxu0 0.0
    %177 = vmatprep.subr.mxu0 0.0
    %178 = vmatpush1.msra.mxu0 0.0
    %179 = vmatprep.subr.mxu0 0.0
    %180 = vmatpush1.msra.mxu0 0.0
    %181 = vmatprep.subr.mxu0 0.0
    %182 = vmatpush1.msra.mxu0 0.0
    %183 = vmatprep.subr.mxu0 0.0
    %184 = vmatpush1.msra.mxu0 0.0
    %185 = vmatprep.subr.mxu0 0.0
    %186 = vmatpush1.msra.mxu0 0.0
    %187 = vmatprep.subr.mxu0 0.0
    %188 = vmatpush1.msra.mxu0 0.0
    %189 = vmatprep.subr.mxu0 0.0
    %190 = vmatpush1.msra.mxu0 0.0
    %191 = vmatprep.subr.mxu0 0.0
    %192 = vmatpush1.msra.mxu0 0.0
    %193 = vmatprep.subr.mxu0 0.0
    %194 = vmatpush1.msra.mxu0 0.0
    %195 = vmatprep.subr.mxu0 0.0
    %196 = vmatpush1.msra.mxu0 0.0
    %197 = vmatprep.subr.mxu0 0.0
    %198 = vmatpush1.msra.mxu0 0.0
    %199 = vmatprep.subr.mxu0 0.0
    %200 = vmatpush1.msra.mxu0 0.0
    %201 = vmatprep.subr.mxu0 0.0
    %202 = vmatpush1.msra.mxu0 0.0
    %203 = vmatprep.subr.mxu0 0.0
    %204 = vmatpush1.msra.mxu0 0.0
    %205 = vmatprep.subr.mxu0 0.0
    %206 = vmatpush1.msra.mxu0 0.0
    %207 = vmatprep.subr.mxu0 0.0
    %208 = vmatpush1.msra.mxu0 0.0
    %209 = vmatprep.subr.mxu0 0.0
    %210 = vmatpush1.msra.mxu0 0.0
    %211 = vmatprep.subr.mxu0 0.0
    %212 = vmatpush1.msra.mxu0 0.0
    %213 = vmatprep.subr.mxu0 0.0
    %214 = vmatpush1.msra.mxu0 0.0
    %215 = vmatprep.subr.mxu0 0.0
    %216 = vmatpush1.msra.mxu0 0.0
    %217 = vmatprep.subr.mxu0 0.0
    %218 = vmatpush1.msra.mxu0 0.0
    %219 = vmatprep.mubr.f32.mxu0 0.0
    %220 = vmatmul.mubr.f32.gmra.mrb[0].mxu0 %v123
    %v221 = vpop.f32.mrb[0].mxu0
    %v222 = vadd.f32 %v100, %v221
    %v223 = vpop.f32.mrb[0].mxu0
    %v224 = vadd.f32 %v104, %v223
    %225 = vmatprep.mubr.f32.mxu0 0.0
    %226 = vmatmul.mubr.f32.gmra.mrb[0].mxu0 %v126
    %v227 = vpop.f32.mrb[0].mxu0
    %v228 = vadd.f32 %v100, %v227
    %v229 = vpop.f32.mrb[0].mxu0
    %v230 = vadd.f32 %v104, %v229
    %231 = vmatprep.mubr.f32.mxu0 0.0
    %232 = vmatmul.mubr.f32.gmra.mrb[0].mxu0 %v129
    %v233 = vpop.f32.mrb[0].mxu0
    %v234 = vadd.f32 %v100, %v233
    %v235 = vpop.f32.mrb[0].mxu0
    %v236 = vadd.f32 %v104, %v235
    %237 = vmatprep.mubr.f32.mxu0 0.0
    %238 = vmatmul.mubr.f32.gmra.mrb[0].mxu0 %v132
    %v239 = vpop.f32.mrb[0].mxu0
    %v240 = vadd.f32 %v100, %v239
    %v241 = vpop.f32.mrb[0].mxu0
    %v242 = vadd.f32 %v104, %v241
    %243 = vmatprep.mubr.f32.mxu0 0.0
    %244 = vmatmul.mubr.f32.gmra.mrb[0].mxu0 %v135
    %v245 = vpop.f32.mrb[0].mxu0
    %v246 = vadd.f32 %v100, %v245
    %v247 = vpop.f32.mrb[0].mxu0
    %v248 = vadd.f32 %v104, %v247
    %249 = vmatprep.mubr.f32.mxu0 0.0
    %250 = vmatmul.mubr.f32.gmra.mrb[0].mxu0 %v138
    %v251 = vpop.f32.mrb[0].mxu0
    %v252 = vadd.f32 %v100, %v251
    %v253 = vpop.f32.mrb[0].mxu0
    %v254 = vadd.f32 %v104, %v253
    %255 = vmatprep.mubr.f32.mxu0 0.0
    %256 = vmatmul.mubr.f32.gmra.mrb[0].mxu0 %v141
    %v257 = vpop.f32.mrb[0].mxu0
    %v258 = vadd.f32 %v100, %v257
    %v259 = vpop.f32.mrb[0].mxu0
    %v260 = vadd.f32 %v104, %v259
    %261 = vmatprep.mubr.f32.mxu0 0.0
    %262 = vmatmul.mubr.f32.gmra.mrb[0].mxu0 %v144
    %v263 = vpop.f32.mrb[0].mxu0
    %v264 = vadd.f32 %v100, %v263
    %v265 = vpop.f32.mrb[0].mxu0
    %v266 = vadd.f32 %v104, %v265
    %267 = vdwg.mxu0
    %268 = vmatprep.subr.mxu0 %v153
    %269 = vmatpush1.msra.mxu0 %v151
    %270 = vmatprep.subr.mxu0 0.0
    %271 = vmatpush1.msra.mxu0 0.0
    %272 = vmatprep.subr.mxu0 0.0
    %273 = vmatpush1.msra.mxu0 0.0
    %274 = vmatprep.subr.mxu0 0.0
    %275 = vmatpush1.msra.mxu0 0.0
    %276 = vmatprep.subr.mxu0 0.0
    %277 = vmatpush1.msra.mxu0 0.0
    %278 = vmatprep.subr.mxu0 0.0
    %279 = vmatpush1.msra.mxu0 0.0
    %280 = vmatprep.subr.mxu0 0.0
    %281 = vmatpush1.msra.mxu0 0.0
    %282 = vmatprep.subr.mxu0 0.0
    %283 = vmatpush1.msra.mxu0 0.0
    %284 = vmatprep.subr.mxu0 0.0
    %285 = vmatpush1.msra.mxu0 0.0
    %286 = vmatprep.subr.mxu0 0.0
    %287 = vmatpush1.msra.mxu0 0.0
    %288 = vmatprep.subr.mxu0 0.0
    %289 = vmatpush1.msra.mxu0 0.0
    %290 = vmatprep.subr.mxu0 0.0
    %291 = vmatpush1.msra.mxu0 0.0
    %292 = vmatprep.subr.mxu0 0.0
    %293 = vmatpush1.msra.mxu0 0.0
    %294 = vmatprep.subr.mxu0 0.0
    %295 = vmatpush1.msra.mxu0 0.0
    %296 = vmatprep.subr.mxu0 0.0
    %297 = vmatpush1.msra.mxu0 0.0
    %298 = vmatprep.subr.mxu0 0.0
    %299 = vmatpush1.msra.mxu0 0.0
    %300 = vmatprep.subr.mxu0 0.0
    %301 = vmatpush1.msra.mxu0 0.0
    %302 = vmatprep.subr.mxu0 0.0
    %303 = vmatpush1.msra.mxu0 0.0
    %304 = vmatprep.subr.mxu0 0.0
    %305 = vmatpush1.msra.mxu0 0.0
    %306 = vmatprep.subr.mxu0 0.0
    %307 = vmatpush1.msra.mxu0 0.0
    %308 = vmatprep.subr.mxu0 0.0
    %309 = vmatpush1.msra.mxu0 0.0
    %310 = vmatprep.subr.mxu0 0.0
    %311 = vmatpush1.msra.mxu0 0.0
    %312 = vmatprep.subr.mxu0 0.0
    %313 = vmatpush1.msra.mxu0 0.0
    %314 = vmatprep.subr.mxu0 0.0
    %315 = vmatpush1.msra.mxu0 0.0
    %316 = vmatprep.subr.mxu0 0.0
    %317 = vmatpush1.msra.mxu0 0.0
    %318 = vmatprep.subr.mxu0 0.0
    %319 = vmatpush1.msra.mxu0 0.0
    %320 = vmatprep.subr.mxu0 0.0
    %321 = vmatpush1.msra.mxu0 0.0
    %322 = vmatprep.subr.mxu0 0.0
    %323 = vmatpush1.msra.mxu0 0.0
    %324 = vmatprep.subr.mxu0 0.0
    %325 = vmatpush1.msra.mxu0 0.0
    %326 = vmatprep.subr.mxu0 0.0
    %327 = vmatpush1.msra.mxu0 0.0
    %328 = vmatprep.subr.mxu0 0.0
    %329 = vmatpush1.msra.mxu0 0.0
    %330 = vmatprep.subr.mxu0 0.0
    %331 = vmatpush1.msra.mxu0 0.0
    %332 = vmatprep.mubr.f32.mxu0 0.0
    %333 = vmatmul.mubr.f32.gmra.mrb[0].mxu0 %v123
    %v334 = vpop.f32.mrb[0].mxu0
    %v335 = vadd.f32 %v108, %v334
    %v336 = vpop.f32.mrb[0].mxu0
    %v337 = vadd.f32 %v112, %v336
    %338 = vmatprep.mubr.f32.mxu0 0.0
    %339 = vmatmul.mubr.f32.gmra.mrb[0].mxu0 %v126
    %v340 = vpop.f32.mrb[0].mxu0
    %v341 = vadd.f32 %v108, %v340
    %v342 = vpop.f32.mrb[0].mxu0
    %v343 = vadd.f32 %v112, %v342
    %344 = vmatprep.mubr.f32.mxu0 0.0
    %345 = vmatmul.mubr.f32.gmra.mrb[0].mxu0 %v129
    %v346 = vpop.f32.mrb[0].mxu0
    %v347 = vadd.f32 %v108, %v346
    %v348 = vpop.f32.mrb[0].mxu0
    %v349 = vadd.f32 %v112, %v348
    %350 = vmatprep.mubr.f32.mxu0 0.0
    %351 = vmatmul.mubr.f32.gmra.mrb[0].mxu0 %v132
    %v352 = vpop.f32.mrb[0].mxu0
    %v353 = vadd.f32 %v108, %v352
    %v354 = vpop.f32.mrb[0].mxu0
    %v355 = vadd.f32 %v112, %v354
    %356 = vmatprep.mubr.f32.mxu0 0.0
    %357 = vmatmul.mubr.f32.gmra.mrb[0].mxu0 %v135
    %v358 = vpop.f32.mrb[0].mxu0
    %v359 = vadd.f32 %v108, %v358
    %v360 = vpop.f32.mrb[0].mxu0
    %v361 = vadd.f32 %v112, %v360
    %362 = vmatprep.mubr.f32.mxu0 0.0
    %363 = vmatmul.mubr.f32.gmra.mrb[0].mxu0 %v138
    %v364 = vpop.f32.mrb[0].mxu0
    %v365 = vadd.f32 %v108, %v364
    %v366 = vpop.f32.mrb[0].mxu0
    %v367 = vadd.f32 %v112, %v366
    %368 = vmatprep.mubr.f32.mxu0 0.0
    %369 = vmatmul.mubr.f32.gmra.mrb[0].mxu0 %v141
    %v370 = vpop.f32.mrb[0].mxu0
    %v371 = vadd.f32 %v108, %v370
    %v372 = vpop.f32.mrb[0].mxu0
    %v373 = vadd.f32 %v112, %v372
    %374 = vmatprep.mubr.f32.mxu0 0.0
    %375 = vmatmul.mubr.f32.gmra.mrb[0].mxu0 %v144
    %v376 = vpop.f32.mrb[0].mxu0
    %v377 = vadd.f32 %v108, %v376
    %v378 = vpop.f32.mrb[0].mxu0
    %v379 = vadd.f32 %v112, %v378
    %380 = vdwg.mxu0
    %381 = vst [vmem:[#allocation2] sm:$0xff] %v222
    %382 = vst [vmem:[#allocation2 + $0x8] sm:$0xff] %v224
    %383 = vst [vmem:[#allocation2 + $0x10] sm:$0xff] %v335
    %384 = vst [vmem:[#allocation2 + $0x18] sm:$0xff] %v337
    %385 = vst [vmem:[#allocation2 + $0x20] sm:$0xff] %v228
    %386 = vst [vmem:[#allocation2 + $0x28] sm:$0xff] %v230
    %387 = vst [vmem:[#allocation2 + $0x30] sm:$0xff] %v341
    %388 = vst [vmem:[#allocation2 + $0x38] sm:$0xff] %v343
    %389 = vst [vmem:[#allocation2 + $0x40] sm:$0xff] %v234
    %390 = vst [vmem:[#allocation2 + $0x48] sm:$0xff] %v236
    %391 = vst [vmem:[#allocation2 + $0x50] sm:$0xff] %v347
    %392 = vst [vmem:[#allocation2 + $0x58] sm:$0xff] %v349
    %393 = vst [vmem:[#allocation2 + $0x60] sm:$0xff] %v240
    %394 = vst [vmem:[#allocation2 + $0x68] sm:$0xff] %v242
    %395 = vst [vmem:[#allocation2 + $0x70] sm:$0xff] %v353
    %396 = vst [vmem:[#allocation2 + $0x78] sm:$0xff] %v355
    %397 = vst [vmem:[#allocation2 + $0x80] sm:$0xff] %v246
    %398 = vst [vmem:[#allocation2 + $0x88] sm:$0xff] %v248
    %399 = vst [vmem:[#allocation2 + $0x90] sm:$0xff] %v359
    %400 = vst [vmem:[#allocation2 + $0x98] sm:$0xff] %v361
    %401 = vst [vmem:[#allocation2 + $0xa0] sm:$0xff] %v252
    %402 = vst [vmem:[#allocation2 + $0xa8] sm:$0xff] %v254
    %403 = vst [vmem:[#allocation2 + $0xb0] sm:$0xff] %v365
    %404 = vst [vmem:[#allocation2 + $0xb8] sm:$0xff] %v367
    %405 = vst [vmem:[#allocation2 + $0xc0] sm:$0xff] %v258
    %406 = vst [vmem:[#allocation2 + $0xc8] sm:$0xff] %v260
    %407 = vst [vmem:[#allocation2 + $0xd0] sm:$0xff] %v371
    %408 = vst [vmem:[#allocation2 + $0xd8] sm:$0xff] %v373
    %409 = vst [vmem:[#allocation2 + $0xe0] sm:$0xff] %v264
    %410 = vst [vmem:[#allocation2 + $0xe8] sm:$0xff] %v266
    %411 = vst [vmem:[#allocation2 + $0xf0] sm:$0xff] %v377
    %412 = vst [vmem:[#allocation2 + $0xf8] sm:$0xff] %v379
    %v413 = vld [vmem:[#allocation6] sm:$0xff]
    %v414 = vld [vmem:[#allocation6 + $0x8] sm:$0xff]
    %v415 = vld [vmem:[#allocation6 + $0x10] sm:$0xff]
    %v416 = vld [vmem:[#allocation6 + $0x18] sm:$0xff]
    %v417 = vld [vmem:[#allocation6 + $0x20] sm:$0xff]
    %v418 = vld [vmem:[#allocation6 + $0x28] sm:$0xff]
    %v419 = vld [vmem:[#allocation6 + $0x30] sm:$0xff]
    %v420 = vld [vmem:[#allocation6 + $0x38] sm:$0xff]
    %v421 = vld [vmem:[#allocation6 + $0x40] sm:$0xff]
    %v422 = vld [vmem:[#allocation6 + $0x48] sm:$0xff]
    %v423 = vld [vmem:[#allocation6 + $0x50] sm:$0xff]
    %v424 = vld [vmem:[#allocation6 + $0x58] sm:$0xff]
    %v425 = vld [vmem:[#allocation6 + $0x60] sm:$0xff]
    %v426 = vld [vmem:[#allocation6 + $0x68] sm:$0xff]
    %v427 = vld [vmem:[#allocation6 + $0x70] sm:$0xff]
    %v428 = vld [vmem:[#allocation6 + $0x78] sm:$0xff]
    %v429 = vld [vmem:[#allocation6 + $0x80] sm:$0xff]
    %v430 = vld [vmem:[#allocation6 + $0x88] sm:$0xff]
    %v431 = vld [vmem:[#allocation6 + $0x90] sm:$0xff]
    %v432 = vld [vmem:[#allocation6 + $0x98] sm:$0xff]
    %v433 = vld [vmem:[#allocation6 + $0xa0] sm:$0xff]
    %v434 = vld [vmem:[#allocation6 + $0xa8] sm:$0xff]
    %v435 = vld [vmem:[#allocation6 + $0xb0] sm:$0xff]
    %v436 = vld [vmem:[#allocation6 + $0xb8] sm:$0xff]
    %v437 = vld [vmem:[#allocation6 + $0xc0] sm:$0xff]
    %v438 = vld [vmem:[#allocation6 + $0xc8] sm:$0xff]
    %v439 = vld [vmem:[#allocation6 + $0xd0] sm:$0xff]
    %v440 = vld [vmem:[#allocation6 + $0xd8] sm:$0xff]
    %v441 = vld [vmem:[#allocation6 + $0xe0] sm:$0xff]
    %v442 = vld [vmem:[#allocation6 + $0xe8] sm:$0xff]
    %v443 = vld [vmem:[#allocation6 + $0xf0] sm:$0xff]
    %v444 = vld [vmem:[#allocation6 + $0xf8] sm:$0xff]
    %v445 = vld [vmem:[#allocation6 + $0x100] sm:$0xff]
    %v446 = vld [vmem:[#allocation6 + $0x108] sm:$0xff]
    %v447 = vld [vmem:[#allocation6 + $0x110] sm:$0xff]
    %v448 = vld [vmem:[#allocation6 + $0x118] sm:$0xff]
    %v449 = vld [vmem:[#allocation6 + $0x120] sm:$0xff]
    %v450 = vld [vmem:[#allocation6 + $0x128] sm:$0xff]
    %v451 = vld [vmem:[#allocation6 + $0x130] sm:$0xff]
    %v452 = vld [vmem:[#allocation6 + $0x138] sm:$0xff]
    %v453 = vld [vmem:[#allocation6 + $0x140] sm:$0xff]
    %v454 = vld [vmem:[#allocation6 + $0x148] sm:$0xff]
    %v455 = vld [vmem:[#allocation6 + $0x150] sm:$0xff]
    %v456 = vld [vmem:[#allocation6 + $0x158] sm:$0xff]
    %v457 = vld [vmem:[#allocation6 + $0x160] sm:$0xff]
    %v458 = vld [vmem:[#allocation6 + $0x168] sm:$0xff]
    %v459 = vld [vmem:[#allocation6 + $0x170] sm:$0xff]
    %v460 = vld [vmem:[#allocation6 + $0x178] sm:$0xff]
    %v461 = vld [vmem:[#allocation6 + $0x180] sm:$0xff]
    %v462 = vld [vmem:[#allocation6 + $0x188] sm:$0xff]
    %v463 = vld [vmem:[#allocation6 + $0x190] sm:$0xff]
    %v464 = vld [vmem:[#allocation6 + $0x198] sm:$0xff]
    %v465 = vld [vmem:[#allocation6 + $0x1a0] sm:$0xff]
    %v466 = vld [vmem:[#allocation6 + $0x1a8] sm:$0xff]
    %v467 = vld [vmem:[#allocation6 + $0x1b0] sm:$0xff]
    %v468 = vld [vmem:[#allocation6 + $0x1b8] sm:$0xff]
    %v469 = vld [vmem:[#allocation6 + $0x1c0] sm:$0xff]
    %v470 = vld [vmem:[#allocation6 + $0x1c8] sm:$0xff]
    %v471 = vld [vmem:[#allocation6 + $0x1d0] sm:$0xff]
    %v472 = vld [vmem:[#allocation6 + $0x1d8] sm:$0xff]
    %v473 = vld [vmem:[#allocation6 + $0x1e0] sm:$0xff]
    %v474 = vld [vmem:[#allocation6 + $0x1e8] sm:$0xff]
    %v475 = vld [vmem:[#allocation6 + $0x1f0] sm:$0xff]
    %v476 = vld [vmem:[#allocation6 + $0x1f8] sm:$0xff]
    %s477 = smul.u32 0, 4
    %s478 = smul.addr %s477, 8
    %s479 = scalar_lea.vmem [#allocation2], %s478
    %v480 = vld [vmem:[%s479] sm:$0xff]
    %v481 = vld [vmem:[%s479 + $0x8] sm:$0xff]
    %v482 = vld [vmem:[%s479 + $0x10] sm:$0xff]
    %v483 = vld [vmem:[%s479 + $0x18] sm:$0xff]
    %484 = vmatprep.subr.mxu0 %v414
    %485 = vmatpush1.msra.mxu0 %v413
    %486 = vmatprep.subr.mxu0 %v418
    %487 = vmatpush1.msra.mxu0 %v417
    %488 = vmatprep.subr.mxu0 %v422
    %489 = vmatpush1.msra.mxu0 %v421
    %490 = vmatprep.subr.mxu0 %v426
    %491 = vmatpush1.msra.mxu0 %v425
    %492 = vmatprep.subr.mxu0 %v430
    %493 = vmatpush1.msra.mxu0 %v429
    %494 = vmatprep.subr.mxu0 %v434
    %495 = vmatpush1.msra.mxu0 %v433
    %496 = vmatprep.subr.mxu0 %v438
    %497 = vmatpush1.msra.mxu0 %v437
    %498 = vmatprep.subr.mxu0 %v442
    %499 = vmatpush1.msra.mxu0 %v441
    %500 = vmatprep.subr.mxu0 %v446
    %501 = vmatpush1.msra.mxu0 %v445
    %502 = vmatprep.subr.mxu0 %v450
    %503 = vmatpush1.msra.mxu0 %v449
    %504 = vmatprep.subr.mxu0 %v454
    %505 = vmatpush1.msra.mxu0 %v453
    %506 = vmatprep.subr.mxu0 %v458
    %507 = vmatpush1.msra.mxu0 %v457
    %508 = vmatprep.subr.mxu0 %v462
    %509 = vmatpush1.msra.mxu0 %v461
    %510 = vmatprep.subr.mxu0 %v466
    %511 = vmatpush1.msra.mxu0 %v465
    %512 = vmatprep.subr.mxu0 %v470
    %513 = vmatpush1.msra.mxu0 %v469
    %514 = vmatprep.subr.mxu0 %v474
    %515 = vmatpush1.msra.mxu0 %v473
    %516 = vmatprep.subr.mxu0 0.0
    %517 = vmatpush1.msra.mxu0 0.0
    %518 = vmatprep.subr.mxu0 0.0
    %519 = vmatpush1.msra.mxu0 0.0
    %520 = vmatprep.subr.mxu0 0.0
    %521 = vmatpush1.msra.mxu0 0.0
    %522 = vmatprep.subr.mxu0 0.0
    %523 = vmatpush1.msra.mxu0 0.0
    %524 = vmatprep.subr.mxu0 0.0
    %525 = vmatpush1.msra.mxu0 0.0
    %526 = vmatprep.subr.mxu0 0.0
    %527 = vmatpush1.msra.mxu0 0.0
    %528 = vmatprep.subr.mxu0 0.0
    %529 = vmatpush1.msra.mxu0 0.0
    %530 = vmatprep.subr.mxu0 0.0
    %531 = vmatpush1.msra.mxu0 0.0
    %532 = vmatprep.subr.mxu0 0.0
    %533 = vmatpush1.msra.mxu0 0.0
    %534 = vmatprep.subr.mxu0 0.0
    %535 = vmatpush1.msra.mxu0 0.0
    %536 = vmatprep.subr.mxu0 0.0
    %537 = vmatpush1.msra.mxu0 0.0
    %538 = vmatprep.subr.mxu0 0.0
    %539 = vmatpush1.msra.mxu0 0.0
    %540 = vmatprep.subr.mxu0 0.0
    %541 = vmatpush1.msra.mxu0 0.0
    %542 = vmatprep.subr.mxu0 0.0
    %543 = vmatpush1.msra.mxu0 0.0
    %544 = vmatprep.subr.mxu0 0.0
    %545 = vmatpush1.msra.mxu0 0.0
    %546 = vmatprep.subr.mxu0 0.0
    %547 = vmatpush1.msra.mxu0 0.0
    %548 = vmatprep.mubr.f32.mxu0 0.0
    %549 = vmatmul.mubr.f32.gmra.mrb[0].mxu0 0.0
    %v550 = vpop.f32.mrb[0].mxu0
    %v551 = vadd.f32 0.0, %v550
    %v552 = vpop.f32.mrb[0].mxu0
    %v553 = vadd.f32 0.0, %v552
    %554 = vdwg.mxu0
    %555 = vmatprep.subr.mxu0 %v416
    %556 = vmatpush1.msra.mxu0 %v415
    %557 = vmatprep.subr.mxu0 %v420
    %558 = vmatpush1.msra.mxu0 %v419
    %559 = vmatprep.subr.mxu0 %v424
    %560 = vmatpush1.msra.mxu0 %v423
    %561 = vmatprep.subr.mxu0 %v428
    %562 = vmatpush1.msra.mxu0 %v427
    %563 = vmatprep.subr.mxu0 %v432
    %564 = vmatpush1.msra.mxu0 %v431
    %565 = vmatprep.subr.mxu0 %v436
    %566 = vmatpush1.msra.mxu0 %v435
    %567 = vmatprep.subr.mxu0 %v440
    %568 = vmatpush1.msra.mxu0 %v439
    %569 = vmatprep.subr.mxu0 %v444
    %570 = vmatpush1.msra.mxu0 %v443
    %571 = vmatprep.subr.mxu0 %v448
    %572 = vmatpush1.msra.mxu0 %v447
    %573 = vmatprep.subr.mxu0 %v452
    %574 = vmatpush1.msra.mxu0 %v451
    %575 = vmatprep.subr.mxu0 %v456
    %576 = vmatpush1.msra.mxu0 %v455
    %577 = vmatprep.subr.mxu0 %v460
    %578 = vmatpush1.msra.mxu0 %v459
    %579 = vmatprep.subr.mxu0 %v464
    %580 = vmatpush1.msra.mxu0 %v463
    %581 = vmatprep.subr.mxu0 %v468
    %582 = vmatpush1.msra.mxu0 %v467
    %583 = vmatprep.subr.mxu0 %v472
    %584 = vmatpush1.msra.mxu0 %v471
    %585 = vmatprep.subr.mxu0 %v476
    %586 = vmatpush1.msra.mxu0 %v475
    %587 = vmatprep.subr.mxu0 0.0
    %588 = vmatpush1.msra.mxu0 0.0
    %589 = vmatprep.subr.mxu0 0.0
    %590 = vmatpush1.msra.mxu0 0.0
    %591 = vmatprep.subr.mxu0 0.0
    %592 = vmatpush1.msra.mxu0 0.0
    %593 = vmatprep.subr.mxu0 0.0
    %594 = vmatpush1.msra.mxu0 0.0
    %595 = vmatprep.subr.mxu0 0.0
    %596 = vmatpush1.msra.mxu0 0.0
    %597 = vmatprep.subr.mxu0 0.0
    %598 = vmatpush1.msra.mxu0 0.0
    %599 = vmatprep.subr.mxu0 0.0
    %600 = vmatpush1.msra.mxu0 0.0
    %601 = vmatprep.subr.mxu0 0.0
    %602 = vmatpush1.msra.mxu0 0.0
    %603 = vmatprep.subr.mxu0 0.0
    %604 = vmatpush1.msra.mxu0 0.0
    %605 = vmatprep.subr.mxu0 0.0
    %606 = vmatpush1.msra.mxu0 0.0
    %607 = vmatprep.subr.mxu0 0.0
    %608 = vmatpush1.msra.mxu0 0.0
    %609 = vmatprep.subr.mxu0 0.0
    %610 = vmatpush1.msra.mxu0 0.0
    %611 = vmatprep.subr.mxu0 0.0
    %612 = vmatpush1.msra.mxu0 0.0
    %613 = vmatprep.subr.mxu0 0.0
    %614 = vmatpush1.msra.mxu0 0.0
    %615 = vmatprep.subr.mxu0 0.0
    %616 = vmatpush1.msra.mxu0 0.0
    %617 = vmatprep.subr.mxu0 0.0
    %618 = vmatpush1.msra.mxu0 0.0
    %619 = vmatprep.mubr.f32.mxu0 0.0
    %620 = vmatmul.mubr.f32.gmra.mrb[0].mxu0 0.0
    %v621 = vpop.f32.mrb[0].mxu0
    %v622 = vadd.f32 0.0, %v621
    %v623 = vpop.f32.mrb[0].mxu0
    %v624 = vadd.f32 0.0, %v623
    %625 = vdwg.mxu0
    %v626 = vadd.f32 %v480, %v551
    %v627 = vadd.f32 %v481, %v553
    %v628 = vadd.f32 %v482, %v622
    %v629 = vadd.f32 %v483, %v624
    %v630 = vmul.f32 %v626, 0.5
    %v631 = vtanh.pop %v630
    %v632 = vmul.f32 %v631, 0.5
    %v633 = vadd.f32 %v632, 0.5
    %v634 = vmul.f32 %v627, 0.5
    %v635 = vtanh.pop %v634
    %v636 = vmul.f32 %v635, 0.5
    %v637 = vadd.f32 %v636, 0.5
    %v638 = vtanh.pop %v628
    %v639 = vmul.f32 %v629, 0.5
    %v640 = vtanh.pop %v639
    %v641 = vmul.f32 %v640, 0.5
    %v642 = vadd.f32 %v641, 0.5
    %v643 = vmul.f32 %v637, 0.0
    %v644 = vmul.f32 %v633, %v638
    %v645 = vadd.f32 %v643, %v644
    %v646 = vtanh.pop %v645
    %v647 = vmul.f32 %v642, %v646
    %648 = vst [vmem:[#allocation3] sm:$0xff] %v647
    %s649 = smul.u32 1, 4
    %s650 = smul.addr %s649, 8
    %s651 = scalar_lea.vmem [#allocation2], %s650
    %v652 = vld [vmem:[%s651] sm:$0xff]
    %v653 = vld [vmem:[%s651 + $0x8] sm:$0xff]
    %v654 = vld [vmem:[%s651 + $0x10] sm:$0xff]
    %v655 = vld [vmem:[%s651 + $0x18] sm:$0xff]
    %656 = vmatprep.subr.mxu0 %v414
    %657 = vmatpush1.msra.mxu0 %v413
    %658 = vmatprep.subr.mxu0 %v418
    %659 = vmatpush1.msra.mxu0 %v417
    %660 = vmatprep.subr.mxu0 %v422
    %661 = vmatpush1.msra.mxu0 %v421
    %662 = vmatprep.subr.mxu0 %v426
    %663 = vmatpush1.msra.mxu0 %v425
    %664 = vmatprep.subr.mxu0 %v430
    %665 = vmatpush1.msra.mxu0 %v429
    %666 = vmatprep.subr.mxu0 %v434
    %667 = vmatpush1.msra.mxu0 %v433
    %668 = vmatprep.subr.mxu0 %v438
    %669 = vmatpush1.msra.mxu0 %v437
    %670 = vmatprep.subr.mxu0 %v442
    %671 = vmatpush1.msra.mxu0 %v441
    %672 = vmatprep.subr.mxu0 %v446
    %673 = vmatpush1.msra.mxu0 %v445
    %674 = vmatprep.subr.mxu0 %v450
    %675 = vmatpush1.msra.mxu0 %v449
    %676 = vmatprep.subr.mxu0 %v454
    %677 = vmatpush1.msra.mxu0 %v453
    %678 = vmatprep.subr.mxu0 %v458
    %679 = vmatpush1.msra.mxu0 %v457
    %680 = vmatprep.subr.mxu0 %v462
    %681 = vmatpush1.msra.mxu0 %v461
    %682 = vmatprep.subr.mxu0 %v466
    %683 = vmatpush1.msra.mxu0 %v465
    %684 = vmatprep.subr.mxu0 %v470
    %685 = vmatpush1.msra.mxu0 %v469
    %686 = vmatprep.subr.mxu0 %v474
    %687 = vmatpush1.msra.mxu0 %v473
    %688 = vmatprep.subr.mxu0 0.0
    %689 = vmatpush1.msra.mxu0 0.0
    %690 = vmatprep.subr.mxu0 0.0
    %691 = vmatpush1.msra.mxu0 0.0
    %692 = vmatprep.subr.mxu0 0.0
    %693 = vmatpush1.msra.mxu0 0.0
    %694 = vmatprep.subr.mxu0 0.0
    %695 = vmatpush1.msra.mxu0 0.0
    %696 = vmatprep.subr.mxu0 0.0
    %697 = vmatpush1.msra.mxu0 0.0
    %698 = vmatprep.subr.mxu0 0.0
    %699 = vmatpush1.msra.mxu0 0.0
    %700 = vmatprep.subr.mxu0 0.0
    %701 = vmatpush1.msra.mxu0 0.0
    %702 = vmatprep.subr.mxu0 0.0
    %703 = vmatpush1.msra.mxu0 0.0
    %704 = vmatprep.subr.mxu0 0.0
    %705 = vmatpush1.msra.mxu0 0.0
    %706 = vmatprep.subr.mxu0 0.0
    %707 = vmatpush1.msra.mxu0 0.0
    %708 = vmatprep.subr.mxu0 0.0
    %709 = vmatpush1.msra.mxu0 0.0
    %710 = vmatprep.subr.mxu0 0.0
    %711 = vmatpush1.msra.mxu0 0.0
    %712 = vmatprep.subr.mxu0 0.0
    %713 = vmatpush1.msra.mxu0 0.0
    %714 = vmatprep.subr.mxu0 0.0
    %715 = vmatpush1.msra.mxu0 0.0
    %716 = vmatprep.subr.mxu0 0.0
    %717 = vmatpush1.msra.mxu0 0.0
    %718 = vmatprep.subr.mxu0 0.0
    %719 = vmatpush1.msra.mxu0 0.0
    %720 = vmatprep.mubr.f32.mxu0 0.0
    %721 = vmatmul.mubr.f32.gmra.mrb[0].mxu0 %v647
    %v722 = vpop.f32.mrb[0].mxu0
    %v723 = vadd.f32 0.0, %v722
    %v724 = vpop.f32.mrb[0].mxu0
    %v725 = vadd.f32 0.0, %v724
    %726 = vdwg.mxu0
    %727 = vmatprep.subr.mxu0 %v416
    %728 = vmatpush1.msra.mxu0 %v415
    %729 = vmatprep.subr.mxu0 %v420
    %730 = vmatpush1.msra.mxu0 %v419
    %731 = vmatprep.subr.mxu0 %v424
    %732 = vmatpush1.msra.mxu0 %v423
    %733 = vmatprep.subr.mxu0 %v428
    %734 = vmatpush1.msra.mxu0 %v427
    %735 = vmatprep.subr.mxu0 %v432
    %736 = vmatpush1.msra.mxu0 %v431
    %737 = vmatprep.subr.mxu0 %v436
    %738 = vmatpush1.msra.mxu0 %v435
    %739 = vmatprep.subr.mxu0 %v440
    %740 = vmatpush1.msra.mxu0 %v439
    %741 = vmatprep.subr.mxu0 %v444
    %742 = vmatpush1.msra.mxu0 %v443
    %743 = vmatprep.subr.mxu0 %v448
    %744 = vmatpush1.msra.mxu0 %v447
    %745 = vmatprep.subr.mxu0 %v452
    %746 = vmatpush1.msra.mxu0 %v451
    %747 = vmatprep.subr.mxu0 %v456
    %748 = vmatpush1.msra.mxu0 %v455
    %749 = vmatprep.subr.mxu0 %v460
    %750 = vmatpush1.msra.mxu0 %v459
    %751 = vmatprep.subr.mxu0 %v464
    %752 = vmatpush1.msra.mxu0 %v463
    %753 = vmatprep.subr.mxu0 %v468
    %754 = vmatpush1.msra.mxu0 %v467
    %755 = vmatprep.subr.mxu0 %v472
    %756 = vmatpush1.msra.mxu0 %v471
    %757 = vmatprep.subr.mxu0 %v476
    %758 = vmatpush1.msra.mxu0 %v475
    %759 = vmatprep.subr.mxu0 0.0
    %760 = vmatpush1.msra.mxu0 0.0
    %761 = vmatprep.subr.mxu0 0.0
    %762 = vmatpush1.msra.mxu0 0.0
    %763 = vmatprep.subr.mxu0 0.0
    %764 = vmatpush1.msra.mxu0 0.0
    %765 = vmatprep.subr.mxu0 0.0
    %766 = vmatpush1.msra.mxu0 0.0
    %767 = vmatprep.subr.mxu0 0.0
    %768 = vmatpush1.msra.mxu0 0.0
    %769 = vmatprep.subr.mxu0 0.0
    %770 = vmatpush1.msra.mxu0 0.0
    %771 = vmatprep.subr.mxu0 0.0
    %772 = vmatpush1.msra.mxu0 0.0
    %773 = vmatprep.subr.mxu0 0.0
    %774 = vmatpush1.msra.mxu0 0.0
    %775 = vmatprep.subr.mxu0 0.0
    %776 = vmatpush1.msra.mxu0 0.0
    %777 = vmatprep.subr.mxu0 0.0
    %778 = vmatpush1.msra.mxu0 0.0
    %779 = vmatprep.subr.mxu0 0.0
    %780 = vmatpush1.msra.mxu0 0.0
    %781 = vmatprep.subr.mxu0 0.0
    %782 = vmatpush1.msra.mxu0 0.0
    %783 = vmatprep.subr.mxu0 0.0
    %784 = vmatpush1.msra.mxu0 0.0
    %785 = vmatprep.subr.mxu0 0.0
    %786 = vmatpush1.msra.mxu0 0.0
    %787 = vmatprep.subr.mxu0 0.0
    %788 = vmatpush1.msra.mxu0 0.0
    %789 = vmatprep.subr.mxu0 0.0
    %790 = vmatpush1.msra.mxu0 0.0
    %791 = vmatprep.mubr.f32.mxu0 0.0
    %792 = vmatmul.mubr.f32.gmra.mrb[0].mxu0 %v647
    %v793 = vpop.f32.mrb[0].mxu0
    %v794 = vadd.f32 0.0, %v793
    %v795 = vpop.f32.mrb[0].mxu0
    %v796 = vadd.f32 0.0, %v795
    %797 = vdwg.mxu0
    %v798 = vadd.f32 %v652, %v723
    %v799 = vadd.f32 %v653, %v725
    %v800 = vadd.f32 %v654, %v794
    %v801 = vadd.f32 %v655, %v796
    %v802 = vmul.f32 %v798, 0.5
    %v803 = vtanh.pop %v802
    %v804 = vmul.f32 %v803, 0.5
    %v805 = vadd.f32 %v804, 0.5
    %v806 = vmul.f32 %v799, 0.5
    %v807 = vtanh.pop %v806
    %v808 = vmul.f32 %v807, 0.5
    %v809 = vadd.f32 %v808, 0.5
    %v810 = vtanh.pop %v800
    %v811 = vmul.f32 %v801, 0.5
    %v812 = vtanh.pop %v811
    %v813 = vmul.f32 %v812, 0.5
    %v814 = vadd.f32 %v813, 0.5
    %v815 = vmul.f32 %v809, %v645
    %v816 = vmul.f32 %v805, %v810
    %v817 = vadd.f32 %v815, %v816
    %v818 = vtanh.pop %v817
    %v819 = vmul.f32 %v814, %v818
    %s820 = scalar_lea.vmem [#allocation3], 8
    %821 = vst [vmem:[%s820] sm:$0xff] %v819
    %s822 = smul.u32 2, 4
    %s823 = smul.addr %s822, 8
    %s824 = scalar_lea.vmem [#allocation2], %s823
    %v825 = vld [vmem:[%s824] sm:$0xff]
    %v826 = vld [vmem:[%s824 + $0x8] sm:$0xff]
    %v827 = vld [vmem:[%s824 + $0x10] sm:$0xff]
    %v828 = vld [vmem:[%s824 + $0x18] sm:$0xff]
    %829 = vmatprep.subr.mxu0 %v414
    %830 = vmatpush1.msra.mxu0 %v413
    %831 = vmatprep.subr.mxu0 %v418
    %832 = vmatpush1.msra.mxu0 %v417
    %833 = vmatprep.subr.mxu0 %v422
    %834 = vmatpush1.msra.mxu0 %v421
    %835 = vmatprep.subr.mxu0 %v426
    %836 = vmatpush1.msra.mxu0 %v425
    %837 = vmatprep.subr.mxu0 %v430
    %838 = vmatpush1.msra.mxu0 %v429
    %839 = vmatprep.subr.mxu0 %v434
    %840 = vmatpush1.msra.mxu0 %v433
    %841 = vmatprep.subr.mxu0 %v438
    %842 = vmatpush1.msra.mxu0 %v437
    %843 = vmatprep.subr.mxu0 %v442
    %844 = vmatpush1.msra.mxu0 %v441
    %845 = vmatprep.subr.mxu0 %v446
    %846 = vmatpush1.msra.mxu0 %v445
    %847 = vmatprep.subr.mxu0 %v450
    %848 = vmatpush1.msra.mxu0 %v449
    %849 = vmatprep.subr.mxu0 %v454
    %850 = vmatpush1.msra.mxu0 %v453
    %851 = vmatprep.subr.mxu0 %v458
    %852 = vmatpush1.msra.mxu0 %v457
    %853 = vmatprep.subr.mxu0 %v462
    %854 = vmatpush1.msra.mxu0 %v461
    %855 = vmatprep.subr.mxu0 %v466
    %856 = vmatpush1.msra.mxu0 %v465
    %857 = vmatprep.subr.mxu0 %v470
    %858 = vmatpush1.msra.mxu0 %v469
    %859 = vmatprep.subr.mxu0 %v474
    %860 = vmatpush1.msra.mxu0 %v473
    %861 = vmatprep.subr.mxu0 0.0
    %862 = vmatpush1.msra.mxu0 0.0
    %863 = vmatprep.subr.mxu0 0.0
    %864 = vmatpush1.msra.mxu0 0.0
    %865 = vmatprep.subr.mxu0 0.0
    %866 = vmatpush1.msra.mxu0 0.0
    %867 = vmatprep.subr.mxu0 0.0
    %868 = vmatpush1.msra.mxu0 0.0
    %869 = vmatprep.subr.mxu0 0.0
    %870 = vmatpush1.msra.mxu0 0.0
    %871 = vmatprep.subr.mxu0 0.0
    %872 = vmatpush1.msra.mxu0 0.0
    %873 = vmatprep.subr.mxu0 0.0
    %874 = vmatpush1.msra.mxu0 0.0
    %875 = vmatprep.subr.mxu0 0.0
    %876 = vmatpush1.msra.mxu0 0.0
    %877 = vmatprep.subr.mxu0 0.0
    %878 = vmatpush1.msra.mxu0 0.0
    %879 = vmatprep.subr.mxu0 0.0
    %880 = vmatpush1.msra.mxu0 0.0
    %881 = vmatprep.subr.mxu0 0.0
    %882 = vmatpush1.msra.mxu0 0.0
    %883 = vmatprep.subr.mxu0 0.0
    %884 = vmatpush1.msra.mxu0 0.0
    %885 = vmatprep.subr.mxu0 0.0
    %886 = vmatpush1.msra.mxu0 0.0
    %887 = vmatprep.subr.mxu0 0.0
    %888 = vmatpush1.msra.mxu0 0.0
    %889 = vmatprep.subr.mxu0 0.0
    %890 = vmatpush1.msra.mxu0 0.0
    %891 = vmatprep.subr.mxu0 0.0
    %892 = vmatpush1.msra.mxu0 0.0
    %893 = vmatprep.mubr.f32.mxu0 0.0
    %894 = vmatmul.mubr.f32.gmra.mrb[0].mxu0 %v819
    %v895 = vpop.f32.mrb[0].mxu0
    %v896 = vadd.f32 0.0, %v895
    %v897 = vpop.f32.mrb[0].mxu0
    %v898 = vadd.f32 0.0, %v897
    %899 = vdwg.mxu0
    %900 = vmatprep.subr.mxu0 %v416
    %901 = vmatpush1.msra.mxu0 %v415
    %902 = vmatprep.subr.mxu0 %v420
    %903 = vmatpush1.msra.mxu0 %v419
    %904 = vmatprep.subr.mxu0 %v424
    %905 = vmatpush1.msra.mxu0 %v423
    %906 = vmatprep.subr.mxu0 %v428
    %907 = vmatpush1.msra.mxu0 %v427
    %908 = vmatprep.subr.mxu0 %v432
    %909 = vmatpush1.msra.mxu0 %v431
    %910 = vmatprep.subr.mxu0 %v436
    %911 = vmatpush1.msra.mxu0 %v435
    %912 = vmatprep.subr.mxu0 %v440
    %913 = vmatpush1.msra.mxu0 %v439
    %914 = vmatprep.subr.mxu0 %v444
    %915 = vmatpush1.msra.mxu0 %v443
    %916 = vmatprep.subr.mxu0 %v448
    %917 = vmatpush1.msra.mxu0 %v447
    %918 = vmatprep.subr.mxu0 %v452
    %919 = vmatpush1.msra.mxu0 %v451
    %920 = vmatprep.subr.mxu0 %v456
    %921 = vmatpush1.msra.mxu0 %v455
    %922 = vmatprep.subr.mxu0 %v460
    %923 = vmatpush1.msra.mxu0 %v459
    %924 = vmatprep.subr.mxu0 %v464
    %925 = vmatpush1.msra.mxu0 %v463
    %926 = vmatprep.subr.mxu0 %v468
    %927 = vmatpush1.msra.mxu0 %v467
    %928 = vmatprep.subr.mxu0 %v472
    %929 = vmatpush1.msra.mxu0 %v471
    %930 = vmatprep.subr.mxu0 %v476
    %931 = vmatpush1.msra.mxu0 %v475
    %932 = vmatprep.subr.mxu0 0.0
    %933 = vmatpush1.msra.mxu0 0.0
    %934 = vmatprep.subr.mxu0 0.0
    %935 = vmatpush1.msra.mxu0 0.0
    %936 = vmatprep.subr.mxu0 0.0
    %937 = vmatpush1.msra.mxu0 0.0
    %938 = vmatprep.subr.mxu0 0.0
    %939 = vmatpush1.msra.mxu0 0.0
    %940 = vmatprep.subr.mxu0 0.0
    %941 = vmatpush1.msra.mxu0 0.0
    %942 = vmatprep.subr.mxu0 0.0
    %943 = vmatpush1.msra.mxu0 0.0
    %944 = vmatprep.subr.mxu0 0.0
    %945 = vmatpush1.msra.mxu0 0.0
    %946 = vmatprep.subr.mxu0 0.0
    %947 = vmatpush1.msra.mxu0 0.0
    %948 = vmatprep.subr.mxu0 0.0
    %949 = vmatpush1.msra.mxu0 0.0
    %950 = vmatprep.subr.mxu0 0.0
    %951 = vmatpush1.msra.mxu0 0.0
    %952 = vmatprep.subr.mxu0 0.0
    %953 = vmatpush1.msra.mxu0 0.0
    %954 = vmatprep.subr.mxu0 0.0
    %955 = vmatpush1.msra.mxu0 0.0
    %956 = vmatprep.subr.mxu0 0.0
    %957 = vmatpush1.msra.mxu0 0.0
    %958 = vmatprep.subr.mxu0 0.0
    %959 = vmatpush1.msra.mxu0 0.0
    %960 = vmatprep.subr.mxu0 0.0
    %961 = vmatpush1.msra.mxu0 0.0
    %962 = vmatprep.subr.mxu0 0.0
    %963 = vmatpush1.msra.mxu0 0.0
    %964 = vmatprep.mubr.f32.mxu0 0.0
    %965 = vmatmul.mubr.f32.gmra.mrb[0].mxu0 %v819
    %v966 = vpop.f32.mrb[0].mxu0
    %v967 = vadd.f32 0.0, %v966
    %v968 = vpop.f32.mrb[0].mxu0
    %v969 = vadd.f32 0.0, %v968
    %970 = vdwg.mxu0
    %v971 = vadd.f32 %v825, %v896
    %v972 = vadd.f32 %v826, %v898
    %v973 = vadd.f32 %v827, %v967
    %v974 = vadd.f32 %v828, %v969
    %v975 = vmul.f32 %v971, 0.5
    %v976 = vtanh.pop %v975
    %v977 = vmul.f32 %v976, 0.5
    %v978 = vadd.f32 %v977, 0.5
    %v979 = vmul.f32 %v972, 0.5
    %v980 = vtanh.pop %v979
    %v981 = vmul.f32 %v980, 0.5
    %v982 = vadd.f32 %v981, 0.5
    %v983 = vtanh.pop %v973
    %v984 = vmul.f32 %v974, 0.5
    %v985 = vtanh.pop %v984
    %v986 = vmul.f32 %v985, 0.5
    %v987 = vadd.f32 %v986, 0.5
    %v988 = vmul.f32 %v982, %v817
    %v989 = vmul.f32 %v978, %v983
    %v990 = vadd.f32 %v988, %v989
    %v991 = vtanh.pop %v990
    %v992 = vmul.f32 %v987, %v991
    %s993 = scalar_lea.vmem [#allocation3], 16
    %994 = vst [vmem:[%s993] sm:$0xff] %v992
    %s995 = smul.u32 3, 4
    %s996 = smul.addr %s995, 8
    %s997 = scalar_lea.vmem [#allocation2], %s996
    %v998 = vld [vmem:[%s997] sm:$0xff]
    %v999 = vld [vmem:[%s997 + $0x8] sm:$0xff]
    %v1000 = vld [vmem:[%s997 + $0x10] sm:$0xff]
    %v1001 = vld [vmem:[%s997 + $0x18] sm:$0xff]
    %1002 = vmatprep.subr.mxu0 %v414
    %1003 = vmatpush1.msra.mxu0 %v413
    %1004 = vmatprep.subr.mxu0 %v418
    %1005 = vmatpush1.msra.mxu0 %v417
    %1006 = vmatprep.subr.mxu0 %v422
    %1007 = vmatpush1.msra.mxu0 %v421
    %1008 = vmatprep.subr.mxu0 %v426
    %1009 = vmatpush1.msra.mxu0 %v425
    %1010 = vmatprep.subr.mxu0 %v430
    %1011 = vmatpush1.msra.mxu0 %v429
    %1012 = vmatprep.subr.mxu0 %v434
    %1013 = vmatpush1.msra.mxu0 %v433
    %1014 = vmatprep.subr.mxu0 %v438
    %1015 = vmatpush1.msra.mxu0 %v437
    %1016 = vmatprep.subr.mxu0 %v442
    %1017 = vmatpush1.msra.mxu0 %v441
    %1018 = vmatprep.subr.mxu0 %v446
    %1019 = vmatpush1.msra.mxu0 %v445
    %1020 = vmatprep.subr.mxu0 %v450
    %1021 = vmatpush1.msra.mxu0 %v449
    %1022 = vmatprep.subr.mxu0 %v454
    %1023 = vmatpush1.msra.mxu0 %v453
    %1024 = vmatprep.subr.mxu0 %v458
    %1025 = vmatpush1.msra.mxu0 %v457
    %1026 = vmatprep.subr.mxu0 %v462
    %1027 = vmatpush1.msra.mxu0 %v461
    %1028 = vmatprep.subr.mxu0 %v466
    %1029 = vmatpush1.msra.mxu0 %v465
    %1030 = vmatprep.subr.mxu0 %v470
    %1031 = vmatpush1.msra.mxu0 %v469
    %1032 = vmatprep.subr.mxu0 %v474
    %1033 = vmatpush1.msra.mxu0 %v473
    %1034 = vmatprep.subr.mxu0 0.0
    %1035 = vmatpush1.msra.mxu0 0.0
    %1036 = vmatprep.subr.mxu0 0.0
    %1037 = vmatpush1.msra.mxu0 0.0
    %1038 = vmatprep.subr.mxu0 0.0
    %1039 = vmatpush1.msra.mxu0 0.0
    %1040 = vmatprep.subr.mxu0 0.0
    %1041 = vmatpush1.msra.mxu0 0.0
    %1042 = vmatprep.subr.mxu0 0.0
    %1043 = vmatpush1.msra.mxu0 0.0
    %1044 = vmatprep.subr.mxu0 0.0
    %1045 = vmatpush1.msra.mxu0 0.0
    %1046 = vmatprep.subr.mxu0 0.0
    %1047 = vmatpush1.msra.mxu0 0.0
    %1048 = vmatprep.subr.mxu0 0.0
    %1049 = vmatpush1.msra.mxu0 0.0
    %1050 = vmatprep.subr.mxu0 0.0
    %1051 = vmatpush1.msra.mxu0 0.0
    %1052 = vmatprep.subr.mxu0 0.0
    %1053 = vmatpush1.msra.mxu0 0.0
    %1054 = vmatprep.subr.mxu0 0.0
    %1055 = vmatpush1.msra.mxu0 0.0
    %1056 = vmatprep.subr.mxu0 0.0
    %1057 = vmatpush1.msra.mxu0 0.0
    %1058 = vmatprep.subr.mxu0 0.0
    %1059 = vmatpush1.msra.mxu0 0.0
    %1060 = vmatprep.subr.mxu0 0.0
    %1061 = vmatpush1.msra.mxu0 0.0
    %1062 = vmatprep.subr.mxu0 0.0
    %1063 = vmatpush1.msra.mxu0 0.0
    %1064 = vmatprep.subr.mxu0 0.0
    %1065 = vmatpush1.msra.mxu0 0.0
    %1066 = vmatprep.mubr.f32.mxu0 0.0
    %1067 = vmatmul.mubr.f32.gmra.mrb[0].mxu0 %v992
    %v1068 = vpop.f32.mrb[0].mxu0
    %v1069 = vadd.f32 0.0, %v1068
    %v1070 = vpop.f32.mrb[0].mxu0
    %v1071 = vadd.f32 0.0, %v1070
    %1072 = vdwg.mxu0
    %1073 = vmatprep.subr.mxu0 %v416
    %1074 = vmatpush1.msra.mxu0 %v415
    %1075 = vmatprep.subr.mxu0 %v420
    %1076 = vmatpush1.msra.mxu0 %v419
    %1077 = vmatprep.subr.mxu0 %v424
    %1078 = vmatpush1.msra.mxu0 %v423
    %1079 = vmatprep.subr.mxu0 %v428
    %1080 = vmatpush1.msra.mxu0 %v427
    %1081 = vmatprep.subr.mxu0 %v432
    %1082 = vmatpush1.msra.mxu0 %v431
    %1083 = vmatprep.subr.mxu0 %v436
    %1084 = vmatpush1.msra.mxu0 %v435
    %1085 = vmatprep.subr.mxu0 %v440
    %1086 = vmatpush1.msra.mxu0 %v439
    %1087 = vmatprep.subr.mxu0 %v444
    %1088 = vmatpush1.msra.mxu0 %v443
    %1089 = vmatprep.subr.mxu0 %v448
    %1090 = vmatpush1.msra.mxu0 %v447
    %1091 = vmatprep.subr.mxu0 %v452
    %1092 = vmatpush1.msra.mxu0 %v451
    %1093 = vmatprep.subr.mxu0 %v456
    %1094 = vmatpush1.msra.mxu0 %v455
    %1095 = vmatprep.subr.mxu0 %v460
    %1096 = vmatpush1.msra.mxu0 %v459
    %1097 = vmatprep.subr.mxu0 %v464
    %1098 = vmatpush1.msra.mxu0 %v463
    %1099 = vmatprep.subr.mxu0 %v468
    %1100 = vmatpush1.msra.mxu0 %v467
    %1101 = vmatprep.subr.mxu0 %v472
    %1102 = vmatpush1.msra.mxu0 %v471
    %1103 = vmatprep.subr.mxu0 %v476
    %1104 = vmatpush1.msra.mxu0 %v475
    %1105 = vmatprep.subr.mxu0 0.0
    %1106 = vmatpush1.msra.mxu0 0.0
    %1107 = vmatprep.subr.mxu0 0.0
    %1108 = vmatpush1.msra.mxu0 0.0
    %1109 = vmatprep.subr.mxu0 0.0
    %1110 = vmatpush1.msra.mxu0 0.0
    %1111 = vmatprep.subr.mxu0 0.0
    %1112 = vmatpush1.msra.mxu0 0.0
    %1113 = vmatprep.subr.mxu0 0.0
    %1114 = vmatpush1.msra.mxu0 0.0
    %1115 = vmatprep.subr.mxu0 0.0
    %1116 = vmatpush1.msra.mxu0 0.0
    %1117 = vmatprep.subr.mxu0 0.0
    %1118 = vmatpush1.msra.mxu0 0.0
    %1119 = vmatprep.subr.mxu0 0.0
    %1120 = vmatpush1.msra.mxu0 0.0
    %1121 = vmatprep.subr.mxu0 0.0
    %1122 = vmatpush1.msra.mxu0 0.0
    %1123 = vmatprep.subr.mxu0 0.0
    %1124 = vmatpush1.msra.mxu0 0.0
    %1125 = vmatprep.subr.mxu0 0.0
    %1126 = vmatpush1.msra.mxu0 0.0
    %1127 = vmatprep.subr.mxu0 0.0
    %1128 = vmatpush1.msra.mxu0 0.0
    %1129 = vmatprep.subr.mxu0 0.0
    %1130 = vmatpush1.msra.mxu0 0.0
    %1131 = vmatprep.subr.mxu0 0.0
    %1132 = vmatpush1.msra.mxu0 0.0
    %1133 = vmatprep.subr.mxu0 0.0
    %1134 = vmatpush1.msra.mxu0 0.0
    %1135 = vmatprep.subr.mxu0 0.0
    %1136 = vmatpush1.msra.mxu0 0.0
    %1137 = vmatprep.mubr.f32.mxu0 0.0
    %1138 = vmatmul.mubr.f32.gmra.mrb[0].mxu0 %v992
    %v1139 = vpop.f32.mrb[0].mxu0
    %v1140 = vadd.f32 0.0, %v1139
    %v1141 = vpop.f32.mrb[0].mxu0
    %v1142 = vadd.f32 0.0, %v1141
    %1143 = vdwg.mxu0
    %v1144 = vadd.f32 %v998, %v1069
    %v1145 = vadd.f32 %v999, %v1071
    %v1146 = vadd.f32 %v1000, %v1140
    %v1147 = vadd.f32 %v1001, %v1142
    %v1148 = vmul.f32 %v1144, 0.5
    %v1149 = vtanh.pop %v1148
    %v1150 = vmul.f32 %v1149, 0.5
    %v1151 = vadd.f32 %v1150, 0.5
    %v1152 = vmul.f32 %v1145, 0.5
    %v1153 = vtanh.pop %v1152
    %v1154 = vmul.f32 %v1153, 0.5
    %v1155 = vadd.f32 %v1154, 0.5
    %v1156 = vtanh.pop %v1146
    %v1157 = vmul.f32 %v1147, 0.5
    %v1158 = vtanh.pop %v1157
    %v1159 = vmul.f32 %v1158, 0.5
    %v1160 = vadd.f32 %v1159, 0.5
    %v1161 = vmul.f32 %v1155, %v990
    %v1162 = vmul.f32 %v1151, %v1156
    %v1163 = vadd.f32 %v1161, %v1162
    %v1164 = vtanh.pop %v1163
    %v1165 = vmul.f32 %v1160, %v1164
    %s1166 = scalar_lea.vmem [#allocation3], 24
    %1167 = vst [vmem:[%s1166] sm:$0xff] %v1165
    %s1168 = smul.u32 4, 4
    %s1169 = smul.addr %s1168, 8
    %s1170 = scalar_lea.vmem [#allocation2], %s1169
    %v1171 = vld [vmem:[%s1170] sm:$0xff]
    %v1172 = vld [vmem:[%s1170 + $0x8] sm:$0xff]
    %v1173 = vld [vmem:[%s1170 + $0x10] sm:$0xff]
    %v1174 = vld [vmem:[%s1170 + $0x18] sm:$0xff]
    %1175 = vmatprep.subr.mxu0 %v414
    %1176 = vmatpush1.msra.mxu0 %v413
    %1177 = vmatprep.subr.mxu0 %v418
    %1178 = vmatpush1.msra.mxu0 %v417
    %1179 = vmatprep.subr.mxu0 %v422
    %1180 = vmatpush1.msra.mxu0 %v421
    %1181 = vmatprep.subr.mxu0 %v426
    %1182 = vmatpush1.msra.mxu0 %v425
    %1183 = vmatprep.subr.mxu0 %v430
    %1184 = vmatpush1.msra.mxu0 %v429
    %1185 = vmatprep.subr.mxu0 %v434
    %1186 = vmatpush1.msra.mxu0 %v433
    %1187 = vmatprep.subr.mxu0 %v438
    %1188 = vmatpush1.msra.mxu0 %v437
    %1189 = vmatprep.subr.mxu0 %v442
    %1190 = vmatpush1.msra.mxu0 %v441
    %1191 = vmatprep.subr.mxu0 %v446
    %1192 = vmatpush1.msra.mxu0 %v445
    %1193 = vmatprep.subr.mxu0 %v450
    %1194 = vmatpush1.msra.mxu0 %v449
    %1195 = vmatprep.subr.mxu0 %v454
    %1196 = vmatpush1.msra.mxu0 %v453
    %1197 = vmatprep.subr.mxu0 %v458
    %1198 = vmatpush1.msra.mxu0 %v457
    %1199 = vmatprep.subr.mxu0 %v462
    %1200 = vmatpush1.msra.mxu0 %v461
    %1201 = vmatprep.subr.mxu0 %v466
    %1202 = vmatpush1.msra.mxu0 %v465
    %1203 = vmatprep.subr.mxu0 %v470
    %1204 = vmatpush1.msra.mxu0 %v469
    %1205 = vmatprep.subr.mxu0 %v474
    %1206 = vmatpush1.msra.mxu0 %v473
    %1207 = vmatprep.subr.mxu0 0.0
    %1208 = vmatpush1.msra.mxu0 0.0
    %1209 = vmatprep.subr.mxu0 0.0
    %1210 = vmatpush1.msra.mxu0 0.0
    %1211 = vmatprep.subr.mxu0 0.0
    %1212 = vmatpush1.msra.mxu0 0.0
    %1213 = vmatprep.subr.mxu0 0.0
    %1214 = vmatpush1.msra.mxu0 0.0
    %1215 = vmatprep.subr.mxu0 0.0
    %1216 = vmatpush1.msra.mxu0 0.0
    %1217 = vmatprep.subr.mxu0 0.0
    %1218 = vmatpush1.msra.mxu0 0.0
    %1219 = vmatprep.subr.mxu0 0.0
    %1220 = vmatpush1.msra.mxu0 0.0
    %1221 = vmatprep.subr.mxu0 0.0
    %1222 = vmatpush1.msra.mxu0 0.0
    %1223 = vmatprep.subr.mxu0 0.0
    %1224 = vmatpush1.msra.mxu0 0.0
    %1225 = vmatprep.subr.mxu0 0.0
    %1226 = vmatpush1.msra.mxu0 0.0
    %1227 = vmatprep.subr.mxu0 0.0
    %1228 = vmatpush1.msra.mxu0 0.0
    %1229 = vmatprep.subr.mxu0 0.0
    %1230 = vmatpush1.msra.mxu0 0.0
    %1231 = vmatprep.subr.mxu0 0.0
    %1232 = vmatpush1.msra.mxu0 0.0
    %1233 = vmatprep.subr.mxu0 0.0
    %1234 = vmatpush1.msra.mxu0 0.0
    %1235 = vmatprep.subr.mxu0 0.0
    %1236 = vmatpush1.msra.mxu0 0.0
    %1237 = vmatprep.subr.mxu0 0.0
    %1238 = vmatpush1.msra.mxu0 0.0
    %1239 = vmatprep.mubr.f32.mxu0 0.0
    %1240 = vmatmul.mubr.f32.gmra.mrb[0].mxu0 %v1165
    %v1241 = vpop.f32.mrb[0].mxu0
    %v1242 = vadd.f32 0.0, %v1241
    %v1243 = vpop.f32.mrb[0].mxu0
    %v1244 = vadd.f32 0.0, %v1243
    %1245 = vdwg.mxu0
    %1246 = vmatprep.subr.mxu0 %v416
    %1247 = vmatpush1.msra.mxu0 %v415
    %1248 = vmatprep.subr.mxu0 %v420
    %1249 = vmatpush1.msra.mxu0 %v419
    %1250 = vmatprep.subr.mxu0 %v424
    %1251 = vmatpush1.msra.mxu0 %v423
    %1252 = vmatprep.subr.mxu0 %v428
    %1253 = vmatpush1.msra.mxu0 %v427
    %1254 = vmatprep.subr.mxu0 %v432
    %1255 = vmatpush1.msra.mxu0 %v431
    %1256 = vmatprep.subr.mxu0 %v436
    %1257 = vmatpush1.msra.mxu0 %v435
    %1258 = vmatprep.subr.mxu0 %v440
    %1259 = vmatpush1.msra.mxu0 %v439
    %1260 = vmatprep.subr.mxu0 %v444
    %1261 = vmatpush1.msra.mxu0 %v443
    %1262 = vmatprep.subr.mxu0 %v448
    %1263 = vmatpush1.msra.mxu0 %v447
    %1264 = vmatprep.subr.mxu0 %v452
    %1265 = vmatpush1.msra.mxu0 %v451
    %1266 = vmatprep.subr.mxu0 %v456
    %1267 = vmatpush1.msra.mxu0 %v455
    %1268 = vmatprep.subr.mxu0 %v460
    %1269 = vmatpush1.msra.mxu0 %v459
    %1270 = vmatprep.subr.mxu0 %v464
    %1271 = vmatpush1.msra.mxu0 %v463
    %1272 = vmatprep.subr.mxu0 %v468
    %1273 = vmatpush1.msra.mxu0 %v467
    %1274 = vmatprep.subr.mxu0 %v472
    %1275 = vmatpush1.msra.mxu0 %v471
    %1276 = vmatprep.subr.mxu0 %v476
    %1277 = vmatpush1.msra.mxu0 %v475
    %1278 = vmatprep.subr.mxu0 0.0
    %1279 = vmatpush1.msra.mxu0 0.0
    %1280 = vmatprep.subr.mxu0 0.0
    %1281 = vmatpush1.msra.mxu0 0.0
    %1282 = vmatprep.subr.mxu0 0.0
    %1283 = vmatpush1.msra.mxu0 0.0
    %1284 = vmatprep.subr.mxu0 0.0
    %1285 = vmatpush1.msra.mxu0 0.0
    %1286 = vmatprep.subr.mxu0 0.0
    %1287 = vmatpush1.msra.mxu0 0.0
    %1288 = vmatprep.subr.mxu0 0.0
    %1289 = vmatpush1.msra.mxu0 0.0
    %1290 = vmatprep.subr.mxu0 0.0
    %1291 = vmatpush1.msra.mxu0 0.0
    %1292 = vmatprep.subr.mxu0 0.0
    %1293 = vmatpush1.msra.mxu0 0.0
    %1294 = vmatprep.subr.mxu0 0.0
    %1295 = vmatpush1.msra.mxu0 0.0
    %1296 = vmatprep.subr.mxu0 0.0
    %1297 = vmatpush1.msra.mxu0 0.0
    %1298 = vmatprep.subr.mxu0 0.0
    %1299 = vmatpush1.msra.mxu0 0.0
    %1300 = vmatprep.subr.mxu0 0.0
    %1301 = vmatpush1.msra.mxu0 0.0
    %1302 = vmatprep.subr.mxu0 0.0
    %1303 = vmatpush1.msra.mxu0 0.0
    %1304 = vmatprep.subr.mxu0 0.0
    %1305 = vmatpush1.msra.mxu0 0.0
    %1306 = vmatprep.subr.mxu0 0.0
    %1307 = vmatpush1.msra.mxu0 0.0
    %1308 = vmatprep.subr.mxu0 0.0
    %1309 = vmatpush1.msra.mxu0 0.0
    %1310 = vmatprep.mubr.f32.mxu0 0.0
    %1311 = vmatmul.mubr.f32.gmra.mrb[0].mxu0 %v1165
    %v1312 = vpop.f32.mrb[0].mxu0
    %v1313 = vadd.f32 0.0, %v1312
    %v1314 = vpop.f32.mrb[0].mxu0
    %v1315 = vadd.f32 0.0, %v1314
    %1316 = vdwg.mxu0
    %v1317 = vadd.f32 %v1171, %v1242
    %v1318 = vadd.f32 %v1172, %v1244
    %v1319 = vadd.f32 %v1173, %v1313
    %v1320 = vadd.f32 %v1174, %v1315
    %v1321 = vmul.f32 %v1317, 0.5
    %v1322 = vtanh.pop %v1321
    %v1323 = vmul.f32 %v1322, 0.5
    %v1324 = vadd.f32 %v1323, 0.5
    %v1325 = vmul.f32 %v1318, 0.5
    %v1326 = vtanh.pop %v1325
    %v1327 = vmul.f32 %v1326, 0.5
    %v1328 = vadd.f32 %v1327, 0.5
    %v1329 = vtanh.pop %v1319
    %v1330 = vmul.f32 %v1320, 0.5
    %v1331 = vtanh.pop %v1330
    %v1332 = vmul.f32 %v1331, 0.5
    %v1333 = vadd.f32 %v1332, 0.5
    %v1334 = vmul.f32 %v1328, %v1163
    %v1335 = vmul.f32 %v1324, %v1329
    %v1336 = vadd.f32 %v1334, %v1335
    %v1337 = vtanh.pop %v1336
    %v1338 = vmul.f32 %v1333, %v1337
    %s1339 = scalar_lea.vmem [#allocation3], 32
    %1340 = vst [vmem:[%s1339] sm:$0xff] %v1338
    %s1341 = smul.u32 5, 4
    %s1342 = smul.addr %s1341, 8
    %s1343 = scalar_lea.vmem [#allocation2], %s1342
    %v1344 = vld [vmem:[%s1343] sm:$0xff]
    %v1345 = vld [vmem:[%s1343 + $0x8] sm:$0xff]
    %v1346 = vld [vmem:[%s1343 + $0x10] sm:$0xff]
    %v1347 = vld [vmem:[%s1343 + $0x18] sm:$0xff]
    %1348 = vmatprep.subr.mxu0 %v414
    %1349 = vmatpush1.msra.mxu0 %v413
    %1350 = vmatprep.subr.mxu0 %v418
    %1351 = vmatpush1.msra.mxu0 %v417
    %1352 = vmatprep.subr.mxu0 %v422
    %1353 = vmatpush1.msra.mxu0 %v421
    %1354 = vmatprep.subr.mxu0 %v426
    %1355 = vmatpush1.msra.mxu0 %v425
    %1356 = vmatprep.subr.mxu0 %v430
    %1357 = vmatpush1.msra.mxu0 %v429
    %1358 = vmatprep.subr.mxu0 %v434
    %1359 = vmatpush1.msra.mxu0 %v433
    %1360 = vmatprep.subr.mxu0 %v438
    %1361 = vmatpush1.msra.mxu0 %v437
    %1362 = vmatprep.subr.mxu0 %v442
    %1363 = vmatpush1.msra.mxu0 %v441
    %1364 = vmatprep.subr.mxu0 %v446
    %1365 = vmatpush1.msra.mxu0 %v445
    %1366 = vmatprep.subr.mxu0 %v450
    %1367 = vmatpush1.msra.mxu0 %v449
    %1368 = vmatprep.subr.mxu0 %v454
    %1369 = vmatpush1.msra.mxu0 %v453
    %1370 = vmatprep.subr.mxu0 %v458
    %1371 = vmatpush1.msra.mxu0 %v457
    %1372 = vmatprep.subr.mxu0 %v462
    %1373 = vmatpush1.msra.mxu0 %v461
    %1374 = vmatprep.subr.mxu0 %v466
    %1375 = vmatpush1.msra.mxu0 %v465
    %1376 = vmatprep.subr.mxu0 %v470
    %1377 = vmatpush1.msra.mxu0 %v469
    %1378 = vmatprep.subr.mxu0 %v474
    %1379 = vmatpush1.msra.mxu0 %v473
    %1380 = vmatprep.subr.mxu0 0.0
    %1381 = vmatpush1.msra.mxu0 0.0
    %1382 = vmatprep.subr.mxu0 0.0
    %1383 = vmatpush1.msra.mxu0 0.0
    %1384 = vmatprep.subr.mxu0 0.0
    %1385 = vmatpush1.msra.mxu0 0.0
    %1386 = vmatprep.subr.mxu0 0.0
    %1387 = vmatpush1.msra.mxu0 0.0
    %1388 = vmatprep.subr.mxu0 0.0
    %1389 = vmatpush1.msra.mxu0 0.0
    %1390 = vmatprep.subr.mxu0 0.0
    %1391 = vmatpush1.msra.mxu0 0.0
    %1392 = vmatprep.subr.mxu0 0.0
    %1393 = vmatpush1.msra.mxu0 0.0
    %1394 = vmatprep.subr.mxu0 0.0
    %1395 = vmatpush1.msra.mxu0 0.0
    %1396 = vmatprep.subr.mxu0 0.0
    %1397 = vmatpush1.msra.mxu0 0.0
    %1398 = vmatprep.subr.mxu0 0.0
    %1399 = vmatpush1.msra.mxu0 0.0
    %1400 = vmatprep.subr.mxu0 0.0
    %1401 = vmatpush1.msra.mxu0 0.0
    %1402 = vmatprep.subr.mxu0 0.0
    %1403 = vmatpush1.msra.mxu0 0.0
    %1404 = vmatprep.subr.mxu0 0.0
    %1405 = vmatpush1.msra.mxu0 0.0
    %1406 = vmatprep.subr.mxu0 0.0
    %1407 = vmatpush1.msra.mxu0 0.0
    %1408 = vmatprep.subr.mxu0 0.0
    %1409 = vmatpush1.msra.mxu0 0.0
    %1410 = vmatprep.subr.mxu0 0.0
    %1411 = vmatpush1.msra.mxu0 0.0
    %1412 = vmatprep.mubr.f32.mxu0 0.0
    %1413 = vmatmul.mubr.f32.gmra.mrb[0].mxu0 %v1338
    %v1414 = vpop.f32.mrb[0].mxu0
    %v1415 = vadd.f32 0.0, %v1414
    %v1416 = vpop.f32.mrb[0].mxu0
    %v1417 = vadd.f32 0.0, %v1416
    %1418 = vdwg.mxu0
    %1419 = vmatprep.subr.mxu0 %v416
    %1420 = vmatpush1.msra.mxu0 %v415
    %1421 = vmatprep.subr.mxu0 %v420
    %1422 = vmatpush1.msra.mxu0 %v419
    %1423 = vmatprep.subr.mxu0 %v424
    %1424 = vmatpush1.msra.mxu0 %v423
    %1425 = vmatprep.subr.mxu0 %v428
    %1426 = vmatpush1.msra.mxu0 %v427
    %1427 = vmatprep.subr.mxu0 %v432
    %1428 = vmatpush1.msra.mxu0 %v431
    %1429 = vmatprep.subr.mxu0 %v436
    %1430 = vmatpush1.msra.mxu0 %v435
    %1431 = vmatprep.subr.mxu0 %v440
    %1432 = vmatpush1.msra.mxu0 %v439
    %1433 = vmatprep.subr.mxu0 %v444
    %1434 = vmatpush1.msra.mxu0 %v443
    %1435 = vmatprep.subr.mxu0 %v448
    %1436 = vmatpush1.msra.mxu0 %v447
    %1437 = vmatprep.subr.mxu0 %v452
    %1438 = vmatpush1.msra.mxu0 %v451
    %1439 = vmatprep.subr.mxu0 %v456
    %1440 = vmatpush1.msra.mxu0 %v455
    %1441 = vmatprep.subr.mxu0 %v460
    %1442 = vmatpush1.msra.mxu0 %v459
    %1443 = vmatprep.subr.mxu0 %v464
    %1444 = vmatpush1.msra.mxu0 %v463
    %1445 = vmatprep.subr.mxu0 %v468
    %1446 = vmatpush1.msra.mxu0 %v467
    %1447 = vmatprep.subr.mxu0 %v472
    %1448 = vmatpush1.msra.mxu0 %v471
    %1449 = vmatprep.subr.mxu0 %v476
    %1450 = vmatpush1.msra.mxu0 %v475
    %1451 = vmatprep.subr.mxu0 0.0
    %1452 = vmatpush1.msra.mxu0 0.0
    %1453 = vmatprep.subr.mxu0 0.0
    %1454 = vmatpush1.msra.mxu0 0.0
    %1455 = vmatprep.subr.mxu0 0.0
    %1456 = vmatpush1.msra.mxu0 0.0
    %1457 = vmatprep.subr.mxu0 0.0
    %1458 = vmatpush1.msra.mxu0 0.0
    %1459 = vmatprep.subr.mxu0 0.0
    %1460 = vmatpush1.msra.mxu0 0.0
    %1461 = vmatprep.subr.mxu0 0.0
    %1462 = vmatpush1.msra.mxu0 0.0
    %1463 = vmatprep.subr.mxu0 0.0
    %1464 = vmatpush1.msra.mxu0 0.0
    %1465 = vmatprep.subr.mxu0 0.0
    %1466 = vmatpush1.msra.mxu0 0.0
    %1467 = vmatprep.subr.mxu0 0.0
    %1468 = vmatpush1.msra.mxu0 0.0
    %1469 = vmatprep.subr.mxu0 0.0
    %1470 = vmatpush1.msra.mxu0 0.0
    %1471 = vmatprep.subr.mxu0 0.0
    %1472 = vmatpush1.msra.mxu0 0.0
    %1473 = vmatprep.subr.mxu0 0.0
    %1474 = vmatpush1.msra.mxu0 0.0
    %1475 = vmatprep.subr.mxu0 0.0
    %1476 = vmatpush1.msra.mxu0 0.0
    %1477 = vmatprep.subr.mxu0 0.0
    %1478 = vmatpush1.msra.mxu0 0.0
    %1479 = vmatprep.subr.mxu0 0.0
    %1480 = vmatpush1.msra.mxu0 0.0
    %1481 = vmatprep.subr.mxu0 0.0
    %1482 = vmatpush1.msra.mxu0 0.0
    %1483 = vmatprep.mubr.f32.mxu0 0.0
    %1484 = vmatmul.mubr.f32.gmra.mrb[0].mxu0 %v1338
    %v1485 = vpop.f32.mrb[0].mxu0
    %v1486 = vadd.f32 0.0, %v1485
    %v1487 = vpop.f32.mrb[0].mxu0
    %v1488 = vadd.f32 0.0, %v1487
    %1489 = vdwg.mxu0
    %v1490 = vadd.f32 %v1344, %v1415
    %v1491 = vadd.f32 %v1345, %v1417
    %v1492 = vadd.f32 %v1346, %v1486
    %v1493 = vadd.f32 %v1347, %v1488
    %v1494 = vmul.f32 %v1490, 0.5
    %v1495 = vtanh.pop %v1494
    %v1496 = vmul.f32 %v1495, 0.5
    %v1497 = vadd.f32 %v1496, 0.5
    %v1498 = vmul.f32 %v1491, 0.5
    %v1499 = vtanh.pop %v1498
    %v1500 = vmul.f32 %v1499, 0.5
    %v1501 = vadd.f32 %v1500, 0.5
    %v1502 = vtanh.pop %v1492
    %v1503 = vmul.f32 %v1493, 0.5
    %v1504 = vtanh.pop %v1503
    %v1505 = vmul.f32 %v1504, 0.5
    %v1506 = vadd.f32 %v1505, 0.5
    %v1507 = vmul.f32 %v1501, %v1336
    %v1508 = vmul.f32 %v1497, %v1502
    %v1509 = vadd.f32 %v1507, %v1508
    %v1510 = vtanh.pop %v1509
    %v1511 = vmul.f32 %v1506, %v1510
    %s1512 = scalar_lea.vmem [#allocation3], 40
    %1513 = vst [vmem:[%s1512] sm:$0xff] %v1511
    %s1514 = smul.u32 6, 4
    %s1515 = smul.addr %s1514, 8
    %s1516 = scalar_lea.vmem [#allocation2], %s1515
    %v1517 = vld [vmem:[%s1516] sm:$0xff]
    %v1518 = vld [vmem:[%s1516 + $0x8] sm:$0xff]
    %v1519 = vld [vmem:[%s1516 + $0x10] sm:$0xff]
    %v1520 = vld [vmem:[%s1516 + $0x18] sm:$0xff]
    %1521 = vmatprep.subr.mxu0 %v414
    %1522 = vmatpush1.msra.mxu0 %v413
    %1523 = vmatprep.subr.mxu0 %v418
    %1524 = vmatpush1.msra.mxu0 %v417
    %1525 = vmatprep.subr.mxu0 %v422
    %1526 = vmatpush1.msra.mxu0 %v421
    %1527 = vmatprep.subr.mxu0 %v426
    %1528 = vmatpush1.msra.mxu0 %v425
    %1529 = vmatprep.subr.mxu0 %v430
    %1530 = vmatpush1.msra.mxu0 %v429
    %1531 = vmatprep.subr.mxu0 %v434
    %1532 = vmatpush1.msra.mxu0 %v433
    %1533 = vmatprep.subr.mxu0 %v438
    %1534 = vmatpush1.msra.mxu0 %v437
    %1535 = vmatprep.subr.mxu0 %v442
    %1536 = vmatpush1.msra.mxu0 %v441
    %1537 = vmatprep.subr.mxu0 %v446
    %1538 = vmatpush1.msra.mxu0 %v445
    %1539 = vmatprep.subr.mxu0 %v450
    %1540 = vmatpush1.msra.mxu0 %v449
    %1541 = vmatprep.subr.mxu0 %v454
    %1542 = vmatpush1.msra.mxu0 %v453
    %1543 = vmatprep.subr.mxu0 %v458
    %1544 = vmatpush1.msra.mxu0 %v457
    %1545 = vmatprep.subr.mxu0 %v462
    %1546 = vmatpush1.msra.mxu0 %v461
    %1547 = vmatprep.subr.mxu0 %v466
    %1548 = vmatpush1.msra.mxu0 %v465
    %1549 = vmatprep.subr.mxu0 %v470
    %1550 = vmatpush1.msra.mxu0 %v469
    %1551 = vmatprep.subr.mxu0 %v474
    %1552 = vmatpush1.msra.mxu0 %v473
    %1553 = vmatprep.subr.mxu0 0.0
    %1554 = vmatpush1.msra.mxu0 0.0
    %1555 = vmatprep.subr.mxu0 0.0
    %1556 = vmatpush1.msra.mxu0 0.0
    %1557 = vmatprep.subr.mxu0 0.0
    %1558 = vmatpush1.msra.mxu0 0.0
    %1559 = vmatprep.subr.mxu0 0.0
    %1560 = vmatpush1.msra.mxu0 0.0
    %1561 = vmatprep.subr.mxu0 0.0
    %1562 = vmatpush1.msra.mxu0 0.0
    %1563 = vmatprep.subr.mxu0 0.0
    %1564 = vmatpush1.msra.mxu0 0.0
    %1565 = vmatprep.subr.mxu0 0.0
    %1566 = vmatpush1.msra.mxu0 0.0
    %1567 = vmatprep.subr.mxu0 0.0
    %1568 = vmatpush1.msra.mxu0 0.0
    %1569 = vmatprep.subr.mxu0 0.0
    %1570 = vmatpush1.msra.mxu0 0.0
    %1571 = vmatprep.subr.mxu0 0.0
    %1572 = vmatpush1.msra.mxu0 0.0
    %1573 = vmatprep.subr.mxu0 0.0
    %1574 = vmatpush1.msra.mxu0 0.0
    %1575 = vmatprep.subr.mxu0 0.0
    %1576 = vmatpush1.msra.mxu0 0.0
    %1577 = vmatprep.subr.mxu0 0.0
    %1578 = vmatpush1.msra.mxu0 0.0
    %1579 = vmatprep.subr.mxu0 0.0
    %1580 = vmatpush1.msra.mxu0 0.0
    %1581 = vmatprep.subr.mxu0 0.0
    %1582 = vmatpush1.msra.mxu0 0.0
    %1583 = vmatprep.subr.mxu0 0.0
    %1584 = vmatpush1.msra.mxu0 0.0
    %1585 = vmatprep.mubr.f32.mxu0 0.0
    %1586 = vmatmul.mubr.f32.gmra.mrb[0].mxu0 %v1511
    %v1587 = vpop.f32.mrb[0].mxu0
    %v1588 = vadd.f32 0.0, %v1587
    %v1589 = vpop.f32.mrb[0].mxu0
    %v1590 = vadd.f32 0.0, %v1589
    %1591 = vdwg.mxu0
    %1592 = vmatprep.subr.mxu0 %v416
    %1593 = vmatpush1.msra.mxu0 %v415
    %1594 = vmatprep.subr.mxu0 %v420
    %1595 = vmatpush1.msra.mxu0 %v419
    %1596 = vmatprep.subr.mxu0 %v424
    %1597 = vmatpush1.msra.mxu0 %v423
    %1598 = vmatprep.subr.mxu0 %v428
    %1599 = vmatpush1.msra.mxu0 %v427
    %1600 = vmatprep.subr.mxu0 %v432
    %1601 = vmatpush1.msra.mxu0 %v431
    %1602 = vmatprep.subr.mxu0 %v436
    %1603 = vmatpush1.msra.mxu0 %v435
    %1604 = vmatprep.subr.mxu0 %v440
    %1605 = vmatpush1.msra.mxu0 %v439
    %1606 = vmatprep.subr.mxu0 %v444
    %1607 = vmatpush1.msra.mxu0 %v443
    %1608 = vmatprep.subr.mxu0 %v448
    %1609 = vmatpush1.msra.mxu0 %v447
    %1610 = vmatprep.subr.mxu0 %v452
    %1611 = vmatpush1.msra.mxu0 %v451
    %1612 = vmatprep.subr.mxu0 %v456
    %1613 = vmatpush1.msra.mxu0 %v455
    %1614 = vmatprep.subr.mxu0 %v460
    %1615 = vmatpush1.msra.mxu0 %v459
    %1616 = vmatprep.subr.mxu0 %v464
    %1617 = vmatpush1.msra.mxu0 %v463
    %1618 = vmatprep.subr.mxu0 %v468
    %1619 = vmatpush1.msra.mxu0 %v467
    %1620 = vmatprep.subr.mxu0 %v472
    %1621 = vmatpush1.msra.mxu0 %v471
    %1622 = vmatprep.subr.mxu0 %v476
    %1623 = vmatpush1.msra.mxu0 %v475
    %1624 = vmatprep.subr.mxu0 0.0
    %1625 = vmatpush1.msra.mxu0 0.0
    %1626 = vmatprep.subr.mxu0 0.0
    %1627 = vmatpush1.msra.mxu0 0.0
    %1628 = vmatprep.subr.mxu0 0.0
    %1629 = vmatpush1.msra.mxu0 0.0
    %1630 = vmatprep.subr.mxu0 0.0
    %1631 = vmatpush1.msra.mxu0 0.0
    %1632 = vmatprep.subr.mxu0 0.0
    %1633 = vmatpush1.msra.mxu0 0.0
    %1634 = vmatprep.subr.mxu0 0.0
    %1635 = vmatpush1.msra.mxu0 0.0
    %1636 = vmatprep.subr.mxu0 0.0
    %1637 = vmatpush1.msra.mxu0 0.0
    %1638 = vmatprep.subr.mxu0 0.0
    %1639 = vmatpush1.msra.mxu0 0.0
    %1640 = vmatprep.subr.mxu0 0.0
    %1641 = vmatpush1.msra.mxu0 0.0
    %1642 = vmatprep.subr.mxu0 0.0
    %1643 = vmatpush1.msra.mxu0 0.0
    %1644 = vmatprep.subr.mxu0 0.0
    %1645 = vmatpush1.msra.mxu0 0.0
    %1646 = vmatprep.subr.mxu0 0.0
    %1647 = vmatpush1.msra.mxu0 0.0
    %1648 = vmatprep.subr.mxu0 0.0
    %1649 = vmatpush1.msra.mxu0 0.0
    %1650 = vmatprep.subr.mxu0 0.0
    %1651 = vmatpush1.msra.mxu0 0.0
    %1652 = vmatprep.subr.mxu0 0.0
    %1653 = vmatpush1.msra.mxu0 0.0
    %1654 = vmatprep.subr.mxu0 0.0
    %1655 = vmatpush1.msra.mxu0 0.0
    %1656 = vmatprep.mubr.f32.mxu0 0.0
    %1657 = vmatmul.mubr.f32.gmra.mrb[0].mxu0 %v1511
    %v1658 = vpop.f32.mrb[0].mxu0
    %v1659 = vadd.f32 0.0, %v1658
    %v1660 = vpop.f32.mrb[0].mxu0
    %v1661 = vadd.f32 0.0, %v1660
    %1662 = vdwg.mxu0
    %v1663 = vadd.f32 %v1517, %v1588
    %v1664 = vadd.f32 %v1518, %v1590
    %v1665 = vadd.f32 %v1519, %v1659
    %v1666 = vadd.f32 %v1520, %v1661
    %v1667 = vmul.f32 %v1663, 0.5
    %v1668 = vtanh.pop %v1667
    %v1669 = vmul.f32 %v1668, 0.5
    %v1670 = vadd.f32 %v1669, 0.5
    %v1671 = vmul.f32 %v1664, 0.5
    %v1672 = vtanh.pop %v1671
    %v1673 = vmul.f32 %v1672, 0.5
    %v1674 = vadd.f32 %v1673, 0.5
    %v1675 = vtanh.pop %v1665
    %v1676 = vmul.f32 %v1666, 0.5
    %v1677 = vtanh.pop %v1676
    %v1678 = vmul.f32 %v1677, 0.5
    %v1679 = vadd.f32 %v1678, 0.5
    %v1680 = vmul.f32 %v1674, %v1509
    %v1681 = vmul.f32 %v1670, %v1675
    %v1682 = vadd.f32 %v1680, %v1681
    %v1683 = vtanh.pop %v1682
    %v1684 = vmul.f32 %v1679, %v1683
    %s1685 = scalar_lea.vmem [#allocation3], 48
    %1686 = vst [vmem:[%s1685] sm:$0xff] %v1684
    %s1687 = smul.u32 7, 4
    %s1688 = smul.addr %s1687, 8
    %s1689 = scalar_lea.vmem [#allocation2], %s1688
    %v1690 = vld [vmem:[%s1689] sm:$0xff]
    %v1691 = vld [vmem:[%s1689 + $0x8] sm:$0xff]
    %v1692 = vld [vmem:[%s1689 + $0x10] sm:$0xff]
    %v1693 = vld [vmem:[%s1689 + $0x18] sm:$0xff]
    %1694 = vmatprep.subr.mxu0 %v414
    %1695 = vmatpush1.msra.mxu0 %v413
    %1696 = vmatprep.subr.mxu0 %v418
    %1697 = vmatpush1.msra.mxu0 %v417
    %1698 = vmatprep.subr.mxu0 %v422
    %1699 = vmatpush1.msra.mxu0 %v421
    %1700 = vmatprep.subr.mxu0 %v426
    %1701 = vmatpush1.msra.mxu0 %v425
    %1702 = vmatprep.subr.mxu0 %v430
    %1703 = vmatpush1.msra.mxu0 %v429
    %1704 = vmatprep.subr.mxu0 %v434
    %1705 = vmatpush1.msra.mxu0 %v433
    %1706 = vmatprep.subr.mxu0 %v438
    %1707 = vmatpush1.msra.mxu0 %v437
    %1708 = vmatprep.subr.mxu0 %v442
    %1709 = vmatpush1.msra.mxu0 %v441
    %1710 = vmatprep.subr.mxu0 %v446
    %1711 = vmatpush1.msra.mxu0 %v445
    %1712 = vmatprep.subr.mxu0 %v450
    %1713 = vmatpush1.msra.mxu0 %v449
    %1714 = vmatprep.subr.mxu0 %v454
    %1715 = vmatpush1.msra.mxu0 %v453
    %1716 = vmatprep.subr.mxu0 %v458
    %1717 = vmatpush1.msra.mxu0 %v457
    %1718 = vmatprep.subr.mxu0 %v462
    %1719 = vmatpush1.msra.mxu0 %v461
    %1720 = vmatprep.subr.mxu0 %v466
    %1721 = vmatpush1.msra.mxu0 %v465
    %1722 = vmatprep.subr.mxu0 %v470
    %1723 = vmatpush1.msra.mxu0 %v469
    %1724 = vmatprep.subr.mxu0 %v474
    %1725 = vmatpush1.msra.mxu0 %v473
    %1726 = vmatprep.subr.mxu0 0.0
    %1727 = vmatpush1.msra.mxu0 0.0
    %1728 = vmatprep.subr.mxu0 0.0
    %1729 = vmatpush1.msra.mxu0 0.0
    %1730 = vmatprep.subr.mxu0 0.0
    %1731 = vmatpush1.msra.mxu0 0.0
    %1732 = vmatprep.subr.mxu0 0.0
    %1733 = vmatpush1.msra.mxu0 0.0
    %1734 = vmatprep.subr.mxu0 0.0
    %1735 = vmatpush1.msra.mxu0 0.0
    %1736 = vmatprep.subr.mxu0 0.0
    %1737 = vmatpush1.msra.mxu0 0.0
    %1738 = vmatprep.subr.mxu0 0.0
    %1739 = vmatpush1.msra.mxu0 0.0
    %1740 = vmatprep.subr.mxu0 0.0
    %1741 = vmatpush1.msra.mxu0 0.0
    %1742 = vmatprep.subr.mxu0 0.0
    %1743 = vmatpush1.msra.mxu0 0.0
    %1744 = vmatprep.subr.mxu0 0.0
    %1745 = vmatpush1.msra.mxu0 0.0
    %1746 = vmatprep.subr.mxu0 0.0
    %1747 = vmatpush1.msra.mxu0 0.0
    %1748 = vmatprep.subr.mxu0 0.0
    %1749 = vmatpush1.msra.mxu0 0.0
    %1750 = vmatprep.subr.mxu0 0.0
    %1751 = vmatpush1.msra.mxu0 0.0
    %1752 = vmatprep.subr.mxu0 0.0
    %1753 = vmatpush1.msra.mxu0 0.0
    %1754 = vmatprep.subr.mxu0 0.0
    %1755 = vmatpush1.msra.mxu0 0.0
    %1756 = vmatprep.subr.mxu0 0.0
    %1757 = vmatpush1.msra.mxu0 0.0
    %1758 = vmatprep.mubr.f32.mxu0 0.0
    %1759 = vmatmul.mubr.f32.gmra.mrb[0].mxu0 %v1684
    %v1760 = vpop.f32.mrb[0].mxu0
    %v1761 = vadd.f32 0.0, %v1760
    %v1762 = vpop.f32.mrb[0].mxu0
    %v1763 = vadd.f32 0.0, %v1762
    %1764 = vdwg.mxu0
    %1765 = vmatprep.subr.mxu0 %v416
    %1766 = vmatpush1.msra.mxu0 %v415
    %1767 = vmatprep.subr.mxu0 %v420
    %1768 = vmatpush1.msra.mxu0 %v419
    %1769 = vmatprep.subr.mxu0 %v424
    %1770 = vmatpush1.msra.mxu0 %v423
    %1771 = vmatprep.subr.mxu0 %v428
    %1772 = vmatpush1.msra.mxu0 %v427
    %1773 = vmatprep.subr.mxu0 %v432
    %1774 = vmatpush1.msra.mxu0 %v431
    %1775 = vmatprep.subr.mxu0 %v436
    %1776 = vmatpush1.msra.mxu0 %v435
    %1777 = vmatprep.subr.mxu0 %v440
    %1778 = vmatpush1.msra.mxu0 %v439
    %1779 = vmatprep.subr.mxu0 %v444
    %1780 = vmatpush1.msra.mxu0 %v443
    %1781 = vmatprep.subr.mxu0 %v448
    %1782 = vmatpush1.msra.mxu0 %v447
    %1783 = vmatprep.subr.mxu0 %v452
    %1784 = vmatpush1.msra.mxu0 %v451
    %1785 = vmatprep.subr.mxu0 %v456
    %1786 = vmatpush1.msra.mxu0 %v455
    %1787 = vmatprep.subr.mxu0 %v460
    %1788 = vmatpush1.msra.mxu0 %v459
    %1789 = vmatprep.subr.mxu0 %v464
    %1790 = vmatpush1.msra.mxu0 %v463
    %1791 = vmatprep.subr.mxu0 %v468
    %1792 = vmatpush1.msra.mxu0 %v467
    %1793 = vmatprep.subr.mxu0 %v472
    %1794 = vmatpush1.msra.mxu0 %v471
    %1795 = vmatprep.subr.mxu0 %v476
    %1796 = vmatpush1.msra.mxu0 %v475
    %1797 = vmatprep.subr.mxu0 0.0
    %1798 = vmatpush1.msra.mxu0 0.0
    %1799 = vmatprep.subr.mxu0 0.0
    %1800 = vmatpush1.msra.mxu0 0.0
    %1801 = vmatprep.subr.mxu0 0.0
    %1802 = vmatpush1.msra.mxu0 0.0
    %1803 = vmatprep.subr.mxu0 0.0
    %1804 = vmatpush1.msra.mxu0 0.0
    %1805 = vmatprep.subr.mxu0 0.0
    %1806 = vmatpush1.msra.mxu0 0.0
    %1807 = vmatprep.subr.mxu0 0.0
    %1808 = vmatpush1.msra.mxu0 0.0
    %1809 = vmatprep.subr.mxu0 0.0
    %1810 = vmatpush1.msra.mxu0 0.0
    %1811 = vmatprep.subr.mxu0 0.0
    %1812 = vmatpush1.msra.mxu0 0.0
    %1813 = vmatprep.subr.mxu0 0.0
    %1814 = vmatpush1.msra.mxu0 0.0
    %1815 = vmatprep.subr.mxu0 0.0
    %1816 = vmatpush1.msra.mxu0 0.0
    %1817 = vmatprep.subr.mxu0 0.0
    %1818 = vmatpush1.msra.mxu0 0.0
    %1819 = vmatprep.subr.mxu0 0.0
    %1820 = vmatpush1.msra.mxu0 0.0
    %1821 = vmatprep.subr.mxu0 0.0
    %1822 = vmatpush1.msra.mxu0 0.0
    %1823 = vmatprep.subr.mxu0 0.0
    %1824 = vmatpush1.msra.mxu0 0.0
    %1825 = vmatprep.subr.mxu0 0.0
    %1826 = vmatpush1.msra.mxu0 0.0
    %1827 = vmatprep.subr.mxu0 0.0
    %1828 = vmatpush1.msra.mxu0 0.0
    %1829 = vmatprep.mubr.f32.mxu0 0.0
    %1830 = vmatmul.mubr.f32.gmra.mrb[0].mxu0 %v1684
    %v1831 = vpop.f32.mrb[0].mxu0
    %v1832 = vadd.f32 0.0, %v1831
    %v1833 = vpop.f32.mrb[0].mxu0
    %v1834 = vadd.f32 0.0, %v1833
    %1835 = vdwg.mxu0
    %v1836 = vadd.f32 %v1690, %v1761
    %v1837 = vadd.f32 %v1691, %v1763
    %v1838 = vadd.f32 %v1692, %v1832
    %v1839 = vadd.f32 %v1693, %v1834
    %v1840 = vmul.f32 %v1836, 0.5
    %v1841 = vtanh.pop %v1840
    %v1842 = vmul.f32 %v1841, 0.5
    %v1843 = vadd.f32 %v1842, 0.5
    %v1844 = vmul.f32 %v1837, 0.5
    %v1845 = vtanh.pop %v1844
    %v1846 = vmul.f32 %v1845, 0.5
    %v1847 = vadd.f32 %v1846, 0.5
    %v1848 = vtanh.pop %v1838
    %v1849 = vmul.f32 %v1839, 0.5
    %v1850 = vtanh.pop %v1849
    %v1851 = vmul.f32 %v1850, 0.5
    %v1852 = vadd.f32 %v1851, 0.5
    %v1853 = vmul.f32 %v1847, %v1682
    %v1854 = vmul.f32 %v1843, %v1848
    %v1855 = vadd.f32 %v1853, %v1854
    %v1856 = vtanh.pop %v1855
    %v1857 = vmul.f32 %v1852, %v1856
    %s1858 = scalar_lea.vmem [#allocation3], 56
    %1859 = vst [vmem:[%s1858] sm:$0xff] %v1857
    %v1860 = vld [vmem:[#allocation3] sm:$0xff]
    %v1861 = vld [vmem:[#allocation3 + $0x8] sm:$0xff]
    %v1862 = vld [vmem:[#allocation3 + $0x10] sm:$0xff]
    %v1863 = vld [vmem:[#allocation3 + $0x18] sm:$0xff]
    %v1864 = vld [vmem:[#allocation3 + $0x20] sm:$0xff]
    %v1865 = vld [vmem:[#allocation3 + $0x28] sm:$0xff]
    %v1866 = vld [vmem:[#allocation3 + $0x30] sm:$0xff]
    %v1867 = vld [vmem:[#allocation3 + $0x38] sm:$0xff]
    %v1868 = vld [vmem:[#allocation8] sm:$0xff]
    %v1869 = vld [vmem:[#allocation8 + $0x8] sm:$0xff]
    %v1870 = vld [vmem:[#allocation8 + $0x10] sm:$0xff]
    %v1871 = vld [vmem:[#allocation8 + $0x18] sm:$0xff]
    %v1872 = vld [vmem:[#allocation8 + $0x20] sm:$0xff]
    %v1873 = vld [vmem:[#allocation8 + $0x28] sm:$0xff]
    %v1874 = vld [vmem:[#allocation8 + $0x30] sm:$0xff]
    %v1875 = vld [vmem:[#allocation8 + $0x38] sm:$0xff]
    %v1876 = vld [vmem:[#allocation8 + $0x40] sm:$0xff]
    %v1877 = vld [vmem:[#allocation8 + $0x48] sm:$0xff]
    %v1878 = vld [vmem:[#allocation8 + $0x50] sm:$0xff]
    %v1879 = vld [vmem:[#allocation8 + $0x58] sm:$0xff]
    %v1880 = vld [vmem:[#allocation8 + $0x60] sm:$0xff]
    %v1881 = vld [vmem:[#allocation8 + $0x68] sm:$0xff]
    %v1882 = vld [vmem:[#allocation8 + $0x70] sm:$0xff]
    %v1883 = vld [vmem:[#allocation8 + $0x78] sm:$0xff]
    %v1884 = vld [vmem:[#allocation8 + $0x80] sm:$0xff]
    %v1885 = vld [vmem:[#allocation8 + $0x88] sm:$0xff]
    %v1886 = vld [vmem:[#allocation8 + $0x90] sm:$0xff]
    %v1887 = vld [vmem:[#allocation8 + $0x98] sm:$0xff]
    %v1888 = vld [vmem:[#allocation8 + $0xa0] sm:$0xff]
    %v1889 = vld [vmem:[#allocation8 + $0xa8] sm:$0xff]
    %v1890 = vld [vmem:[#allocation8 + $0xb0] sm:$0xff]
    %v1891 = vld [vmem:[#allocation8 + $0xb8] sm:$0xff]
    %v1892 = vld [vmem:[#allocation8 + $0xc0] sm:$0xff]
    %v1893 = vld [vmem:[#allocation8 + $0xc8] sm:$0xff]
    %v1894 = vld [vmem:[#allocation8 + $0xd0] sm:$0xff]
    %v1895 = vld [vmem:[#allocation8 + $0xd8] sm:$0xff]
    %v1896 = vld [vmem:[#allocation8 + $0xe0] sm:$0xff]
    %v1897 = vld [vmem:[#allocation8 + $0xe8] sm:$0xff]
    %v1898 = vld [vmem:[#allocation8 + $0xf0] sm:$0xff]
    %v1899 = vld [vmem:[#allocation8 + $0xf8] sm:$0xff]
    %v1900 = vld [vmem:[#allocation8 + $0x100] sm:$0xff]
    %v1901 = vld [vmem:[#allocation8 + $0x108] sm:$0xff]
    %v1902 = vld [vmem:[#allocation8 + $0x110] sm:$0xff]
    %v1903 = vld [vmem:[#allocation8 + $0x118] sm:$0xff]
    %v1904 = vld [vmem:[#allocation8 + $0x120] sm:$0xff]
    %v1905 = vld [vmem:[#allocation8 + $0x128] sm:$0xff]
    %v1906 = vld [vmem:[#allocation8 + $0x130] sm:$0xff]
    %v1907 = vld [vmem:[#allocation8 + $0x138] sm:$0xff]
    %v1908 = vld [vmem:[#allocation8 + $0x140] sm:$0xff]
    %v1909 = vld [vmem:[#allocation8 + $0x148] sm:$0xff]
    %v1910 = vld [vmem:[#allocation8 + $0x150] sm:$0xff]
    %v1911 = vld [vmem:[#allocation8 + $0x158] sm:$0xff]
    %v1912 = vld [vmem:[#allocation8 + $0x160] sm:$0xff]
    %v1913 = vld [vmem:[#allocation8 + $0x168] sm:$0xff]
    %v1914 = vld [vmem:[#allocation8 + $0x170] sm:$0xff]
    %v1915 = vld [vmem:[#allocation8 + $0x178] sm:$0xff]
    %v1916 = vld [vmem:[#allocation8 + $0x180] sm:$0xff]
    %v1917 = vld [vmem:[#allocation8 + $0x188] sm:$0xff]
    %v1918 = vld [vmem:[#allocation8 + $0x190] sm:$0xff]
    %v1919 = vld [vmem:[#allocation8 + $0x198] sm:$0xff]
    %v1920 = vld [vmem:[#allocation8 + $0x1a0] sm:$0xff]
    %v1921 = vld [vmem:[#allocation8 + $0x1a8] sm:$0xff]
    %v1922 = vld [vmem:[#allocation8 + $0x1b0] sm:$0xff]
    %v1923 = vld [vmem:[#allocation8 + $0x1b8] sm:$0xff]
    %v1924 = vld [vmem:[#allocation8 + $0x1c0] sm:$0xff]
    %v1925 = vld [vmem:[#allocation8 + $0x1c8] sm:$0xff]
    %v1926 = vld [vmem:[#allocation8 + $0x1d0] sm:$0xff]
    %v1927 = vld [vmem:[#allocation8 + $0x1d8] sm:$0xff]
    %v1928 = vld [vmem:[#allocation8 + $0x1e0] sm:$0xff]
    %v1929 = vld [vmem:[#allocation8 + $0x1e8] sm:$0xff]
    %v1930 = vld [vmem:[#allocation8 + $0x1f0] sm:$0xff]
    %v1931 = vld [vmem:[#allocation8 + $0x1f8] sm:$0xff]
    %v1932 = vld [vmem:[%s6] sm:$0xf]
    %v1934 = vlaneseq
    %v1935 = vshrl.u32 %v1934, 7
    %v1936 = vsub.s32 0, %v1935
    %v1937 = vrot.slane %v1932, %v1936
    %v1938 = vlaneseq
    %v1939 = vshrl.u32 %v1938, 7
    %v1940 = vsub.s32 1, %v1939
    %v1941 = vrot.slane %v1932, %v1940
    %v1942 = vlaneseq
    %v1943 = vshrl.u32 %v1942, 7
    %v1944 = vsub.s32 2, %v1943
    %v1945 = vrot.slane %v1932, %v1944
    %v1946 = vlaneseq
    %v1947 = vshrl.u32 %v1946, 7
    %v1948 = vsub.s32 3, %v1947
    %v1949 = vrot.slane %v1932, %v1948
    %1954 = vmatprep.subr.mxu0 %v1869
    %1955 = vmatpush1.msra.mxu0 %v1868
    %1956 = vmatprep.subr.mxu0 %v1873
    %1957 = vmatpush1.msra.mxu0 %v1872
    %1958 = vmatprep.subr.mxu0 %v1877
    %1959 = vmatpush1.msra.mxu0 %v1876
    %1960 = vmatprep.subr.mxu0 %v1881
    %1961 = vmatpush1.msra.mxu0 %v1880
    %1962 = vmatprep.subr.mxu0 %v1885
    %1963 = vmatpush1.msra.mxu0 %v1884
    %1964 = vmatprep.subr.mxu0 %v1889
    %1965 = vmatpush1.msra.mxu0 %v1888
    %1966 = vmatprep.subr.mxu0 %v1893
    %1967 = vmatpush1.msra.mxu0 %v1892
    %1968 = vmatprep.subr.mxu0 %v1897
    %1969 = vmatpush1.msra.mxu0 %v1896
    %1970 = vmatprep.subr.mxu0 %v1901
    %1971 = vmatpush1.msra.mxu0 %v1900
    %1972 = vmatprep.subr.mxu0 %v1905
    %1973 = vmatpush1.msra.mxu0 %v1904
    %1974 = vmatprep.subr.mxu0 %v1909
    %1975 = vmatpush1.msra.mxu0 %v1908
    %1976 = vmatprep.subr.mxu0 %v1913
    %1977 = vmatpush1.msra.mxu0 %v1912
    %1978 = vmatprep.subr.mxu0 %v1917
    %1979 = vmatpush1.msra.mxu0 %v1916
    %1980 = vmatprep.subr.mxu0 %v1921
    %1981 = vmatpush1.msra.mxu0 %v1920
    %1982 = vmatprep.subr.mxu0 %v1925
    %1983 = vmatpush1.msra.mxu0 %v1924
    %1984 = vmatprep.subr.mxu0 %v1929
    %1985 = vmatpush1.msra.mxu0 %v1928
    %1986 = vmatprep.subr.mxu0 0.0
    %1987 = vmatpush1.msra.mxu0 0.0
    %1988 = vmatprep.subr.mxu0 0.0
    %1989 = vmatpush1.msra.mxu0 0.0
    %1990 = vmatprep.subr.mxu0 0.0
    %1991 = vmatpush1.msra.mxu0 0.0
    %1992 = vmatprep.subr.mxu0 0.0
    %1993 = vmatpush1.msra.mxu0 0.0
    %1994 = vmatprep.subr.mxu0 0.0
    %1995 = vmatpush1.msra.mxu0 0.0
    %1996 = vmatprep.subr.mxu0 0.0
    %1997 = vmatpush1.msra.mxu0 0.0
    %1998 = vmatprep.subr.mxu0 0.0
    %1999 = vmatpush1.msra.mxu0 0.0
    %2000 = vmatprep.subr.mxu0 0.0
    %2001 = vmatpush1.msra.mxu0 0.0
    %2002 = vmatprep.subr.mxu0 0.0
    %2003 = vmatpush1.msra.mxu0 0.0
    %2004 = vmatprep.subr.mxu0 0.0
    %2005 = vmatpush1.msra.mxu0 0.0
    %2006 = vmatprep.subr.mxu0 0.0
    %2007 = vmatpush1.msra.mxu0 0.0
    %2008 = vmatprep.subr.mxu0 0.0
    %2009 = vmatpush1.msra.mxu0 0.0
    %2010 = vmatprep.subr.mxu0 0.0
    %2011 = vmatpush1.msra.mxu0 0.0
    %2012 = vmatprep.subr.mxu0 0.0
    %2013 = vmatpush1.msra.mxu0 0.0
    %2014 = vmatprep.subr.mxu0 0.0
    %2015 = vmatpush1.msra.mxu0 0.0
    %2016 = vmatprep.subr.mxu0 0.0
    %2017 = vmatpush1.msra.mxu0 0.0
    %2018 = vmatprep.mubr.f32.mxu0 0.0
    %2019 = vmatmul.mubr.f32.gmra.mrb[0].mxu0 %v1860
    %v2020 = vpop.f32.mrb[0].mxu0
    %v2021 = vadd.f32 %v1937, %v2020
    %v2022 = vpop.f32.mrb[0].mxu0
    %v2023 = vadd.f32 %v1941, %v2022
    %2024 = vmatprep.mubr.f32.mxu0 0.0
    %2025 = vmatmul.mubr.f32.gmra.mrb[0].mxu0 %v1861
    %v2026 = vpop.f32.mrb[0].mxu0
    %v2027 = vadd.f32 %v1937, %v2026
    %v2028 = vpop.f32.mrb[0].mxu0
    %v2029 = vadd.f32 %v1941, %v2028
    %2030 = vmatprep.mubr.f32.mxu0 0.0
    %2031 = vmatmul.mubr.f32.gmra.mrb[0].mxu0 %v1862
    %v2032 = vpop.f32.mrb[0].mxu0
    %v2033 = vadd.f32 %v1937, %v2032
    %v2034 = vpop.f32.mrb[0].mxu0
    %v2035 = vadd.f32 %v1941, %v2034
    %2036 = vmatprep.mubr.f32.mxu0 0.0
    %2037 = vmatmul.mubr.f32.gmra.mrb[0].mxu0 %v1863
    %v2038 = vpop.f32.mrb[0].mxu0
    %v2039 = vadd.f32 %v1937, %v2038
    %v2040 = vpop.f32.mrb[0].mxu0
    %v2041 = vadd.f32 %v1941, %v2040
    %2042 = vmatprep.mubr.f32.mxu0 0.0
    %2043 = vmatmul.mubr.f32.gmra.mrb[0].mxu0 %v1864
    %v2044 = vpop.f32.mrb[0].mxu0
    %v2045 = vadd.f32 %v1937, %v2044
    %v2046 = vpop.f32.mrb[0].mxu0
    %v2047 = vadd.f32 %v1941, %v2046
    %2048 = vmatprep.mubr.f32.mxu0 0.0
    %2049 = vmatmul.mubr.f32.gmra.mrb[0].mxu0 %v1865
    %v2050 = vpop.f32.mrb[0].mxu0
    %v2051 = vadd.f32 %v1937, %v2050
    %v2052 = vpop.f32.mrb[0].mxu0
    %v2053 = vadd.f32 %v1941, %v2052
    %2054 = vmatprep.mubr.f32.mxu0 0.0
    %2055 = vmatmul.mubr.f32.gmra.mrb[0].mxu0 %v1866
    %v2056 = vpop.f32.mrb[0].mxu0
    %v2057 = vadd.f32 %v1937, %v2056
    %v2058 = vpop.f32.mrb[0].mxu0
    %v2059 = vadd.f32 %v1941, %v2058
    %2060 = vmatprep.mubr.f32.mxu0 0.0
    %2061 = vmatmul.mubr.f32.gmra.mrb[0].mxu0 %v1867
    %v2062 = vpop.f32.mrb[0].mxu0
    %v2063 = vadd.f32 %v1937, %v2062
    %v2064 = vpop.f32.mrb[0].mxu0
    %v2065 = vadd.f32 %v1941, %v2064
    %2066 = vdwg.mxu0
    %2067 = vmatprep.subr.mxu0 %v1871
    %2068 = vmatpush1.msra.mxu0 %v1870
    %2069 = vmatprep.subr.mxu0 %v1875
    %2070 = vmatpush1.msra.mxu0 %v1874
    %2071 = vmatprep.subr.mxu0 %v1879
    %2072 = vmatpush1.msra.mxu0 %v1878
    %2073 = vmatprep.subr.mxu0 %v1883
    %2074 = vmatpush1.msra.mxu0 %v1882
    %2075 = vmatprep.subr.mxu0 %v1887
    %2076 = vmatpush1.msra.mxu0 %v1886
    %2077 = vmatprep.subr.mxu0 %v1891
    %2078 = vmatpush1.msra.mxu0 %v1890
    %2079 = vmatprep.subr.mxu0 %v1895
    %2080 = vmatpush1.msra.mxu0 %v1894
    %2081 = vmatprep.subr.mxu0 %v1899
    %2082 = vmatpush1.msra.mxu0 %v1898
    %2083 = vmatprep.subr.mxu0 %v1903
    %2084 = vmatpush1.msra.mxu0 %v1902
    %2085 = vmatprep.subr.mxu0 %v1907
    %2086 = vmatpush1.msra.mxu0 %v1906
    %2087 = vmatprep.subr.mxu0 %v1911
    %2088 = vmatpush1.msra.mxu0 %v1910
    %2089 = vmatprep.subr.mxu0 %v1915
    %2090 = vmatpush1.msra.mxu0 %v1914
    %2091 = vmatprep.subr.mxu0 %v1919
    %2092 = vmatpush1.msra.mxu0 %v1918
    %2093 = vmatprep.subr.mxu0 %v1923
    %2094 = vmatpush1.msra.mxu0 %v1922
    %2095 = vmatprep.subr.mxu0 %v1927
    %2096 = vmatpush1.msra.mxu0 %v1926
    %2097 = vmatprep.subr.mxu0 %v1931
    %2098 = vmatpush1.msra.mxu0 %v1930
    %2099 = vmatprep.subr.mxu0 0.0
    %2100 = vmatpush1.msra.mxu0 0.0
    %2101 = vmatprep.subr.mxu0 0.0
    %2102 = vmatpush1.msra.mxu0 0.0
    %2103 = vmatprep.subr.mxu0 0.0
    %2104 = vmatpush1.msra.mxu0 0.0
    %2105 = vmatprep.subr.mxu0 0.0
    %2106 = vmatpush1.msra.mxu0 0.0
    %2107 = vmatprep.subr.mxu0 0.0
    %2108 = vmatpush1.msra.mxu0 0.0
    %2109 = vmatprep.subr.mxu0 0.0
    %2110 = vmatpush1.msra.mxu0 0.0
    %2111 = vmatprep.subr.mxu0 0.0
    %2112 = vmatpush1.msra.mxu0 0.0
    %2113 = vmatprep.subr.mxu0 0.0
    %2114 = vmatpush1.msra.mxu0 0.0
    %2115 = vmatprep.subr.mxu0 0.0
    %2116 = vmatpush1.msra.mxu0 0.0
    %2117 = vmatprep.subr.mxu0 0.0
    %2118 = vmatpush1.msra.mxu0 0.0
    %2119 = vmatprep.subr.mxu0 0.0
    %2120 = vmatpush1.msra.mxu0 0.0
    %2121 = vmatprep.subr.mxu0 0.0
    %2122 = vmatpush1.msra.mxu0 0.0
    %2123 = vmatprep.subr.mxu0 0.0
    %2124 = vmatpush1.msra.mxu0 0.0
    %2125 = vmatprep.subr.mxu0 0.0
    %2126 = vmatpush1.msra.mxu0 0.0
    %2127 = vmatprep.subr.mxu0 0.0
    %2128 = vmatpush1.msra.mxu0 0.0
    %2129 = vmatprep.subr.mxu0 0.0
    %2130 = vmatpush1.msra.mxu0 0.0
    %2131 = vmatprep.mubr.f32.mxu0 0.0
    %2132 = vmatmul.mubr.f32.gmra.mrb[0].mxu0 %v1860
    %v2133 = vpop.f32.mrb[0].mxu0
    %v2134 = vadd.f32 %v1945, %v2133
    %v2135 = vpop.f32.mrb[0].mxu0
    %v2136 = vadd.f32 %v1949, %v2135
    %2137 = vmatprep.mubr.f32.mxu0 0.0
    %2138 = vmatmul.mubr.f32.gmra.mrb[0].mxu0 %v1861
    %v2139 = vpop.f32.mrb[0].mxu0
    %v2140 = vadd.f32 %v1945, %v2139
    %v2141 = vpop.f32.mrb[0].mxu0
    %v2142 = vadd.f32 %v1949, %v2141
    %2143 = vmatprep.mubr.f32.mxu0 0.0
    %2144 = vmatmul.mubr.f32.gmra.mrb[0].mxu0 %v1862
    %v2145 = vpop.f32.mrb[0].mxu0
    %v2146 = vadd.f32 %v1945, %v2145
    %v2147 = vpop.f32.mrb[0].mxu0
    %v2148 = vadd.f32 %v1949, %v2147
    %2149 = vmatprep.mubr.f32.mxu0 0.0
    %2150 = vmatmul.mubr.f32.gmra.mrb[0].mxu0 %v1863
    %v2151 = vpop.f32.mrb[0].mxu0
    %v2152 = vadd.f32 %v1945, %v2151
    %v2153 = vpop.f32.mrb[0].mxu0
    %v2154 = vadd.f32 %v1949, %v2153
    %2155 = vmatprep.mubr.f32.mxu0 0.0
    %2156 = vmatmul.mubr.f32.gmra.mrb[0].mxu0 %v1864
    %v2157 = vpop.f32.mrb[0].mxu0
    %v2158 = vadd.f32 %v1945, %v2157
    %v2159 = vpop.f32.mrb[0].mxu0
    %v2160 = vadd.f32 %v1949, %v2159
    %2161 = vmatprep.mubr.f32.mxu0 0.0
    %2162 = vmatmul.mubr.f32.gmra.mrb[0].mxu0 %v1865
    %v2163 = vpop.f32.mrb[0].mxu0
    %v2164 = vadd.f32 %v1945, %v2163
    %v2165 = vpop.f32.mrb[0].mxu0
    %v2166 = vadd.f32 %v1949, %v2165
    %2167 = vmatprep.mubr.f32.mxu0 0.0
    %2168 = vmatmul.mubr.f32.gmra.mrb[0].mxu0 %v1866
    %v2169 = vpop.f32.mrb[0].mxu0
    %v2170 = vadd.f32 %v1945, %v2169
    %v2171 = vpop.f32.mrb[0].mxu0
    %v2172 = vadd.f32 %v1949, %v2171
    %2173 = vmatprep.mubr.f32.mxu0 0.0
    %2174 = vmatmul.mubr.f32.gmra.mrb[0].mxu0 %v1867
    %v2175 = vpop.f32.mrb[0].mxu0
    %v2176 = vadd.f32 %v1945, %v2175
    %v2177 = vpop.f32.mrb[0].mxu0
    %v2178 = vadd.f32 %v1949, %v2177
    %2179 = vdwg.mxu0
    %2180 = vst [vmem:[#allocation2] sm:$0xff] %v2021
    %2181 = vst [vmem:[#allocation2 + $0x8] sm:$0xff] %v2023
    %2182 = vst [vmem:[#allocation2 + $0x10] sm:$0xff] %v2134
    %2183 = vst [vmem:[#allocation2 + $0x18] sm:$0xff] %v2136
    %2184 = vst [vmem:[#allocation2 + $0x20] sm:$0xff] %v2027
    %2185 = vst [vmem:[#allocation2 + $0x28] sm:$0xff] %v2029
    %2186 = vst [vmem:[#allocation2 + $0x30] sm:$0xff] %v2140
    %2187 = vst [vmem:[#allocation2 + $0x38] sm:$0xff] %v2142
    %2188 = vst [vmem:[#allocation2 + $0x40] sm:$0xff] %v2033
    %2189 = vst [vmem:[#allocation2 + $0x48] sm:$0xff] %v2035
    %2190 = vst [vmem:[#allocation2 + $0x50] sm:$0xff] %v2146
    %2191 = vst [vmem:[#allocation2 + $0x58] sm:$0xff] %v2148
    %2192 = vst [vmem:[#allocation2 + $0x60] sm:$0xff] %v2039
    %2193 = vst [vmem:[#allocation2 + $0x68] sm:$0xff] %v2041
    %2194 = vst [vmem:[#allocation2 + $0x70] sm:$0xff] %v2152
    %2195 = vst [vmem:[#allocation2 + $0x78] sm:$0xff] %v2154
    %2196 = vst [vmem:[#allocation2 + $0x80] sm:$0xff] %v2045
    %2197 = vst [vmem:[#allocation2 + $0x88] sm:$0xff] %v2047
    %2198 = vst [vmem:[#allocation2 + $0x90] sm:$0xff] %v2158
    %2199 = vst [vmem:[#allocation2 + $0x98] sm:$0xff] %v2160
    %2200 = vst [vmem:[#allocation2 + $0xa0] sm:$0xff] %v2051
    %2201 = vst [vmem:[#allocation2 + $0xa8] sm:$0xff] %v2053
    %2202 = vst [vmem:[#allocation2 + $0xb0] sm:$0xff] %v2164
    %2203 = vst [vmem:[#allocation2 + $0xb8] sm:$0xff] %v2166
    %2204 = vst [vmem:[#allocation2 + $0xc0] sm:$0xff] %v2057
    %2205 = vst [vmem:[#allocation2 + $0xc8] sm:$0xff] %v2059
    %2206 = vst [vmem:[#allocation2 + $0xd0] sm:$0xff] %v2170
    %2207 = vst [vmem:[#allocation2 + $0xd8] sm:$0xff] %v2172
    %2208 = vst [vmem:[#allocation2 + $0xe0] sm:$0xff] %v2063
    %2209 = vst [vmem:[#allocation2 + $0xe8] sm:$0xff] %v2065
    %2210 = vst [vmem:[#allocation2 + $0xf0] sm:$0xff] %v2176
    %2211 = vst [vmem:[#allocation2 + $0xf8] sm:$0xff] %v2178
    %v2212 = vld [vmem:[#allocation9] sm:$0xff]
    %v2213 = vld [vmem:[#allocation9 + $0x8] sm:$0xff]
    %v2214 = vld [vmem:[#allocation9 + $0x10] sm:$0xff]
    %v2215 = vld [vmem:[#allocation9 + $0x18] sm:$0xff]
    %v2216 = vld [vmem:[#allocation9 + $0x20] sm:$0xff]
    %v2217 = vld [vmem:[#allocation9 + $0x28] sm:$0xff]
    %v2218 = vld [vmem:[#allocation9 + $0x30] sm:$0xff]
    %v2219 = vld [vmem:[#allocation9 + $0x38] sm:$0xff]
    %v2220 = vld [vmem:[#allocation9 + $0x40] sm:$0xff]
    %v2221 = vld [vmem:[#allocation9 + $0x48] sm:$0xff]
    %v2222 = vld [vmem:[#allocation9 + $0x50] sm:$0xff]
    %v2223 = vld [vmem:[#allocation9 + $0x58] sm:$0xff]
    %v2224 = vld [vmem:[#allocation9 + $0x60] sm:$0xff]
    %v2225 = vld [vmem:[#allocation9 + $0x68] sm:$0xff]
    %v2226 = vld [vmem:[#allocation9 + $0x70] sm:$0xff]
    %v2227 = vld [vmem:[#allocation9 + $0x78] sm:$0xff]
    %v2228 = vld [vmem:[#allocation9 + $0x80] sm:$0xff]
    %v2229 = vld [vmem:[#allocation9 + $0x88] sm:$0xff]
    %v2230 = vld [vmem:[#allocation9 + $0x90] sm:$0xff]
    %v2231 = vld [vmem:[#allocation9 + $0x98] sm:$0xff]
    %v2232 = vld [vmem:[#allocation9 + $0xa0] sm:$0xff]
    %v2233 = vld [vmem:[#allocation9 + $0xa8] sm:$0xff]
    %v2234 = vld [vmem:[#allocation9 + $0xb0] sm:$0xff]
    %v2235 = vld [vmem:[#allocation9 + $0xb8] sm:$0xff]
    %v2236 = vld [vmem:[#allocation9 + $0xc0] sm:$0xff]
    %v2237 = vld [vmem:[#allocation9 + $0xc8] sm:$0xff]
    %v2238 = vld [vmem:[#allocation9 + $0xd0] sm:$0xff]
    %v2239 = vld [vmem:[#allocation9 + $0xd8] sm:$0xff]
    %v2240 = vld [vmem:[#allocation9 + $0xe0] sm:$0xff]
    %v2241 = vld [vmem:[#allocation9 + $0xe8] sm:$0xff]
    %v2242 = vld [vmem:[#allocation9 + $0xf0] sm:$0xff]
    %v2243 = vld [vmem:[#allocation9 + $0xf8] sm:$0xff]
    %v2244 = vld [vmem:[#allocation9 + $0x100] sm:$0xff]
    %v2245 = vld [vmem:[#allocation9 + $0x108] sm:$0xff]
    %v2246 = vld [vmem:[#allocation9 + $0x110] sm:$0xff]
    %v2247 = vld [vmem:[#allocation9 + $0x118] sm:$0xff]
    %v2248 = vld [vmem:[#allocation9 + $0x120] sm:$0xff]
    %v2249 = vld [vmem:[#allocation9 + $0x128] sm:$0xff]
    %v2250 = vld [vmem:[#allocation9 + $0x130] sm:$0xff]
    %v2251 = vld [vmem:[#allocation9 + $0x138] sm:$0xff]
    %v2252 = vld [vmem:[#allocation9 + $0x140] sm:$0xff]
    %v2253 = vld [vmem:[#allocation9 + $0x148] sm:$0xff]
    %v2254 = vld [vmem:[#allocation9 + $0x150] sm:$0xff]
    %v2255 = vld [vmem:[#allocation9 + $0x158] sm:$0xff]
    %v2256 = vld [vmem:[#allocation9 + $0x160] sm:$0xff]
    %v2257 = vld [vmem:[#allocation9 + $0x168] sm:$0xff]
    %v2258 = vld [vmem:[#allocation9 + $0x170] sm:$0xff]
    %v2259 = vld [vmem:[#allocation9 + $0x178] sm:$0xff]
    %v2260 = vld [vmem:[#allocation9 + $0x180] sm:$0xff]
    %v2261 = vld [vmem:[#allocation9 + $0x188] sm:$0xff]
    %v2262 = vld [vmem:[#allocation9 + $0x190] sm:$0xff]
    %v2263 = vld [vmem:[#allocation9 + $0x198] sm:$0xff]
    %v2264 = vld [vmem:[#allocation9 + $0x1a0] sm:$0xff]
    %v2265 = vld [vmem:[#allocation9 + $0x1a8] sm:$0xff]
    %v2266 = vld [vmem:[#allocation9 + $0x1b0] sm:$0xff]
    %v2267 = vld [vmem:[#allocation9 + $0x1b8] sm:$0xff]
    %v2268 = vld [vmem:[#allocation9 + $0x1c0] sm:$0xff]
    %v2269 = vld [vmem:[#allocation9 + $0x1c8] sm:$0xff]
    %v2270 = vld [vmem:[#allocation9 + $0x1d0] sm:$0xff]
    %v2271 = vld [vmem:[#allocation9 + $0x1d8] sm:$0xff]
    %v2272 = vld [vmem:[#allocation9 + $0x1e0] sm:$0xff]
    %v2273 = vld [vmem:[#allocation9 + $0x1e8] sm:$0xff]
    %v2274 = vld [vmem:[#allocation9 + $0x1f0] sm:$0xff]
    %v2275 = vld [vmem:[#allocation9 + $0x1f8] sm:$0xff]
    %v2276 = vld [vmem:[%s479] sm:$0xff]
    %v2277 = vld [vmem:[%s479 + $0x8] sm:$0xff]
    %v2278 = vld [vmem:[%s479 + $0x10] sm:$0xff]
    %v2279 = vld [vmem:[%s479 + $0x18] sm:$0xff]
    %2280 = vmatprep.subr.mxu0 %v2213
    %2281 = vmatpush1.msra.mxu0 %v2212
    %2282 = vmatprep.subr.mxu0 %v2217
    %2283 = vmatpush1.msra.mxu0 %v2216
    %2284 = vmatprep.subr.mxu0 %v2221
    %2285 = vmatpush1.msra.mxu0 %v2220
    %2286 = vmatprep.subr.mxu0 %v2225
    %2287 = vmatpush1.msra.mxu0 %v2224
    %2288 = vmatprep.subr.mxu0 %v2229
    %2289 = vmatpush1.msra.mxu0 %v2228
    %2290 = vmatprep.subr.mxu0 %v2233
    %2291 = vmatpush1.msra.mxu0 %v2232
    %2292 = vmatprep.subr.mxu0 %v2237
    %2293 = vmatpush1.msra.mxu0 %v2236
    %2294 = vmatprep.subr.mxu0 %v2241
    %2295 = vmatpush1.msra.mxu0 %v2240
    %2296 = vmatprep.subr.mxu0 %v2245
    %2297 = vmatpush1.msra.mxu0 %v2244
    %2298 = vmatprep.subr.mxu0 %v2249
    %2299 = vmatpush1.msra.mxu0 %v2248
    %2300 = vmatprep.subr.mxu0 %v2253
    %2301 = vmatpush1.msra.mxu0 %v2252
    %2302 = vmatprep.subr.mxu0 %v2257
    %2303 = vmatpush1.msra.mxu0 %v2256
    %2304 = vmatprep.subr.mxu0 %v2261
    %2305 = vmatpush1.msra.mxu0 %v2260
    %2306 = vmatprep.subr.mxu0 %v2265
    %2307 = vmatpush1.msra.mxu0 %v2264
    %2308 = vmatprep.subr.mxu0 %v2269
    %2309 = vmatpush1.msra.mxu0 %v2268
    %2310 = vmatprep.subr.mxu0 %v2273
    %2311 = vmatpush1.msra.mxu0 %v2272
    %2312 = vmatprep.subr.mxu0 0.0
    %2313 = vmatpush1.msra.mxu0 0.0
    %2314 = vmatprep.subr.mxu0 0.0
    %2315 = vmatpush1.msra.mxu0 0.0
    %2316 = vmatprep.subr.mxu0 0.0
    %2317 = vmatpush1.msra.mxu0 0.0
    %2318 = vmatprep.subr.mxu0 0.0
    %2319 = vmatpush1.msra.mxu0 0.0
    %2320 = vmatprep.subr.mxu0 0.0
    %2321 = vmatpush1.msra.mxu0 0.0
    %2322 = vmatprep.subr.mxu0 0.0
    %2323 = vmatpush1.msra.mxu0 0.0
    %2324 = vmatprep.subr.mxu0 0.0
    %2325 = vmatpush1.msra.mxu0 0.0
    %2326 = vmatprep.subr.mxu0 0.0
    %2327 = vmatpush1.msra.mxu0 0.0
    %2328 = vmatprep.subr.mxu0 0.0
    %2329 = vmatpush1.msra.mxu0 0.0
    %2330 = vmatprep.subr.mxu0 0.0
    %2331 = vmatpush1.msra.mxu0 0.0
    %2332 = vmatprep.subr.mxu0 0.0
    %2333 = vmatpush1.msra.mxu0 0.0
    %2334 = vmatprep.subr.mxu0 0.0
    %2335 = vmatpush1.msra.mxu0 0.0
    %2336 = vmatprep.subr.mxu0 0.0
    %2337 = vmatpush1.msra.mxu0 0.0
    %2338 = vmatprep.subr.mxu0 0.0
    %2339 = vmatpush1.msra.mxu0 0.0
    %2340 = vmatprep.subr.mxu0 0.0
    %2341 = vmatpush1.msra.mxu0 0.0
    %2342 = vmatprep.subr.mxu0 0.0
    %2343 = vmatpush1.msra.mxu0 0.0
    %2344 = vmatprep.mubr.f32.mxu0 0.0
    %2345 = vmatmul.mubr.f32.gmra.mrb[0].mxu0 0.0
    %v2346 = vpop.f32.mrb[0].mxu0
    %v2347 = vadd.f32 0.0, %v2346
    %v2348 = vpop.f32.mrb[0].mxu0
    %v2349 = vadd.f32 0.0, %v2348
    %2350 = vdwg.mxu0
    %2351 = vmatprep.subr.mxu0 %v2215
    %2352 = vmatpush1.msra.mxu0 %v2214
    %2353 = vmatprep.subr.mxu0 %v2219
    %2354 = vmatpush1.msra.mxu0 %v2218
    %2355 = vmatprep.subr.mxu0 %v2223
    %2356 = vmatpush1.msra.mxu0 %v2222
    %2357 = vmatprep.subr.mxu0 %v2227
    %2358 = vmatpush1.msra.mxu0 %v2226
    %2359 = vmatprep.subr.mxu0 %v2231
    %2360 = vmatpush1.msra.mxu0 %v2230
    %2361 = vmatprep.subr.mxu0 %v2235
    %2362 = vmatpush1.msra.mxu0 %v2234
    %2363 = vmatprep.subr.mxu0 %v2239
    %2364 = vmatpush1.msra.mxu0 %v2238
    %2365 = vmatprep.subr.mxu0 %v2243
    %2366 = vmatpush1.msra.mxu0 %v2242
    %2367 = vmatprep.subr.mxu0 %v2247
    %2368 = vmatpush1.msra.mxu0 %v2246
    %2369 = vmatprep.subr.mxu0 %v2251
    %2370 = vmatpush1.msra.mxu0 %v2250
    %2371 = vmatprep.subr.mxu0 %v2255
    %2372 = vmatpush1.msra.mxu0 %v2254
    %2373 = vmatprep.subr.mxu0 %v2259
    %2374 = vmatpush1.msra.mxu0 %v2258
    %2375 = vmatprep.subr.mxu0 %v2263
    %2376 = vmatpush1.msra.mxu0 %v2262
    %2377 = vmatprep.subr.mxu0 %v2267
    %2378 = vmatpush1.msra.mxu0 %v2266
    %2379 = vmatprep.subr.mxu0 %v2271
    %2380 = vmatpush1.msra.mxu0 %v2270
    %2381 = vmatprep.subr.mxu0 %v2275
    %2382 = vmatpush1.msra.mxu0 %v2274
    %2383 = vmatprep.subr.mxu0 0.0
    %2384 = vmatpush1.msra.mxu0 0.0
    %2385 = vmatprep.subr.mxu0 0.0
    %2386 = vmatpush1.msra.mxu0 0.0
    %2387 = vmatprep.subr.mxu0 0.0
    %2388 = vmatpush1.msra.mxu0 0.0
    %2389 = vmatprep.subr.mxu0 0.0
    %2390 = vmatpush1.msra.mxu0 0.0
    %2391 = vmatprep.subr.mxu0 0.0
    %2392 = vmatpush1.msra.mxu0 0.0
    %2393 = vmatprep.subr.mxu0 0.0
    %2394 = vmatpush1.msra.mxu0 0.0
    %2395 = vmatprep.subr.mxu0 0.0
    %2396 = vmatpush1.msra.mxu0 0.0
    %2397 = vmatprep.subr.mxu0 0.0
    %2398 = vmatpush1.msra.mxu0 0.0
    %2399 = vmatprep.subr.mxu0 0.0
    %2400 = vmatpush1.msra.mxu0 0.0
    %2401 = vmatprep.subr.mxu0 0.0
    %2402 = vmatpush1.msra.mxu0 0.0
    %2403 = vmatprep.subr.mxu0 0.0
    %2404 = vmatpush1.msra.mxu0 0.0
    %2405 = vmatprep.subr.mxu0 0.0
    %2406 = vmatpush1.msra.mxu0 0.0
    %2407 = vmatprep.subr.mxu0 0.0
    %2408 = vmatpush1.msra.mxu0 0.0
    %2409 = vmatprep.subr.mxu0 0.0
    %2410 = vmatpush1.msra.mxu0 0.0
    %2411 = vmatprep.subr.mxu0 0.0
    %2412 = vmatpush1.msra.mxu0 0.0
    %2413 = vmatprep.subr.mxu0 0.0
    %2414 = vmatpush1.msra.mxu0 0.0
    %2415 = vmatprep.mubr.f32.mxu0 0.0
    %2416 = vmatmul.mubr.f32.gmra.mrb[0].mxu0 0.0
    %v2417 = vpop.f32.mrb[0].mxu0
    %v2418 = vadd.f32 0.0, %v2417
    %v2419 = vpop.f32.mrb[0].mxu0
    %v2420 = vadd.f32 0.0, %v2419
    %2421 = vdwg.mxu0
    %v2422 = vadd.f32 %v2276, %v2347
    %v2423 = vadd.f32 %v2277, %v2349
    %v2424 = vadd.f32 %v2278, %v2418
    %v2425 = vadd.f32 %v2279, %v2420
    %v2426 = vmul.f32 %v2422, 0.5
    %v2427 = vtanh.pop %v2426
    %v2428 = vmul.f32 %v2427, 0.5
    %v2429 = vadd.f32 %v2428, 0.5
    %v2430 = vmul.f32 %v2423, 0.5
    %v2431 = vtanh.pop %v2430
    %v2432 = vmul.f32 %v2431, 0.5
    %v2433 = vadd.f32 %v2432, 0.5
    %v2434 = vtanh.pop %v2424
    %v2435 = vmul.f32 %v2425, 0.5
    %v2436 = vtanh.pop %v2435
    %v2437 = vmul.f32 %v2436, 0.5
    %v2438 = vadd.f32 %v2437, 0.5
    %v2439 = vmul.f32 %v2433, 0.0
    %v2440 = vmul.f32 %v2429, %v2434
    %v2441 = vadd.f32 %v2439, %v2440
    %v2442 = vtanh.pop %v2441
    %v2443 = vmul.f32 %v2438, %v2442
    %v2444 = vld [vmem:[%s651] sm:$0xff]
    %v2445 = vld [vmem:[%s651 + $0x8] sm:$0xff]
    %v2446 = vld [vmem:[%s651 + $0x10] sm:$0xff]
    %v2447 = vld [vmem:[%s651 + $0x18] sm:$0xff]
    %2448 = vmatprep.subr.mxu0 %v2213
    %2449 = vmatpush1.msra.mxu0 %v2212
    %2450 = vmatprep.subr.mxu0 %v2217
    %2451 = vmatpush1.msra.mxu0 %v2216
    %2452 = vmatprep.subr.mxu0 %v2221
    %2453 = vmatpush1.msra.mxu0 %v2220
    %2454 = vmatprep.subr.mxu0 %v2225
    %2455 = vmatpush1.msra.mxu0 %v2224
    %2456 = vmatprep.subr.mxu0 %v2229
    %2457 = vmatpush1.msra.mxu0 %v2228
    %2458 = vmatprep.subr.mxu0 %v2233
    %2459 = vmatpush1.msra.mxu0 %v2232
    %2460 = vmatprep.subr.mxu0 %v2237
    %2461 = vmatpush1.msra.mxu0 %v2236
    %2462 = vmatprep.subr.mxu0 %v2241
    %2463 = vmatpush1.msra.mxu0 %v2240
    %2464 = vmatprep.subr.mxu0 %v2245
    %2465 = vmatpush1.msra.mxu0 %v2244
    %2466 = vmatprep.subr.mxu0 %v2249
    %2467 = vmatpush1.msra.mxu0 %v2248
    %2468 = vmatprep.subr.mxu0 %v2253
    %2469 = vmatpush1.msra.mxu0 %v2252
    %2470 = vmatprep.subr.mxu0 %v2257
    %2471 = vmatpush1.msra.mxu0 %v2256
    %2472 = vmatprep.subr.mxu0 %v2261
    %2473 = vmatpush1.msra.mxu0 %v2260
    %2474 = vmatprep.subr.mxu0 %v2265
    %2475 = vmatpush1.msra.mxu0 %v2264
    %2476 = vmatprep.subr.mxu0 %v2269
    %2477 = vmatpush1.msra.mxu0 %v2268
    %2478 = vmatprep.subr.mxu0 %v2273
    %2479 = vmatpush1.msra.mxu0 %v2272
    %2480 = vmatprep.subr.mxu0 0.0
    %2481 = vmatpush1.msra.mxu0 0.0
    %2482 = vmatprep.subr.mxu0 0.0
    %2483 = vmatpush1.msra.mxu0 0.0
    %2484 = vmatprep.subr.mxu0 0.0
    %2485 = vmatpush1.msra.mxu0 0.0
    %2486 = vmatprep.subr.mxu0 0.0
    %2487 = vmatpush1.msra.mxu0 0.0
    %2488 = vmatprep.subr.mxu0 0.0
    %2489 = vmatpush1.msra.mxu0 0.0
    %2490 = vmatprep.subr.mxu0 0.0
    %2491 = vmatpush1.msra.mxu0 0.0
    %2492 = vmatprep.subr.mxu0 0.0
    %2493 = vmatpush1.msra.mxu0 0.0
    %2494 = vmatprep.subr.mxu0 0.0
    %2495 = vmatpush1.msra.mxu0 0.0
    %2496 = vmatprep.subr.mxu0 0.0
    %2497 = vmatpush1.msra.mxu0 0.0
    %2498 = vmatprep.subr.mxu0 0.0
    %2499 = vmatpush1.msra.mxu0 0.0
    %2500 = vmatprep.subr.mxu0 0.0
    %2501 = vmatpush1.msra.mxu0 0.0
    %2502 = vmatprep.subr.mxu0 0.0
    %2503 = vmatpush1.msra.mxu0 0.0
    %2504 = vmatprep.subr.mxu0 0.0
    %2505 = vmatpush1.msra.mxu0 0.0
    %2506 = vmatprep.subr.mxu0 0.0
    %2507 = vmatpush1.msra.mxu0 0.0
    %2508 = vmatprep.subr.mxu0 0.0
    %2509 = vmatpush1.msra.mxu0 0.0
    %2510 = vmatprep.subr.mxu0 0.0
    %2511 = vmatpush1.msra.mxu0 0.0
    %2512 = vmatprep.mubr.f32.mxu0 0.0
    %2513 = vmatmul.mubr.f32.gmra.mrb[0].mxu0 %v2443
    %v2514 = vpop.f32.mrb[0].mxu0
    %v2515 = vadd.f32 0.0, %v2514
    %v2516 = vpop.f32.mrb[0].mxu0
    %v2517 = vadd.f32 0.0, %v2516
    %2518 = vdwg.mxu0
    %2519 = vmatprep.subr.mxu0 %v2215
    %2520 = vmatpush1.msra.mxu0 %v2214
    %2521 = vmatprep.subr.mxu0 %v2219
    %2522 = vmatpush1.msra.mxu0 %v2218
    %2523 = vmatprep.subr.mxu0 %v2223
    %2524 = vmatpush1.msra.mxu0 %v2222
    %2525 = vmatprep.subr.mxu0 %v2227
    %2526 = vmatpush1.msra.mxu0 %v2226
    %2527 = vmatprep.subr.mxu0 %v2231
    %2528 = vmatpush1.msra.mxu0 %v2230
    %2529 = vmatprep.subr.mxu0 %v2235
    %2530 = vmatpush1.msra.mxu0 %v2234
    %2531 = vmatprep.subr.mxu0 %v2239
    %2532 = vmatpush1.msra.mxu0 %v2238
    %2533 = vmatprep.subr.mxu0 %v2243
    %2534 = vmatpush1.msra.mxu0 %v2242
    %2535 = vmatprep.subr.mxu0 %v2247
    %2536 = vmatpush1.msra.mxu0 %v2246
    %2537 = vmatprep.subr.mxu0 %v2251
    %2538 = vmatpush1.msra.mxu0 %v2250
    %2539 = vmatprep.subr.mxu0 %v2255
    %2540 = vmatpush1.msra.mxu0 %v2254
    %2541 = vmatprep.subr.mxu0 %v2259
    %2542 = vmatpush1.msra.mxu0 %v2258
    %2543 = vmatprep.subr.mxu0 %v2263
    %2544 = vmatpush1.msra.mxu0 %v2262
    %2545 = vmatprep.subr.mxu0 %v2267
    %2546 = vmatpush1.msra.mxu0 %v2266
    %2547 = vmatprep.subr.mxu0 %v2271
    %2548 = vmatpush1.msra.mxu0 %v2270
    %2549 = vmatprep.subr.mxu0 %v2275
    %2550 = vmatpush1.msra.mxu0 %v2274
    %2551 = vmatprep.subr.mxu0 0.0
    %2552 = vmatpush1.msra.mxu0 0.0
    %2553 = vmatprep.subr.mxu0 0.0
    %2554 = vmatpush1.msra.mxu0 0.0
    %2555 = vmatprep.subr.mxu0 0.0
    %2556 = vmatpush1.msra.mxu0 0.0
    %2557 = vmatprep.subr.mxu0 0.0
    %2558 = vmatpush1.msra.mxu0 0.0
    %2559 = vmatprep.subr.mxu0 0.0
    %2560 = vmatpush1.msra.mxu0 0.0
    %2561 = vmatprep.subr.mxu0 0.0
    %2562 = vmatpush1.msra.mxu0 0.0
    %2563 = vmatprep.subr.mxu0 0.0
    %2564 = vmatpush1.msra.mxu0 0.0
    %2565 = vmatprep.subr.mxu0 0.0
    %2566 = vmatpush1.msra.mxu0 0.0
    %2567 = vmatprep.subr.mxu0 0.0
    %2568 = vmatpush1.msra.mxu0 0.0
    %2569 = vmatprep.subr.mxu0 0.0
    %2570 = vmatpush1.msra.mxu0 0.0
    %2571 = vmatprep.subr.mxu0 0.0
    %2572 = vmatpush1.msra.mxu0 0.0
    %2573 = vmatprep.subr.mxu0 0.0
    %2574 = vmatpush1.msra.mxu0 0.0
    %2575 = vmatprep.subr.mxu0 0.0
    %2576 = vmatpush1.msra.mxu0 0.0
    %2577 = vmatprep.subr.mxu0 0.0
    %2578 = vmatpush1.msra.mxu0 0.0
    %2579 = vmatprep.subr.mxu0 0.0
    %2580 = vmatpush1.msra.mxu0 0.0
    %2581 = vmatprep.subr.mxu0 0.0
    %2582 = vmatpush1.msra.mxu0 0.0
    %2583 = vmatprep.mubr.f32.mxu0 0.0
    %2584 = vmatmul.mubr.f32.gmra.mrb[0].mxu0 %v2443
    %v2585 = vpop.f32.mrb[0].mxu0
    %v2586 = vadd.f32 0.0, %v2585
    %v2587 = vpop.f32.mrb[0].mxu0
    %v2588 = vadd.f32 0.0, %v2587
    %2589 = vdwg.mxu0
    %v2590 = vadd.f32 %v2444, %v2515
    %v2591 = vadd.f32 %v2445, %v2517
    %v2592 = vadd.f32 %v2446, %v2586
    %v2593 = vadd.f32 %v2447, %v2588
    %v2594 = vmul.f32 %v2590, 0.5
    %v2595 = vtanh.pop %v2594
    %v2596 = vmul.f32 %v2595, 0.5
    %v2597 = vadd.f32 %v2596, 0.5
    %v2598 = vmul.f32 %v2591, 0.5
    %v2599 = vtanh.pop %v2598
    %v2600 = vmul.f32 %v2599, 0.5
    %v2601 = vadd.f32 %v2600, 0.5
    %v2602 = vtanh.pop %v2592
    %v2603 = vmul.f32 %v2593, 0.5
    %v2604 = vtanh.pop %v2603
    %v2605 = vmul.f32 %v2604, 0.5
    %v2606 = vadd.f32 %v2605, 0.5
    %v2607 = vmul.f32 %v2601, %v2441
    %v2608 = vmul.f32 %v2597, %v2602
    %v2609 = vadd.f32 %v2607, %v2608
    %v2610 = vtanh.pop %v2609
    %v2611 = vmul.f32 %v2606, %v2610
    %v2612 = vld [vmem:[%s824] sm:$0xff]
    %v2613 = vld [vmem:[%s824 + $0x8] sm:$0xff]
    %v2614 = vld [vmem:[%s824 + $0x10] sm:$0xff]
    %v2615 = vld [vmem:[%s824 + $0x18] sm:$0xff]
    %2616 = vmatprep.subr.mxu0 %v2213
    %2617 = vmatpush1.msra.mxu0 %v2212
    %2618 = vmatprep.subr.mxu0 %v2217
    %2619 = vmatpush1.msra.mxu0 %v2216
    %2620 = vmatprep.subr.mxu0 %v2221
    %2621 = vmatpush1.msra.mxu0 %v2220
    %2622 = vmatprep.subr.mxu0 %v2225
    %2623 = vmatpush1.msra.mxu0 %v2224
    %2624 = vmatprep.subr.mxu0 %v2229
    %2625 = vmatpush1.msra.mxu0 %v2228
    %2626 = vmatprep.subr.mxu0 %v2233
    %2627 = vmatpush1.msra.mxu0 %v2232
    %2628 = vmatprep.subr.mxu0 %v2237
    %2629 = vmatpush1.msra.mxu0 %v2236
    %2630 = vmatprep.subr.mxu0 %v2241
    %2631 = vmatpush1.msra.mxu0 %v2240
    %2632 = vmatprep.subr.mxu0 %v2245
    %2633 = vmatpush1.msra.mxu0 %v2244
    %2634 = vmatprep.subr.mxu0 %v2249
    %2635 = vmatpush1.msra.mxu0 %v2248
    %2636 = vmatprep.subr.mxu0 %v2253
    %2637 = vmatpush1.msra.mxu0 %v2252
    %2638 = vmatprep.subr.mxu0 %v2257
    %2639 = vmatpush1.msra.mxu0 %v2256
    %2640 = vmatprep.subr.mxu0 %v2261
    %2641 = vmatpush1.msra.mxu0 %v2260
    %2642 = vmatprep.subr.mxu0 %v2265
    %2643 = vmatpush1.msra.mxu0 %v2264
    %2644 = vmatprep.subr.mxu0 %v2269
    %2645 = vmatpush1.msra.mxu0 %v2268
    %2646 = vmatprep.subr.mxu0 %v2273
    %2647 = vmatpush1.msra.mxu0 %v2272
    %2648 = vmatprep.subr.mxu0 0.0
    %2649 = vmatpush1.msra.mxu0 0.0
    %2650 = vmatprep.subr.mxu0 0.0
    %2651 = vmatpush1.msra.mxu0 0.0
    %2652 = vmatprep.subr.mxu0 0.0
    %2653 = vmatpush1.msra.mxu0 0.0
    %2654 = vmatprep.subr.mxu0 0.0
    %2655 = vmatpush1.msra.mxu0 0.0
    %2656 = vmatprep.subr.mxu0 0.0
    %2657 = vmatpush1.msra.mxu0 0.0
    %2658 = vmatprep.subr.mxu0 0.0
    %2659 = vmatpush1.msra.mxu0 0.0
    %2660 = vmatprep.subr.mxu0 0.0
    %2661 = vmatpush1.msra.mxu0 0.0
    %2662 = vmatprep.subr.mxu0 0.0
    %2663 = vmatpush1.msra.mxu0 0.0
    %2664 = vmatprep.subr.mxu0 0.0
    %2665 = vmatpush1.msra.mxu0 0.0
    %2666 = vmatprep.subr.mxu0 0.0
    %2667 = vmatpush1.msra.mxu0 0.0
    %2668 = vmatprep.subr.mxu0 0.0
    %2669 = vmatpush1.msra.mxu0 0.0
    %2670 = vmatprep.subr.mxu0 0.0
    %2671 = vmatpush1.msra.mxu0 0.0
    %2672 = vmatprep.subr.mxu0 0.0
    %2673 = vmatpush1.msra.mxu0 0.0
    %2674 = vmatprep.subr.mxu0 0.0
    %2675 = vmatpush1.msra.mxu0 0.0
    %2676 = vmatprep.subr.mxu0 0.0
    %2677 = vmatpush1.msra.mxu0 0.0
    %2678 = vmatprep.subr.mxu0 0.0
    %2679 = vmatpush1.msra.mxu0 0.0
    %2680 = vmatprep.mubr.f32.mxu0 0.0
    %2681 = vmatmul.mubr.f32.gmra.mrb[0].mxu0 %v2611
    %v2682 = vpop.f32.mrb[0].mxu0
    %v2683 = vadd.f32 0.0, %v2682
    %v2684 = vpop.f32.mrb[0].mxu0
    %v2685 = vadd.f32 0.0, %v2684
    %2686 = vdwg.mxu0
    %2687 = vmatprep.subr.mxu0 %v2215
    %2688 = vmatpush1.msra.mxu0 %v2214
    %2689 = vmatprep.subr.mxu0 %v2219
    %2690 = vmatpush1.msra.mxu0 %v2218
    %2691 = vmatprep.subr.mxu0 %v2223
    %2692 = vmatpush1.msra.mxu0 %v2222
    %2693 = vmatprep.subr.mxu0 %v2227
    %2694 = vmatpush1.msra.mxu0 %v2226
    %2695 = vmatprep.subr.mxu0 %v2231
    %2696 = vmatpush1.msra.mxu0 %v2230
    %2697 = vmatprep.subr.mxu0 %v2235
    %2698 = vmatpush1.msra.mxu0 %v2234
    %2699 = vmatprep.subr.mxu0 %v2239
    %2700 = vmatpush1.msra.mxu0 %v2238
    %2701 = vmatprep.subr.mxu0 %v2243
    %2702 = vmatpush1.msra.mxu0 %v2242
    %2703 = vmatprep.subr.mxu0 %v2247
    %2704 = vmatpush1.msra.mxu0 %v2246
    %2705 = vmatprep.subr.mxu0 %v2251
    %2706 = vmatpush1.msra.mxu0 %v2250
    %2707 = vmatprep.subr.mxu0 %v2255
    %2708 = vmatpush1.msra.mxu0 %v2254
    %2709 = vmatprep.subr.mxu0 %v2259
    %2710 = vmatpush1.msra.mxu0 %v2258
    %2711 = vmatprep.subr.mxu0 %v2263
    %2712 = vmatpush1.msra.mxu0 %v2262
    %2713 = vmatprep.subr.mxu0 %v2267
    %2714 = vmatpush1.msra.mxu0 %v2266
    %2715 = vmatprep.subr.mxu0 %v2271
    %2716 = vmatpush1.msra.mxu0 %v2270
    %2717 = vmatprep.subr.mxu0 %v2275
    %2718 = vmatpush1.msra.mxu0 %v2274
    %2719 = vmatprep.subr.mxu0 0.0
    %2720 = vmatpush1.msra.mxu0 0.0
    %2721 = vmatprep.subr.mxu0 0.0
    %2722 = vmatpush1.msra.mxu0 0.0
    %2723 = vmatprep.subr.mxu0 0.0
    %2724 = vmatpush1.msra.mxu0 0.0
    %2725 = vmatprep.subr.mxu0 0.0
    %2726 = vmatpush1.msra.mxu0 0.0
    %2727 = vmatprep.subr.mxu0 0.0
    %2728 = vmatpush1.msra.mxu0 0.0
    %2729 = vmatprep.subr.mxu0 0.0
    %2730 = vmatpush1.msra.mxu0 0.0
    %2731 = vmatprep.subr.mxu0 0.0
    %2732 = vmatpush1.msra.mxu0 0.0
    %2733 = vmatprep.subr.mxu0 0.0
    %2734 = vmatpush1.msra.mxu0 0.0
    %2735 = vmatprep.subr.mxu0 0.0
    %2736 = vmatpush1.msra.mxu0 0.0
    %2737 = vmatprep.subr.mxu0 0.0
    %2738 = vmatpush1.msra.mxu0 0.0
    %2739 = vmatprep.subr.mxu0 0.0
    %2740 = vmatpush1.msra.mxu0 0.0
    %2741 = vmatprep.subr.mxu0 0.0
    %2742 = vmatpush1.msra.mxu0 0.0
    %2743 = vmatprep.subr.mxu0 0.0
    %2744 = vmatpush1.msra.mxu0 0.0
    %2745 = vmatprep.subr.mxu0 0.0
    %2746 = vmatpush1.msra.mxu0 0.0
    %2747 = vmatprep.subr.mxu0 0.0
    %2748 = vmatpush1.msra.mxu0 0.0
    %2749 = vmatprep.subr.mxu0 0.0
    %2750 = vmatpush1.msra.mxu0 0.0
    %2751 = vmatprep.mubr.f32.mxu0 0.0
    %2752 = vmatmul.mubr.f32.gmra.mrb[0].mxu0 %v2611
    %v2753 = vpop.f32.mrb[0].mxu0
    %v2754 = vadd.f32 0.0, %v2753
    %v2755 = vpop.f32.mrb[0].mxu0
    %v2756 = vadd.f32 0.0, %v2755
    %2757 = vdwg.mxu0
    %v2758 = vadd.f32 %v2612, %v2683
    %v2759 = vadd.f32 %v2613, %v2685
    %v2760 = vadd.f32 %v2614, %v2754
    %v2761 = vadd.f32 %v2615, %v2756
    %v2762 = vmul.f32 %v2758, 0.5
    %v2763 = vtanh.pop %v2762
    %v2764 = vmul.f32 %v2763, 0.5
    %v2765 = vadd.f32 %v2764, 0.5
    %v2766 = vmul.f32 %v2759, 0.5
    %v2767 = vtanh.pop %v2766
    %v2768 = vmul.f32 %v2767, 0.5
    %v2769 = vadd.f32 %v2768, 0.5
    %v2770 = vtanh.pop %v2760
    %v2771 = vmul.f32 %v2761, 0.5
    %v2772 = vtanh.pop %v2771
    %v2773 = vmul.f32 %v2772, 0.5
    %v2774 = vadd.f32 %v2773, 0.5
    %v2775 = vmul.f32 %v2769, %v2609
    %v2776 = vmul.f32 %v2765, %v2770
    %v2777 = vadd.f32 %v2775, %v2776
    %v2778 = vtanh.pop %v2777
    %v2779 = vmul.f32 %v2774, %v2778
    %v2780 = vld [vmem:[%s997] sm:$0xff]
    %v2781 = vld [vmem:[%s997 + $0x8] sm:$0xff]
    %v2782 = vld [vmem:[%s997 + $0x10] sm:$0xff]
    %v2783 = vld [vmem:[%s997 + $0x18] sm:$0xff]
    %2784 = vmatprep.subr.mxu0 %v2213
    %2785 = vmatpush1.msra.mxu0 %v2212
    %2786 = vmatprep.subr.mxu0 %v2217
    %2787 = vmatpush1.msra.mxu0 %v2216
    %2788 = vmatprep.subr.mxu0 %v2221
    %2789 = vmatpush1.msra.mxu0 %v2220
    %2790 = vmatprep.subr.mxu0 %v2225
    %2791 = vmatpush1.msra.mxu0 %v2224
    %2792 = vmatprep.subr.mxu0 %v2229
    %2793 = vmatpush1.msra.mxu0 %v2228
    %2794 = vmatprep.subr.mxu0 %v2233
    %2795 = vmatpush1.msra.mxu0 %v2232
    %2796 = vmatprep.subr.mxu0 %v2237
    %2797 = vmatpush1.msra.mxu0 %v2236
    %2798 = vmatprep.subr.mxu0 %v2241
    %2799 = vmatpush1.msra.mxu0 %v2240
    %2800 = vmatprep.subr.mxu0 %v2245
    %2801 = vmatpush1.msra.mxu0 %v2244
    %2802 = vmatprep.subr.mxu0 %v2249
    %2803 = vmatpush1.msra.mxu0 %v2248
    %2804 = vmatprep.subr.mxu0 %v2253
    %2805 = vmatpush1.msra.mxu0 %v2252
    %2806 = vmatprep.subr.mxu0 %v2257
    %2807 = vmatpush1.msra.mxu0 %v2256
    %2808 = vmatprep.subr.mxu0 %v2261
    %2809 = vmatpush1.msra.mxu0 %v2260
    %2810 = vmatprep.subr.mxu0 %v2265
    %2811 = vmatpush1.msra.mxu0 %v2264
    %2812 = vmatprep.subr.mxu0 %v2269
    %2813 = vmatpush1.msra.mxu0 %v2268
    %2814 = vmatprep.subr.mxu0 %v2273
    %2815 = vmatpush1.msra.mxu0 %v2272
    %2816 = vmatprep.subr.mxu0 0.0
    %2817 = vmatpush1.msra.mxu0 0.0
    %2818 = vmatprep.subr.mxu0 0.0
    %2819 = vmatpush1.msra.mxu0 0.0
    %2820 = vmatprep.subr.mxu0 0.0
    %2821 = vmatpush1.msra.mxu0 0.0
    %2822 = vmatprep.subr.mxu0 0.0
    %2823 = vmatpush1.msra.mxu0 0.0
    %2824 = vmatprep.subr.mxu0 0.0
    %2825 = vmatpush1.msra.mxu0 0.0
    %2826 = vmatprep.subr.mxu0 0.0
    %2827 = vmatpush1.msra.mxu0 0.0
    %2828 = vmatprep.subr.mxu0 0.0
    %2829 = vmatpush1.msra.mxu0 0.0
    %2830 = vmatprep.subr.mxu0 0.0
    %2831 = vmatpush1.msra.mxu0 0.0
    %2832 = vmatprep.subr.mxu0 0.0
    %2833 = vmatpush1.msra.mxu0 0.0
    %2834 = vmatprep.subr.mxu0 0.0
    %2835 = vmatpush1.msra.mxu0 0.0
    %2836 = vmatprep.subr.mxu0 0.0
    %2837 = vmatpush1.msra.mxu0 0.0
    %2838 = vmatprep.subr.mxu0 0.0
    %2839 = vmatpush1.msra.mxu0 0.0
    %2840 = vmatprep.subr.mxu0 0.0
    %2841 = vmatpush1.msra.mxu0 0.0
    %2842 = vmatprep.subr.mxu0 0.0
    %2843 = vmatpush1.msra.mxu0 0.0
    %2844 = vmatprep.subr.mxu0 0.0
    %2845 = vmatpush1.msra.mxu0 0.0
    %2846 = vmatprep.subr.mxu0 0.0
    %2847 = vmatpush1.msra.mxu0 0.0
    %2848 = vmatprep.mubr.f32.mxu0 0.0
    %2849 = vmatmul.mubr.f32.gmra.mrb[0].mxu0 %v2779
    %v2850 = vpop.f32.mrb[0].mxu0
    %v2851 = vadd.f32 0.0, %v2850
    %v2852 = vpop.f32.mrb[0].mxu0
    %v2853 = vadd.f32 0.0, %v2852
    %2854 = vdwg.mxu0
    %2855 = vmatprep.subr.mxu0 %v2215
    %2856 = vmatpush1.msra.mxu0 %v2214
    %2857 = vmatprep.subr.mxu0 %v2219
    %2858 = vmatpush1.msra.mxu0 %v2218
    %2859 = vmatprep.subr.mxu0 %v2223
    %2860 = vmatpush1.msra.mxu0 %v2222
    %2861 = vmatprep.subr.mxu0 %v2227
    %2862 = vmatpush1.msra.mxu0 %v2226
    %2863 = vmatprep.subr.mxu0 %v2231
    %2864 = vmatpush1.msra.mxu0 %v2230
    %2865 = vmatprep.subr.mxu0 %v2235
    %2866 = vmatpush1.msra.mxu0 %v2234
    %2867 = vmatprep.subr.mxu0 %v2239
    %2868 = vmatpush1.msra.mxu0 %v2238
    %2869 = vmatprep.subr.mxu0 %v2243
    %2870 = vmatpush1.msra.mxu0 %v2242
    %2871 = vmatprep.subr.mxu0 %v2247
    %2872 = vmatpush1.msra.mxu0 %v2246
    %2873 = vmatprep.subr.mxu0 %v2251
    %2874 = vmatpush1.msra.mxu0 %v2250
    %2875 = vmatprep.subr.mxu0 %v2255
    %2876 = vmatpush1.msra.mxu0 %v2254
    %2877 = vmatprep.subr.mxu0 %v2259
    %2878 = vmatpush1.msra.mxu0 %v2258
    %2879 = vmatprep.subr.mxu0 %v2263
    %2880 = vmatpush1.msra.mxu0 %v2262
    %2881 = vmatprep.subr.mxu0 %v2267
    %2882 = vmatpush1.msra.mxu0 %v2266
    %2883 = vmatprep.subr.mxu0 %v2271
    %2884 = vmatpush1.msra.mxu0 %v2270
    %2885 = vmatprep.subr.mxu0 %v2275
    %2886 = vmatpush1.msra.mxu0 %v2274
    %2887 = vmatprep.subr.mxu0 0.0
    %2888 = vmatpush1.msra.mxu0 0.0
    %2889 = vmatprep.subr.mxu0 0.0
    %2890 = vmatpush1.msra.mxu0 0.0
    %2891 = vmatprep.subr.mxu0 0.0
    %2892 = vmatpush1.msra.mxu0 0.0
    %2893 = vmatprep.subr.mxu0 0.0
    %2894 = vmatpush1.msra.mxu0 0.0
    %2895 = vmatprep.subr.mxu0 0.0
    %2896 = vmatpush1.msra.mxu0 0.0
    %2897 = vmatprep.subr.mxu0 0.0
    %2898 = vmatpush1.msra.mxu0 0.0
    %2899 = vmatprep.subr.mxu0 0.0
    %2900 = vmatpush1.msra.mxu0 0.0
    %2901 = vmatprep.subr.mxu0 0.0
    %2902 = vmatpush1.msra.mxu0 0.0
    %2903 = vmatprep.subr.mxu0 0.0
    %2904 = vmatpush1.msra.mxu0 0.0
    %2905 = vmatprep.subr.mxu0 0.0
    %2906 = vmatpush1.msra.mxu0 0.0
    %2907 = vmatprep.subr.mxu0 0.0
    %2908 = vmatpush1.msra.mxu0 0.0
    %2909 = vmatprep.subr.mxu0 0.0
    %2910 = vmatpush1.msra.mxu0 0.0
    %2911 = vmatprep.subr.mxu0 0.0
    %2912 = vmatpush1.msra.mxu0 0.0
    %2913 = vmatprep.subr.mxu0 0.0
    %2914 = vmatpush1.msra.mxu0 0.0
    %2915 = vmatprep.subr.mxu0 0.0
    %2916 = vmatpush1.msra.mxu0 0.0
    %2917 = vmatprep.subr.mxu0 0.0
    %2918 = vmatpush1.msra.mxu0 0.0
    %2919 = vmatprep.mubr.f32.mxu0 0.0
    %2920 = vmatmul.mubr.f32.gmra.mrb[0].mxu0 %v2779
    %v2921 = vpop.f32.mrb[0].mxu0
    %v2922 = vadd.f32 0.0, %v2921
    %v2923 = vpop.f32.mrb[0].mxu0
    %v2924 = vadd.f32 0.0, %v2923
    %2925 = vdwg.mxu0
    %v2926 = vadd.f32 %v2780, %v2851
    %v2927 = vadd.f32 %v2781, %v2853
    %v2928 = vadd.f32 %v2782, %v2922
    %v2929 = vadd.f32 %v2783, %v2924
    %v2930 = vmul.f32 %v2926, 0.5
    %v2931 = vtanh.pop %v2930
    %v2932 = vmul.f32 %v2931, 0.5
    %v2933 = vadd.f32 %v2932, 0.5
    %v2934 = vmul.f32 %v2927, 0.5
    %v2935 = vtanh.pop %v2934
    %v2936 = vmul.f32 %v2935, 0.5
    %v2937 = vadd.f32 %v2936, 0.5
    %v2938 = vtanh.pop %v2928
    %v2939 = vmul.f32 %v2929, 0.5
    %v2940 = vtanh.pop %v2939
    %v2941 = vmul.f32 %v2940, 0.5
    %v2942 = vadd.f32 %v2941, 0.5
    %v2943 = vmul.f32 %v2937, %v2777
    %v2944 = vmul.f32 %v2933, %v2938
    %v2945 = vadd.f32 %v2943, %v2944
    %v2946 = vtanh.pop %v2945
    %v2947 = vmul.f32 %v2942, %v2946
    %v2948 = vld [vmem:[%s1170] sm:$0xff]
    %v2949 = vld [vmem:[%s1170 + $0x8] sm:$0xff]
    %v2950 = vld [vmem:[%s1170 + $0x10] sm:$0xff]
    %v2951 = vld [vmem:[%s1170 + $0x18] sm:$0xff]
    %2952 = vmatprep.subr.mxu0 %v2213
    %2953 = vmatpush1.msra.mxu0 %v2212
    %2954 = vmatprep.subr.mxu0 %v2217
    %2955 = vmatpush1.msra.mxu0 %v2216
    %2956 = vmatprep.subr.mxu0 %v2221
    %2957 = vmatpush1.msra.mxu0 %v2220
    %2958 = vmatprep.subr.mxu0 %v2225
    %2959 = vmatpush1.msra.mxu0 %v2224
    %2960 = vmatprep.subr.mxu0 %v2229
    %2961 = vmatpush1.msra.mxu0 %v2228
    %2962 = vmatprep.subr.mxu0 %v2233
    %2963 = vmatpush1.msra.mxu0 %v2232
    %2964 = vmatprep.subr.mxu0 %v2237
    %2965 = vmatpush1.msra.mxu0 %v2236
    %2966 = vmatprep.subr.mxu0 %v2241
    %2967 = vmatpush1.msra.mxu0 %v2240
    %2968 = vmatprep.subr.mxu0 %v2245
    %2969 = vmatpush1.msra.mxu0 %v2244
    %2970 = vmatprep.subr.mxu0 %v2249
    %2971 = vmatpush1.msra.mxu0 %v2248
    %2972 = vmatprep.subr.mxu0 %v2253
    %2973 = vmatpush1.msra.mxu0 %v2252
    %2974 = vmatprep.subr.mxu0 %v2257
    %2975 = vmatpush1.msra.mxu0 %v2256
    %2976 = vmatprep.subr.mxu0 %v2261
    %2977 = vmatpush1.msra.mxu0 %v2260
    %2978 = vmatprep.subr.mxu0 %v2265
    %2979 = vmatpush1.msra.mxu0 %v2264
    %2980 = vmatprep.subr.mxu0 %v2269
    %2981 = vmatpush1.msra.mxu0 %v2268
    %2982 = vmatprep.subr.mxu0 %v2273
    %2983 = vmatpush1.msra.mxu0 %v2272
    %2984 = vmatprep.subr.mxu0 0.0
    %2985 = vmatpush1.msra.mxu0 0.0
    %2986 = vmatprep.subr.mxu0 0.0
    %2987 = vmatpush1.msra.mxu0 0.0
    %2988 = vmatprep.subr.mxu0 0.0
    %2989 = vmatpush1.msra.mxu0 0.0
    %2990 = vmatprep.subr.mxu0 0.0
    %2991 = vmatpush1.msra.mxu0 0.0
    %2992 = vmatprep.subr.mxu0 0.0
    %2993 = vmatpush1.msra.mxu0 0.0
    %2994 = vmatprep.subr.mxu0 0.0
    %2995 = vmatpush1.msra.mxu0 0.0
    %2996 = vmatprep.subr.mxu0 0.0
    %2997 = vmatpush1.msra.mxu0 0.0
    %2998 = vmatprep.subr.mxu0 0.0
    %2999 = vmatpush1.msra.mxu0 0.0
    %3000 = vmatprep.subr.mxu0 0.0
    %3001 = vmatpush1.msra.mxu0 0.0
    %3002 = vmatprep.subr.mxu0 0.0
    %3003 = vmatpush1.msra.mxu0 0.0
    %3004 = vmatprep.subr.mxu0 0.0
    %3005 = vmatpush1.msra.mxu0 0.0
    %3006 = vmatprep.subr.mxu0 0.0
    %3007 = vmatpush1.msra.mxu0 0.0
    %3008 = vmatprep.subr.mxu0 0.0
    %3009 = vmatpush1.msra.mxu0 0.0
    %3010 = vmatprep.subr.mxu0 0.0
    %3011 = vmatpush1.msra.mxu0 0.0
    %3012 = vmatprep.subr.mxu0 0.0
    %3013 = vmatpush1.msra.mxu0 0.0
    %3014 = vmatprep.subr.mxu0 0.0
    %3015 = vmatpush1.msra.mxu0 0.0
    %3016 = vmatprep.mubr.f32.mxu0 0.0
    %3017 = vmatmul.mubr.f32.gmra.mrb[0].mxu0 %v2947
    %v3018 = vpop.f32.mrb[0].mxu0
    %v3019 = vadd.f32 0.0, %v3018
    %v3020 = vpop.f32.mrb[0].mxu0
    %v3021 = vadd.f32 0.0, %v3020
    %3022 = vdwg.mxu0
    %3023 = vmatprep.subr.mxu0 %v2215
    %3024 = vmatpush1.msra.mxu0 %v2214
    %3025 = vmatprep.subr.mxu0 %v2219
    %3026 = vmatpush1.msra.mxu0 %v2218
    %3027 = vmatprep.subr.mxu0 %v2223
    %3028 = vmatpush1.msra.mxu0 %v2222
    %3029 = vmatprep.subr.mxu0 %v2227
    %3030 = vmatpush1.msra.mxu0 %v2226
    %3031 = vmatprep.subr.mxu0 %v2231
    %3032 = vmatpush1.msra.mxu0 %v2230
    %3033 = vmatprep.subr.mxu0 %v2235
    %3034 = vmatpush1.msra.mxu0 %v2234
    %3035 = vmatprep.subr.mxu0 %v2239
    %3036 = vmatpush1.msra.mxu0 %v2238
    %3037 = vmatprep.subr.mxu0 %v2243
    %3038 = vmatpush1.msra.mxu0 %v2242
    %3039 = vmatprep.subr.mxu0 %v2247
    %3040 = vmatpush1.msra.mxu0 %v2246
    %3041 = vmatprep.subr.mxu0 %v2251
    %3042 = vmatpush1.msra.mxu0 %v2250
    %3043 = vmatprep.subr.mxu0 %v2255
    %3044 = vmatpush1.msra.mxu0 %v2254
    %3045 = vmatprep.subr.mxu0 %v2259
    %3046 = vmatpush1.msra.mxu0 %v2258
    %3047 = vmatprep.subr.mxu0 %v2263
    %3048 = vmatpush1.msra.mxu0 %v2262
    %3049 = vmatprep.subr.mxu0 %v2267
    %3050 = vmatpush1.msra.mxu0 %v2266
    %3051 = vmatprep.subr.mxu0 %v2271
    %3052 = vmatpush1.msra.mxu0 %v2270
    %3053 = vmatprep.subr.mxu0 %v2275
    %3054 = vmatpush1.msra.mxu0 %v2274
    %3055 = vmatprep.subr.mxu0 0.0
    %3056 = vmatpush1.msra.mxu0 0.0
    %3057 = vmatprep.subr.mxu0 0.0
    %3058 = vmatpush1.msra.mxu0 0.0
    %3059 = vmatprep.subr.mxu0 0.0
    %3060 = vmatpush1.msra.mxu0 0.0
    %3061 = vmatprep.subr.mxu0 0.0
    %3062 = vmatpush1.msra.mxu0 0.0
    %3063 = vmatprep.subr.mxu0 0.0
    %3064 = vmatpush1.msra.mxu0 0.0
    %3065 = vmatprep.subr.mxu0 0.0
    %3066 = vmatpush1.msra.mxu0 0.0
    %3067 = vmatprep.subr.mxu0 0.0
    %3068 = vmatpush1.msra.mxu0 0.0
    %3069 = vmatprep.subr.mxu0 0.0
    %3070 = vmatpush1.msra.mxu0 0.0
    %3071 = vmatprep.subr.mxu0 0.0
    %3072 = vmatpush1.msra.mxu0 0.0
    %3073 = vmatprep.subr.mxu0 0.0
    %3074 = vmatpush1.msra.mxu0 0.0
    %3075 = vmatprep.subr.mxu0 0.0
    %3076 = vmatpush1.msra.mxu0 0.0
    %3077 = vmatprep.subr.mxu0 0.0
    %3078 = vmatpush1.msra.mxu0 0.0
    %3079 = vmatprep.subr.mxu0 0.0
    %3080 = vmatpush1.msra.mxu0 0.0
    %3081 = vmatprep.subr.mxu0 0.0
    %3082 = vmatpush1.msra.mxu0 0.0
    %3083 = vmatprep.subr.mxu0 0.0
    %3084 = vmatpush1.msra.mxu0 0.0
    %3085 = vmatprep.subr.mxu0 0.0
    %3086 = vmatpush1.msra.mxu0 0.0
    %3087 = vmatprep.mubr.f32.mxu0 0.0
    %3088 = vmatmul.mubr.f32.gmra.mrb[0].mxu0 %v2947
    %v3089 = vpop.f32.mrb[0].mxu0
    %v3090 = vadd.f32 0.0, %v3089
    %v3091 = vpop.f32.mrb[0].mxu0
    %v3092 = vadd.f32 0.0, %v3091
    %3093 = vdwg.mxu0
    %v3094 = vadd.f32 %v2948, %v3019
    %v3095 = vadd.f32 %v2949, %v3021
    %v3096 = vadd.f32 %v2950, %v3090
    %v3097 = vadd.f32 %v2951, %v3092
    %v3098 = vmul.f32 %v3094, 0.5
    %v3099 = vtanh.pop %v3098
    %v3100 = vmul.f32 %v3099, 0.5
    %v3101 = vadd.f32 %v3100, 0.5
    %v3102 = vmul.f32 %v3095, 0.5
    %v3103 = vtanh.pop %v3102
    %v3104 = vmul.f32 %v3103, 0.5
    %v3105 = vadd.f32 %v3104, 0.5
    %v3106 = vtanh.pop %v3096
    %v3107 = vmul.f32 %v3097, 0.5
    %v3108 = vtanh.pop %v3107
    %v3109 = vmul.f32 %v3108, 0.5
    %v3110 = vadd.f32 %v3109, 0.5
    %v3111 = vmul.f32 %v3105, %v2945
    %v3112 = vmul.f32 %v3101, %v3106
    %v3113 = vadd.f32 %v3111, %v3112
    %v3114 = vtanh.pop %v3113
    %v3115 = vmul.f32 %v3110, %v3114
    %v3116 = vld [vmem:[%s1343] sm:$0xff]
    %v3117 = vld [vmem:[%s1343 + $0x8] sm:$0xff]
    %v3118 = vld [vmem:[%s1343 + $0x10] sm:$0xff]
    %v3119 = vld [vmem:[%s1343 + $0x18] sm:$0xff]
    %3120 = vmatprep.subr.mxu0 %v2213
    %3121 = vmatpush1.msra.mxu0 %v2212
    %3122 = vmatprep.subr.mxu0 %v2217
    %3123 = vmatpush1.msra.mxu0 %v2216
    %3124 = vmatprep.subr.mxu0 %v2221
    %3125 = vmatpush1.msra.mxu0 %v2220
    %3126 = vmatprep.subr.mxu0 %v2225
    %3127 = vmatpush1.msra.mxu0 %v2224
    %3128 = vmatprep.subr.mxu0 %v2229
    %3129 = vmatpush1.msra.mxu0 %v2228
    %3130 = vmatprep.subr.mxu0 %v2233
    %3131 = vmatpush1.msra.mxu0 %v2232
    %3132 = vmatprep.subr.mxu0 %v2237
    %3133 = vmatpush1.msra.mxu0 %v2236
    %3134 = vmatprep.subr.mxu0 %v2241
    %3135 = vmatpush1.msra.mxu0 %v2240
    %3136 = vmatprep.subr.mxu0 %v2245
    %3137 = vmatpush1.msra.mxu0 %v2244
    %3138 = vmatprep.subr.mxu0 %v2249
    %3139 = vmatpush1.msra.mxu0 %v2248
    %3140 = vmatprep.subr.mxu0 %v2253
    %3141 = vmatpush1.msra.mxu0 %v2252
    %3142 = vmatprep.subr.mxu0 %v2257
    %3143 = vmatpush1.msra.mxu0 %v2256
    %3144 = vmatprep.subr.mxu0 %v2261
    %3145 = vmatpush1.msra.mxu0 %v2260
    %3146 = vmatprep.subr.mxu0 %v2265
    %3147 = vmatpush1.msra.mxu0 %v2264
    %3148 = vmatprep.subr.mxu0 %v2269
    %3149 = vmatpush1.msra.mxu0 %v2268
    %3150 = vmatprep.subr.mxu0 %v2273
    %3151 = vmatpush1.msra.mxu0 %v2272
    %3152 = vmatprep.subr.mxu0 0.0
    %3153 = vmatpush1.msra.mxu0 0.0
    %3154 = vmatprep.subr.mxu0 0.0
    %3155 = vmatpush1.msra.mxu0 0.0
    %3156 = vmatprep.subr.mxu0 0.0
    %3157 = vmatpush1.msra.mxu0 0.0
    %3158 = vmatprep.subr.mxu0 0.0
    %3159 = vmatpush1.msra.mxu0 0.0
    %3160 = vmatprep.subr.mxu0 0.0
    %3161 = vmatpush1.msra.mxu0 0.0
    %3162 = vmatprep.subr.mxu0 0.0
    %3163 = vmatpush1.msra.mxu0 0.0
    %3164 = vmatprep.subr.mxu0 0.0
    %3165 = vmatpush1.msra.mxu0 0.0
    %3166 = vmatprep.subr.mxu0 0.0
    %3167 = vmatpush1.msra.mxu0 0.0
    %3168 = vmatprep.subr.mxu0 0.0
    %3169 = vmatpush1.msra.mxu0 0.0
    %3170 = vmatprep.subr.mxu0 0.0
    %3171 = vmatpush1.msra.mxu0 0.0
    %3172 = vmatprep.subr.mxu0 0.0
    %3173 = vmatpush1.msra.mxu0 0.0
    %3174 = vmatprep.subr.mxu0 0.0
    %3175 = vmatpush1.msra.mxu0 0.0
    %3176 = vmatprep.subr.mxu0 0.0
    %3177 = vmatpush1.msra.mxu0 0.0
    %3178 = vmatprep.subr.mxu0 0.0
    %3179 = vmatpush1.msra.mxu0 0.0
    %3180 = vmatprep.subr.mxu0 0.0
    %3181 = vmatpush1.msra.mxu0 0.0
    %3182 = vmatprep.subr.mxu0 0.0
    %3183 = vmatpush1.msra.mxu0 0.0
    %3184 = vmatprep.mubr.f32.mxu0 0.0
    %3185 = vmatmul.mubr.f32.gmra.mrb[0].mxu0 %v3115
    %v3186 = vpop.f32.mrb[0].mxu0
    %v3187 = vadd.f32 0.0, %v3186
    %v3188 = vpop.f32.mrb[0].mxu0
    %v3189 = vadd.f32 0.0, %v3188
    %3190 = vdwg.mxu0
    %3191 = vmatprep.subr.mxu0 %v2215
    %3192 = vmatpush1.msra.mxu0 %v2214
    %3193 = vmatprep.subr.mxu0 %v2219
    %3194 = vmatpush1.msra.mxu0 %v2218
    %3195 = vmatprep.subr.mxu0 %v2223
    %3196 = vmatpush1.msra.mxu0 %v2222
    %3197 = vmatprep.subr.mxu0 %v2227
    %3198 = vmatpush1.msra.mxu0 %v2226
    %3199 = vmatprep.subr.mxu0 %v2231
    %3200 = vmatpush1.msra.mxu0 %v2230
    %3201 = vmatprep.subr.mxu0 %v2235
    %3202 = vmatpush1.msra.mxu0 %v2234
    %3203 = vmatprep.subr.mxu0 %v2239
    %3204 = vmatpush1.msra.mxu0 %v2238
    %3205 = vmatprep.subr.mxu0 %v2243
    %3206 = vmatpush1.msra.mxu0 %v2242
    %3207 = vmatprep.subr.mxu0 %v2247
    %3208 = vmatpush1.msra.mxu0 %v2246
    %3209 = vmatprep.subr.mxu0 %v2251
    %3210 = vmatpush1.msra.mxu0 %v2250
    %3211 = vmatprep.subr.mxu0 %v2255
    %3212 = vmatpush1.msra.mxu0 %v2254
    %3213 = vmatprep.subr.mxu0 %v2259
    %3214 = vmatpush1.msra.mxu0 %v2258
    %3215 = vmatprep.subr.mxu0 %v2263
    %3216 = vmatpush1.msra.mxu0 %v2262
    %3217 = vmatprep.subr.mxu0 %v2267
    %3218 = vmatpush1.msra.mxu0 %v2266
    %3219 = vmatprep.subr.mxu0 %v2271
    %3220 = vmatpush1.msra.mxu0 %v2270
    %3221 = vmatprep.subr.mxu0 %v2275
    %3222 = vmatpush1.msra.mxu0 %v2274
    %3223 = vmatprep.subr.mxu0 0.0
    %3224 = vmatpush1.msra.mxu0 0.0
    %3225 = vmatprep.subr.mxu0 0.0
    %3226 = vmatpush1.msra.mxu0 0.0
    %3227 = vmatprep.subr.mxu0 0.0
    %3228 = vmatpush1.msra.mxu0 0.0
    %3229 = vmatprep.subr.mxu0 0.0
    %3230 = vmatpush1.msra.mxu0 0.0
    %3231 = vmatprep.subr.mxu0 0.0
    %3232 = vmatpush1.msra.mxu0 0.0
    %3233 = vmatprep.subr.mxu0 0.0
    %3234 = vmatpush1.msra.mxu0 0.0
    %3235 = vmatprep.subr.mxu0 0.0
    %3236 = vmatpush1.msra.mxu0 0.0
    %3237 = vmatprep.subr.mxu0 0.0
    %3238 = vmatpush1.msra.mxu0 0.0
    %3239 = vmatprep.subr.mxu0 0.0
    %3240 = vmatpush1.msra.mxu0 0.0
    %3241 = vmatprep.subr.mxu0 0.0
    %3242 = vmatpush1.msra.mxu0 0.0
    %3243 = vmatprep.subr.mxu0 0.0
    %3244 = vmatpush1.msra.mxu0 0.0
    %3245 = vmatprep.subr.mxu0 0.0
    %3246 = vmatpush1.msra.mxu0 0.0
    %3247 = vmatprep.subr.mxu0 0.0
    %3248 = vmatpush1.msra.mxu0 0.0
    %3249 = vmatprep.subr.mxu0 0.0
    %3250 = vmatpush1.msra.mxu0 0.0
    %3251 = vmatprep.subr.mxu0 0.0
    %3252 = vmatpush1.msra.mxu0 0.0
    %3253 = vmatprep.subr.mxu0 0.0
    %3254 = vmatpush1.msra.mxu0 0.0
    %3255 = vmatprep.mubr.f32.mxu0 0.0
    %3256 = vmatmul.mubr.f32.gmra.mrb[0].mxu0 %v3115
    %v3257 = vpop.f32.mrb[0].mxu0
    %v3258 = vadd.f32 0.0, %v3257
    %v3259 = vpop.f32.mrb[0].mxu0
    %v3260 = vadd.f32 0.0, %v3259
    %3261 = vdwg.mxu0
    %v3262 = vadd.f32 %v3116, %v3187
    %v3263 = vadd.f32 %v3117, %v3189
    %v3264 = vadd.f32 %v3118, %v3258
    %v3265 = vadd.f32 %v3119, %v3260
    %v3266 = vmul.f32 %v3262, 0.5
    %v3267 = vtanh.pop %v3266
    %v3268 = vmul.f32 %v3267, 0.5
    %v3269 = vadd.f32 %v3268, 0.5
    %v3270 = vmul.f32 %v3263, 0.5
    %v3271 = vtanh.pop %v3270
    %v3272 = vmul.f32 %v3271, 0.5
    %v3273 = vadd.f32 %v3272, 0.5
    %v3274 = vtanh.pop %v3264
    %v3275 = vmul.f32 %v3265, 0.5
    %v3276 = vtanh.pop %v3275
    %v3277 = vmul.f32 %v3276, 0.5
    %v3278 = vadd.f32 %v3277, 0.5
    %v3279 = vmul.f32 %v3273, %v3113
    %v3280 = vmul.f32 %v3269, %v3274
    %v3281 = vadd.f32 %v3279, %v3280
    %v3282 = vtanh.pop %v3281
    %v3283 = vmul.f32 %v3278, %v3282
    %v3284 = vld [vmem:[%s1516] sm:$0xff]
    %v3285 = vld [vmem:[%s1516 + $0x8] sm:$0xff]
    %v3286 = vld [vmem:[%s1516 + $0x10] sm:$0xff]
    %v3287 = vld [vmem:[%s1516 + $0x18] sm:$0xff]
    %3288 = vmatprep.subr.mxu0 %v2213
    %3289 = vmatpush1.msra.mxu0 %v2212
    %3290 = vmatprep.subr.mxu0 %v2217
    %3291 = vmatpush1.msra.mxu0 %v2216
    %3292 = vmatprep.subr.mxu0 %v2221
    %3293 = vmatpush1.msra.mxu0 %v2220
    %3294 = vmatprep.subr.mxu0 %v2225
    %3295 = vmatpush1.msra.mxu0 %v2224
    %3296 = vmatprep.subr.mxu0 %v2229
    %3297 = vmatpush1.msra.mxu0 %v2228
    %3298 = vmatprep.subr.mxu0 %v2233
    %3299 = vmatpush1.msra.mxu0 %v2232
    %3300 = vmatprep.subr.mxu0 %v2237
    %3301 = vmatpush1.msra.mxu0 %v2236
    %3302 = vmatprep.subr.mxu0 %v2241
    %3303 = vmatpush1.msra.mxu0 %v2240
    %3304 = vmatprep.subr.mxu0 %v2245
    %3305 = vmatpush1.msra.mxu0 %v2244
    %3306 = vmatprep.subr.mxu0 %v2249
    %3307 = vmatpush1.msra.mxu0 %v2248
    %3308 = vmatprep.subr.mxu0 %v2253
    %3309 = vmatpush1.msra.mxu0 %v2252
    %3310 = vmatprep.subr.mxu0 %v2257
    %3311 = vmatpush1.msra.mxu0 %v2256
    %3312 = vmatprep.subr.mxu0 %v2261
    %3313 = vmatpush1.msra.mxu0 %v2260
    %3314 = vmatprep.subr.mxu0 %v2265
    %3315 = vmatpush1.msra.mxu0 %v2264
    %3316 = vmatprep.subr.mxu0 %v2269
    %3317 = vmatpush1.msra.mxu0 %v2268
    %3318 = vmatprep.subr.mxu0 %v2273
    %3319 = vmatpush1.msra.mxu0 %v2272
    %3320 = vmatprep.subr.mxu0 0.0
    %3321 = vmatpush1.msra.mxu0 0.0
    %3322 = vmatprep.subr.mxu0 0.0
    %3323 = vmatpush1.msra.mxu0 0.0
    %3324 = vmatprep.subr.mxu0 0.0
    %3325 = vmatpush1.msra.mxu0 0.0
    %3326 = vmatprep.subr.mxu0 0.0
    %3327 = vmatpush1.msra.mxu0 0.0
    %3328 = vmatprep.subr.mxu0 0.0
    %3329 = vmatpush1.msra.mxu0 0.0
    %3330 = vmatprep.subr.mxu0 0.0
    %3331 = vmatpush1.msra.mxu0 0.0
    %3332 = vmatprep.subr.mxu0 0.0
    %3333 = vmatpush1.msra.mxu0 0.0
    %3334 = vmatprep.subr.mxu0 0.0
    %3335 = vmatpush1.msra.mxu0 0.0
    %3336 = vmatprep.subr.mxu0 0.0
    %3337 = vmatpush1.msra.mxu0 0.0
    %3338 = vmatprep.subr.mxu0 0.0
    %3339 = vmatpush1.msra.mxu0 0.0
    %3340 = vmatprep.subr.mxu0 0.0
    %3341 = vmatpush1.msra.mxu0 0.0
    %3342 = vmatprep.subr.mxu0 0.0
    %3343 = vmatpush1.msra.mxu0 0.0
    %3344 = vmatprep.subr.mxu0 0.0
    %3345 = vmatpush1.msra.mxu0 0.0
    %3346 = vmatprep.subr.mxu0 0.0
    %3347 = vmatpush1.msra.mxu0 0.0
    %3348 = vmatprep.subr.mxu0 0.0
    %3349 = vmatpush1.msra.mxu0 0.0
    %3350 = vmatprep.subr.mxu0 0.0
    %3351 = vmatpush1.msra.mxu0 0.0
    %3352 = vmatprep.mubr.f32.mxu0 0.0
    %3353 = vmatmul.mubr.f32.gmra.mrb[0].mxu0 %v3283
    %v3354 = vpop.f32.mrb[0].mxu0
    %v3355 = vadd.f32 0.0, %v3354
    %v3356 = vpop.f32.mrb[0].mxu0
    %v3357 = vadd.f32 0.0, %v3356
    %3358 = vdwg.mxu0
    %3359 = vmatprep.subr.mxu0 %v2215
    %3360 = vmatpush1.msra.mxu0 %v2214
    %3361 = vmatprep.subr.mxu0 %v2219
    %3362 = vmatpush1.msra.mxu0 %v2218
    %3363 = vmatprep.subr.mxu0 %v2223
    %3364 = vmatpush1.msra.mxu0 %v2222
    %3365 = vmatprep.subr.mxu0 %v2227
    %3366 = vmatpush1.msra.mxu0 %v2226
    %3367 = vmatprep.subr.mxu0 %v2231
    %3368 = vmatpush1.msra.mxu0 %v2230
    %3369 = vmatprep.subr.mxu0 %v2235
    %3370 = vmatpush1.msra.mxu0 %v2234
    %3371 = vmatprep.subr.mxu0 %v2239
    %3372 = vmatpush1.msra.mxu0 %v2238
    %3373 = vmatprep.subr.mxu0 %v2243
    %3374 = vmatpush1.msra.mxu0 %v2242
    %3375 = vmatprep.subr.mxu0 %v2247
    %3376 = vmatpush1.msra.mxu0 %v2246
    %3377 = vmatprep.subr.mxu0 %v2251
    %3378 = vmatpush1.msra.mxu0 %v2250
    %3379 = vmatprep.subr.mxu0 %v2255
    %3380 = vmatpush1.msra.mxu0 %v2254
    %3381 = vmatprep.subr.mxu0 %v2259
    %3382 = vmatpush1.msra.mxu0 %v2258
    %3383 = vmatprep.subr.mxu0 %v2263
    %3384 = vmatpush1.msra.mxu0 %v2262
    %3385 = vmatprep.subr.mxu0 %v2267
    %3386 = vmatpush1.msra.mxu0 %v2266
    %3387 = vmatprep.subr.mxu0 %v2271
    %3388 = vmatpush1.msra.mxu0 %v2270
    %3389 = vmatprep.subr.mxu0 %v2275
    %3390 = vmatpush1.msra.mxu0 %v2274
    %3391 = vmatprep.subr.mxu0 0.0
    %3392 = vmatpush1.msra.mxu0 0.0
    %3393 = vmatprep.subr.mxu0 0.0
    %3394 = vmatpush1.msra.mxu0 0.0
    %3395 = vmatprep.subr.mxu0 0.0
    %3396 = vmatpush1.msra.mxu0 0.0
    %3397 = vmatprep.subr.mxu0 0.0
    %3398 = vmatpush1.msra.mxu0 0.0
    %3399 = vmatprep.subr.mxu0 0.0
    %3400 = vmatpush1.msra.mxu0 0.0
    %3401 = vmatprep.subr.mxu0 0.0
    %3402 = vmatpush1.msra.mxu0 0.0
    %3403 = vmatprep.subr.mxu0 0.0
    %3404 = vmatpush1.msra.mxu0 0.0
    %3405 = vmatprep.subr.mxu0 0.0
    %3406 = vmatpush1.msra.mxu0 0.0
    %3407 = vmatprep.subr.mxu0 0.0
    %3408 = vmatpush1.msra.mxu0 0.0
    %3409 = vmatprep.subr.mxu0 0.0
    %3410 = vmatpush1.msra.mxu0 0.0
    %3411 = vmatprep.subr.mxu0 0.0
    %3412 = vmatpush1.msra.mxu0 0.0
    %3413 = vmatprep.subr.mxu0 0.0
    %3414 = vmatpush1.msra.mxu0 0.0
    %3415 = vmatprep.subr.mxu0 0.0
    %3416 = vmatpush1.msra.mxu0 0.0
    %3417 = vmatprep.subr.mxu0 0.0
    %3418 = vmatpush1.msra.mxu0 0.0
    %3419 = vmatprep.subr.mxu0 0.0
    %3420 = vmatpush1.msra.mxu0 0.0
    %3421 = vmatprep.subr.mxu0 0.0
    %3422 = vmatpush1.msra.mxu0 0.0
    %3423 = vmatprep.mubr.f32.mxu0 0.0
    %3424 = vmatmul.mubr.f32.gmra.mrb[0].mxu0 %v3283
    %v3425 = vpop.f32.mrb[0].mxu0
    %v3426 = vadd.f32 0.0, %v3425
    %v3427 = vpop.f32.mrb[0].mxu0
    %v3428 = vadd.f32 0.0, %v3427
    %3429 = vdwg.mxu0
    %v3430 = vadd.f32 %v3284, %v3355
    %v3431 = vadd.f32 %v3285, %v3357
    %v3432 = vadd.f32 %v3286, %v3426
    %v3433 = vadd.f32 %v3287, %v3428
    %v3434 = vmul.f32 %v3430, 0.5
    %v3435 = vtanh.pop %v3434
    %v3436 = vmul.f32 %v3435, 0.5
    %v3437 = vadd.f32 %v3436, 0.5
    %v3438 = vmul.f32 %v3431, 0.5
    %v3439 = vtanh.pop %v3438
    %v3440 = vmul.f32 %v3439, 0.5
    %v3441 = vadd.f32 %v3440, 0.5
    %v3442 = vtanh.pop %v3432
    %v3443 = vmul.f32 %v3433, 0.5
    %v3444 = vtanh.pop %v3443
    %v3445 = vmul.f32 %v3444, 0.5
    %v3446 = vadd.f32 %v3445, 0.5
    %v3447 = vmul.f32 %v3441, %v3281
    %v3448 = vmul.f32 %v3437, %v3442
    %v3449 = vadd.f32 %v3447, %v3448
    %v3450 = vtanh.pop %v3449
    %v3451 = vmul.f32 %v3446, %v3450
    %v3452 = vld [vmem:[%s1689] sm:$0xff]
    %v3453 = vld [vmem:[%s1689 + $0x8] sm:$0xff]
    %v3454 = vld [vmem:[%s1689 + $0x10] sm:$0xff]
    %v3455 = vld [vmem:[%s1689 + $0x18] sm:$0xff]
    %3456 = vmatprep.subr.mxu0 %v2213
    %3457 = vmatpush1.msra.mxu0 %v2212
    %3458 = vmatprep.subr.mxu0 %v2217
    %3459 = vmatpush1.msra.mxu0 %v2216
    %3460 = vmatprep.subr.mxu0 %v2221
    %3461 = vmatpush1.msra.mxu0 %v2220
    %3462 = vmatprep.subr.mxu0 %v2225
    %3463 = vmatpush1.msra.mxu0 %v2224
    %3464 = vmatprep.subr.mxu0 %v2229
    %3465 = vmatpush1.msra.mxu0 %v2228
    %3466 = vmatprep.subr.mxu0 %v2233
    %3467 = vmatpush1.msra.mxu0 %v2232
    %3468 = vmatprep.subr.mxu0 %v2237
    %3469 = vmatpush1.msra.mxu0 %v2236
    %3470 = vmatprep.subr.mxu0 %v2241
    %3471 = vmatpush1.msra.mxu0 %v2240
    %3472 = vmatprep.subr.mxu0 %v2245
    %3473 = vmatpush1.msra.mxu0 %v2244
    %3474 = vmatprep.subr.mxu0 %v2249
    %3475 = vmatpush1.msra.mxu0 %v2248
    %3476 = vmatprep.subr.mxu0 %v2253
    %3477 = vmatpush1.msra.mxu0 %v2252
    %3478 = vmatprep.subr.mxu0 %v2257
    %3479 = vmatpush1.msra.mxu0 %v2256
    %3480 = vmatprep.subr.mxu0 %v2261
    %3481 = vmatpush1.msra.mxu0 %v2260
    %3482 = vmatprep.subr.mxu0 %v2265
    %3483 = vmatpush1.msra.mxu0 %v2264
    %3484 = vmatprep.subr.mxu0 %v2269
    %3485 = vmatpush1.msra.mxu0 %v2268
    %3486 = vmatprep.subr.mxu0 %v2273
    %3487 = vmatpush1.msra.mxu0 %v2272
    %3488 = vmatprep.subr.mxu0 0.0
    %3489 = vmatpush1.msra.mxu0 0.0
    %3490 = vmatprep.subr.mxu0 0.0
    %3491 = vmatpush1.msra.mxu0 0.0
    %3492 = vmatprep.subr.mxu0 0.0
    %3493 = vmatpush1.msra.mxu0 0.0
    %3494 = vmatprep.subr.mxu0 0.0
    %3495 = vmatpush1.msra.mxu0 0.0
    %3496 = vmatprep.subr.mxu0 0.0
    %3497 = vmatpush1.msra.mxu0 0.0
    %3498 = vmatprep.subr.mxu0 0.0
    %3499 = vmatpush1.msra.mxu0 0.0
    %3500 = vmatprep.subr.mxu0 0.0
    %3501 = vmatpush1.msra.mxu0 0.0
    %3502 = vmatprep.subr.mxu0 0.0
    %3503 = vmatpush1.msra.mxu0 0.0
    %3504 = vmatprep.subr.mxu0 0.0
    %3505 = vmatpush1.msra.mxu0 0.0
    %3506 = vmatprep.subr.mxu0 0.0
    %3507 = vmatpush1.msra.mxu0 0.0
    %3508 = vmatprep.subr.mxu0 0.0
    %3509 = vmatpush1.msra.mxu0 0.0
    %3510 = vmatprep.subr.mxu0 0.0
    %3511 = vmatpush1.msra.mxu0 0.0
    %3512 = vmatprep.subr.mxu0 0.0
    %3513 = vmatpush1.msra.mxu0 0.0
    %3514 = vmatprep.subr.mxu0 0.0
    %3515 = vmatpush1.msra.mxu0 0.0
    %3516 = vmatprep.subr.mxu0 0.0
    %3517 = vmatpush1.msra.mxu0 0.0
    %3518 = vmatprep.subr.mxu0 0.0
    %3519 = vmatpush1.msra.mxu0 0.0
    %3520 = vmatprep.mubr.f32.mxu0 0.0
    %3521 = vmatmul.mubr.f32.gmra.mrb[0].mxu0 %v3451
    %v3522 = vpop.f32.mrb[0].mxu0
    %v3523 = vadd.f32 0.0, %v3522
    %v3524 = vpop.f32.mrb[0].mxu0
    %v3525 = vadd.f32 0.0, %v3524
    %3526 = vdwg.mxu0
    %3527 = vmatprep.subr.mxu0 %v2215
    %3528 = vmatpush1.msra.mxu0 %v2214
    %3529 = vmatprep.subr.mxu0 %v2219
    %3530 = vmatpush1.msra.mxu0 %v2218
    %3531 = vmatprep.subr.mxu0 %v2223
    %3532 = vmatpush1.msra.mxu0 %v2222
    %3533 = vmatprep.subr.mxu0 %v2227
    %3534 = vmatpush1.msra.mxu0 %v2226
    %3535 = vmatprep.subr.mxu0 %v2231
    %3536 = vmatpush1.msra.mxu0 %v2230
    %3537 = vmatprep.subr.mxu0 %v2235
    %3538 = vmatpush1.msra.mxu0 %v2234
    %3539 = vmatprep.subr.mxu0 %v2239
    %3540 = vmatpush1.msra.mxu0 %v2238
    %3541 = vmatprep.subr.mxu0 %v2243
    %3542 = vmatpush1.msra.mxu0 %v2242
    %3543 = vmatprep.subr.mxu0 %v2247
    %3544 = vmatpush1.msra.mxu0 %v2246
    %3545 = vmatprep.subr.mxu0 %v2251
    %3546 = vmatpush1.msra.mxu0 %v2250
    %3547 = vmatprep.subr.mxu0 %v2255
    %3548 = vmatpush1.msra.mxu0 %v2254
    %3549 = vmatprep.subr.mxu0 %v2259
    %3550 = vmatpush1.msra.mxu0 %v2258
    %3551 = vmatprep.subr.mxu0 %v2263
    %3552 = vmatpush1.msra.mxu0 %v2262
    %3553 = vmatprep.subr.mxu0 %v2267
    %3554 = vmatpush1.msra.mxu0 %v2266
    %3555 = vmatprep.subr.mxu0 %v2271
    %3556 = vmatpush1.msra.mxu0 %v2270
    %3557 = vmatprep.subr.mxu0 %v2275
    %3558 = vmatpush1.msra.mxu0 %v2274
    %3559 = vmatprep.subr.mxu0 0.0
    %3560 = vmatpush1.msra.mxu0 0.0
    %3561 = vmatprep.subr.mxu0 0.0
    %3562 = vmatpush1.msra.mxu0 0.0
    %3563 = vmatprep.subr.mxu0 0.0
    %3564 = vmatpush1.msra.mxu0 0.0
    %3565 = vmatprep.subr.mxu0 0.0
    %3566 = vmatpush1.msra.mxu0 0.0
    %3567 = vmatprep.subr.mxu0 0.0
    %3568 = vmatpush1.msra.mxu0 0.0
    %3569 = vmatprep.subr.mxu0 0.0
    %3570 = vmatpush1.msra.mxu0 0.0
    %3571 = vmatprep.subr.mxu0 0.0
    %3572 = vmatpush1.msra.mxu0 0.0
    %3573 = vmatprep.subr.mxu0 0.0
    %3574 = vmatpush1.msra.mxu0 0.0
    %3575 = vmatprep.subr.mxu0 0.0
    %3576 = vmatpush1.msra.mxu0 0.0
    %3577 = vmatprep.subr.mxu0 0.0
    %3578 = vmatpush1.msra.mxu0 0.0
    %3579 = vmatprep.subr.mxu0 0.0
    %3580 = vmatpush1.msra.mxu0 0.0
    %3581 = vmatprep.subr.mxu0 0.0
    %3582 = vmatpush1.msra.mxu0 0.0
    %3583 = vmatprep.subr.mxu0 0.0
    %3584 = vmatpush1.msra.mxu0 0.0
    %3585 = vmatprep.subr.mxu0 0.0
    %3586 = vmatpush1.msra.mxu0 0.0
    %3587 = vmatprep.subr.mxu0 0.0
    %3588 = vmatpush1.msra.mxu0 0.0
    %3589 = vmatprep.subr.mxu0 0.0
    %3590 = vmatpush1.msra.mxu0 0.0
    %3591 = vmatprep.mubr.f32.mxu0 0.0
    %3592 = vmatmul.mubr.f32.gmra.mrb[0].mxu0 %v3451
    %v3593 = vpop.f32.mrb[0].mxu0
    %v3594 = vadd.f32 0.0, %v3593
    %v3595 = vpop.f32.mrb[0].mxu0
    %v3596 = vadd.f32 0.0, %v3595
    %3597 = vdwg.mxu0
    %v3598 = vadd.f32 %v3452, %v3523
    %v3599 = vadd.f32 %v3453, %v3525
    %v3600 = vadd.f32 %v3454, %v3594
    %v3601 = vadd.f32 %v3455, %v3596
    %v3602 = vmul.f32 %v3598, 0.5
    %v3603 = vtanh.pop %v3602
    %v3604 = vmul.f32 %v3603, 0.5
    %v3605 = vadd.f32 %v3604, 0.5
    %v3606 = vmul.f32 %v3599, 0.5
    %v3607 = vtanh.pop %v3606
    %v3608 = vmul.f32 %v3607, 0.5
    %v3609 = vadd.f32 %v3608, 0.5
    %v3610 = vtanh.pop %v3600
    %v3611 = vmul.f32 %v3601, 0.5
    %v3612 = vtanh.pop %v3611
    %v3613 = vmul.f32 %v3612, 0.5
    %v3614 = vadd.f32 %v3613, 0.5
    %v3615 = vmul.f32 %v3609, %v3449
    %v3616 = vmul.f32 %v3605, %v3610
    %v3617 = vadd.f32 %v3615, %v3616
    %v3618 = vtanh.pop %v3617
    %v3619 = vmul.f32 %v3614, %v3618
    %v3620 = vld [vmem:[%s7] sm:$0xff]
    %v3621 = vld [vmem:[%s7 + $0x8] sm:$0xff]
    %v3622 = vld [vmem:[%s7 + $0x10] sm:$0xff]
    %v3623 = vld [vmem:[%s7 + $0x18] sm:$0xff]
    %v3624 = vld [vmem:[%s7 + $0x20] sm:$0xff]
    %v3625 = vld [vmem:[%s7 + $0x28] sm:$0xff]
    %v3626 = vld [vmem:[%s7 + $0x30] sm:$0xff]
    %v3627 = vld [vmem:[%s7 + $0x38] sm:$0xff]
    %v3628 = vld [vmem:[%s7 + $0x40] sm:$0xff]
    %v3629 = vld [vmem:[%s7 + $0x48] sm:$0xff]
    %v3630 = vld [vmem:[%s7 + $0x50] sm:$0xff]
    %v3631 = vld [vmem:[%s7 + $0x58] sm:$0xff]
    %v3632 = vld [vmem:[%s7 + $0x60] sm:$0xff]
    %v3633 = vld [vmem:[%s7 + $0x68] sm:$0xff]
    %v3634 = vld [vmem:[%s7 + $0x70] sm:$0xff]
    %v3635 = vld [vmem:[%s7 + $0x78] sm:$0xff]
    %v3636 = vld [vmem:[%s8] sm:$0x1]
    %v3638 = vlaneseq
    %v3639 = vshrl.u32 %v3638, 7
    %v3640 = vsub.s32 0, %v3639
    %v3641 = vrot.slane %v3636, %v3640
    %3643 = vmatprep.subr.mxu0 0.0
    %3644 = vmatpush1.msra.mxu0 %v3620
    %3645 = vmatprep.subr.mxu0 0.0
    %3646 = vmatpush1.msra.mxu0 %v3621
    %3647 = vmatprep.subr.mxu0 0.0
    %3648 = vmatpush1.msra.mxu0 %v3622
    %3649 = vmatprep.subr.mxu0 0.0
    %3650 = vmatpush1.msra.mxu0 %v3623
    %3651 = vmatprep.subr.mxu0 0.0
    %3652 = vmatpush1.msra.mxu0 %v3624
    %3653 = vmatprep.subr.mxu0 0.0
    %3654 = vmatpush1.msra.mxu0 %v3625
    %3655 = vmatprep.subr.mxu0 0.0
    %3656 = vmatpush1.msra.mxu0 %v3626
    %3657 = vmatprep.subr.mxu0 0.0
    %3658 = vmatpush1.msra.mxu0 %v3627
    %3659 = vmatprep.subr.mxu0 0.0
    %3660 = vmatpush1.msra.mxu0 %v3628
    %3661 = vmatprep.subr.mxu0 0.0
    %3662 = vmatpush1.msra.mxu0 %v3629
    %3663 = vmatprep.subr.mxu0 0.0
    %3664 = vmatpush1.msra.mxu0 %v3630
    %3665 = vmatprep.subr.mxu0 0.0
    %3666 = vmatpush1.msra.mxu0 %v3631
    %3667 = vmatprep.subr.mxu0 0.0
    %3668 = vmatpush1.msra.mxu0 %v3632
    %3669 = vmatprep.subr.mxu0 0.0
    %3670 = vmatpush1.msra.mxu0 %v3633
    %3671 = vmatprep.subr.mxu0 0.0
    %3672 = vmatpush1.msra.mxu0 %v3634
    %3673 = vmatprep.subr.mxu0 0.0
    %3674 = vmatpush1.msra.mxu0 %v3635
    %3675 = vmatprep.subr.mxu0 0.0
    %3676 = vmatpush1.msra.mxu0 0.0
    %3677 = vmatprep.subr.mxu0 0.0
    %3678 = vmatpush1.msra.mxu0 0.0
    %3679 = vmatprep.subr.mxu0 0.0
    %3680 = vmatpush1.msra.mxu0 0.0
    %3681 = vmatprep.subr.mxu0 0.0
    %3682 = vmatpush1.msra.mxu0 0.0
    %3683 = vmatprep.subr.mxu0 0.0
    %3684 = vmatpush1.msra.mxu0 0.0
    %3685 = vmatprep.subr.mxu0 0.0
    %3686 = vmatpush1.msra.mxu0 0.0
    %3687 = vmatprep.subr.mxu0 0.0
    %3688 = vmatpush1.msra.mxu0 0.0
    %3689 = vmatprep.subr.mxu0 0.0
    %3690 = vmatpush1.msra.mxu0 0.0
    %3691 = vmatprep.subr.mxu0 0.0
    %3692 = vmatpush1.msra.mxu0 0.0
    %3693 = vmatprep.subr.mxu0 0.0
    %3694 = vmatpush1.msra.mxu0 0.0
    %3695 = vmatprep.subr.mxu0 0.0
    %3696 = vmatpush1.msra.mxu0 0.0
    %3697 = vmatprep.subr.mxu0 0.0
    %3698 = vmatpush1.msra.mxu0 0.0
    %3699 = vmatprep.subr.mxu0 0.0
    %3700 = vmatpush1.msra.mxu0 0.0
    %3701 = vmatprep.subr.mxu0 0.0
    %3702 = vmatpush1.msra.mxu0 0.0
    %3703 = vmatprep.subr.mxu0 0.0
    %3704 = vmatpush1.msra.mxu0 0.0
    %3705 = vmatprep.subr.mxu0 0.0
    %3706 = vmatpush1.msra.mxu0 0.0
    %3707 = vmatprep.mubr.f32.mxu0 0.0
    %3708 = vmatmul.mubr.f32.gmra.mrb[0].mxu0 %v3619
    %v3709 = vpop.f32.mrb[0].mxu0
    %v3710 = vadd.f32 %v3641, %v3709
    %v3711 = vpop.f32.mrb[0].mxu0
    %3712 = vdwg.mxu0
    %3713 = vst [vmem:[%s9] sm:$0xff] %v3710
    // Predicated region
    $region54: #{simple_lstm_forward.1} parent=1 // pred_check
      _
    $region55: #{simple_lstm_forward.1} parent=1 // pred_check_branch
      %3715 = sbr.rel (0) target = $region57
    $region56: #{simple_lstm_forward.1} parent=1 // pred_region
      _
    $region57: #{simple_lstm_forward.1} parent=1 // pred_fallthru
      _
    // Predicated region
    $region58: #{simple_lstm_forward.1} parent=1 // pred_check
      _
    $region59: #{simple_lstm_forward.1} parent=1 // pred_check_branch
      %3717 = sbr.rel (0) target = $region61
    $region60: #{simple_lstm_forward.1} parent=1 // pred_region
      _
    $region61: #{simple_lstm_forward.1} parent=1 // pred_fallthru
      _
    %3718 = vsyncpa [#allocation5], 1
    %3719 = vsyncpa [#allocation7], 1
    %3720 = vsyncpa [#allocation10], 1

</llo_original>
